<compile_context>
chip_gen: v6e
topology: v6e:2x2x1
jax: 0.10.0
libtpu: 0.0.40
codegen_flags: <defaults>
</compile_context>

<pallas_src>
from functools import partial

import numpy as np
import jax
import jax.numpy as jnp
from jax.experimental import pallas as pl
from jax.experimental.pallas import tpu as pltpu


LANE = 128  # TPU vreg lane width; pad weight output dims to this for lane-dense stores


def _round_up(n, m):
    return ((n + m - 1) // m) * m


def _pad2d(a, shape):
    out = jnp.zeros(shape, dtype=a.dtype)
    return out.at[: a.shape[0], : a.shape[1]].set(a)


# ----------------------------- Pallas kernel --------------------------------
def vae_forward_kernel(x_ref, w1_ref, w2_ref, w3_ref, wd_ref, out_ref, rates_ref):
    # Weights are resident in VMEM (constant index maps); load them once per step.
    w1 = w1_ref[...]
    w2 = w2_ref[...]
    w3 = w3_ref[...]
    wd = wd_ref[...]

    tb = x_ref.shape[0]
    # Two independent sub-chunks per tile: gives the LLO scheduler co-issuable
    # MXU (vmatmul) and EUP (tanh) work from different chains, and keeps per-dot
    # M at tb/2 (=256 with the default tile) to fill the 256-wide MXU on v6e/v7x.
    n_chunks = 2 if (tb % 16 == 0 and tb >= 16) else 1
    rows = tb // n_chunks

    for c in range(n_chunks):           # static unroll (intentional, for overlap)
        lo = c * rows
        # Fused data_reorg prologue (f32 on the VPU/EUP; v5e has no bf16 path):
        #   x = (raw / 40) * tanh(s) / s,  s = row sum(x^2)
        x = x_ref[lo:lo + rows, :] * (1.0 / 40.0)
        s = jnp.sum(x * x, axis=-1, keepdims=True)
        safe_s = jnp.where(s > 0.0, s, 1.0)
        t = jnp.where(s > 0.0, jnp.tanh(s) / safe_s, 1.0)  # guard all-zero padding rows
        xb = (x * t).astype(jnp.bfloat16)                   # bf16 only at the MXU input

        # Encoder layer1/2: Linear(bias=False) + Tanh; bf16 MXU inputs, f32 accumulate.
        h1 = jnp.tanh(jnp.dot(xb, w1, preferred_element_type=jnp.float32))
        h2 = jnp.tanh(jnp.dot(h1.astype(jnp.bfloat16), w2,
                              preferred_element_type=jnp.float32))
        # Encoder layer3 + layer4 (ReLU) + 0.005
        h3 = jnp.dot(h2.astype(jnp.bfloat16), w3, preferred_element_type=jnp.float32)
        rates = jnp.maximum(h3, 0.0) + 0.005
        rates_ref[lo:lo + rows, :] = rates
        # Decoder: Linear(latent, input, bias=False)  (args.sampling == 'none' path)
        out_ref[lo:lo + rows, :] = jnp.dot(rates.astype(jnp.bfloat16), wd,
                                           preferred_element_type=jnp.float32)


# ------------------------------- wrappers ------------------------------------
def prepare_weights(w1, w2, w3, wd):
    """One-time: PyTorch [out,in] weights -> [in,out], pad output dims to 128
    lanes, cast to bf16 for the MXU. Cache and reuse across forward calls."""
    input_size = w1.shape[1]
    h0, h1n, latent = w1.shape[0], w2.shape[0], w3.shape[0]
    h0_p, h1_p = _round_up(h0, LANE), _round_up(h1n, LANE)
    lt_p, in_p = _round_up(latent, LANE), _round_up(input_size, LANE)
    w1_t = _pad2d(w1.T, (input_size, h0_p)).astype(jnp.bfloat16)  # K unpadded (matches x)
    w2_t = _pad2d(w2.T, (h0_p, h1_p)).astype(jnp.bfloat16)
    w3_t = _pad2d(w3.T, (h1_p, lt_p)).astype(jnp.bfloat16)
    wd_t = _pad2d(wd.T, (lt_p, in_p)).astype(jnp.bfloat16)
    return w1_t, w2_t, w3_t, wd_t


@partial(jax.jit, static_argnames=("latent_size", "batch_tile"))
def vae_forward(raw_x, w1_t, w2_t, w3_t, wd_t, *, latent_size, batch_tile=512):
    """raw_x: [B, input_size] (pre-data_reorg); w*_t from prepare_weights()."""
    B, input_size = raw_x.shape
    h0_p = w1_t.shape[1]
    h1_p = w2_t.shape[1]
    lt_p = w3_t.shape[1]
    in_p = wd_t.shape[1]
    assert batch_tile % 16 == 0

    b_p = _round_up(B, batch_tile)
    # Only the batch axis is padded (fuses inside jit); x keeps its 32-wide last
    # dim -> 4x less input DMA, and the lane padding happens inside the vreg anyway.
    x_in = jnp.pad(raw_x.astype(jnp.float32), ((0, b_p - B), (0, 0)))

    grid = (b_p // batch_tile,)

    out_p, rates_p = pl.pallas_call(
        vae_forward_kernel,
        out_shape=(
            jax.ShapeDtypeStruct((b_p, in_p), jnp.float32),   # decoded (lane-dense)
            jax.ShapeDtypeStruct((b_p, lt_p), jnp.float32),   # posterior rates
        ),
        grid_spec=pltpu.PrefetchScalarGridSpec(
            num_scalar_prefetch=0,
            grid=grid,
            in_specs=[
                # activations: tiled over the batch grid axis; full-extent last dim
                pl.BlockSpec((batch_tile, input_size), lambda i: (i, 0)),
                # weights: constant index maps -> fetched once, resident in VMEM
                pl.BlockSpec((input_size, h0_p), lambda i: (0, 0)),
                pl.BlockSpec((h0_p, h1_p), lambda i: (0, 0)),
                pl.BlockSpec((h1_p, lt_p), lambda i: (0, 0)),
                pl.BlockSpec((lt_p, in_p), lambda i: (0, 0)),
            ],
            out_specs=[
                pl.BlockSpec((batch_tile, in_p), lambda i: (i, 0)),
                pl.BlockSpec((batch_tile, lt_p), lambda i: (i, 0)),
            ],
        ),
        compiler_params=pltpu.CompilerParams(
            # batch axis is embarrassingly parallel; on v7x switch to
            # pltpu.CORE_PARALLEL to force an explicit 2-TC split of the grid.
            dimension_semantics=("parallel",),
            vmem_limit_bytes=32 * 1024 * 1024,   # ~1.3 MiB used at TB=512; v7x-safe
        ),
    )(x_in, w1_t, w2_t, w3_t, wd_t)

    # slice padding off (fused into the same jit dispatch)
    return out_p[:B, :input_size], rates_p[:B, :latent_size]


# ------------------------------- JAX glue ------------------------------------
def data_reorg(data):
    # mirrors the numpy preprocessing in the original script (pure-JAX reference)
    data = data / 40.0
    s = jnp.sum(jnp.square(data), axis=1)
    t = jnp.tanh(s) / s
    return data * t[:, None]


def locmap(latent_shape):
    x = np.arange(0, latent_shape, dtype=np.float32)
    y = np.arange(0, latent_shape, dtype=np.float32)
    xv, yv = np.meshgrid(x, y)
    return np.hstack((xv.reshape(-1, 1), yv.reshape(-1, 1)))


def lateral_effect(latent_shape, sigma=1.0, kind="mexican"):
    loc = locmap(latent_shape)
    d = np.sqrt(((loc[:, None, :] - loc[None, :, :]) ** 2).sum(-1)) / sigma
    if kind == "mexican":
        S = (1.0 - 0.5 * d**2) * np.exp(-0.5 * d**2)
        return (S - np.eye(len(loc))).astype(np.float32)
    if kind == "rbf":
        S = np.exp(-0.5 * d**2)
        return (S - np.eye(len(loc))).astype(np.float32)
    return np.zeros(d.shape, dtype=np.float32)


def init_linear_weight(key, out_features, in_features):
    # PyTorch nn.Linear default: U(-1/sqrt(in), 1/sqrt(in)), shape [out, in]
    bound = 1.0 / np.sqrt(in_features)
    return jax.random.uniform(key, (out_features, in_features),
                              minval=-bound, maxval=bound, dtype=jnp.float32)


if __name__ == "__main__":
    # Configuration consistent with the module:
    #   args.layers = [32, 32], args.latent_shape = 4 -> latent_size = 16
    #   input_size = len(my_data[0]) = 32; batch sized so grid has 2 steps at TB=512.
    batch = 1024
    input_size = 32
    layers = (32, 32)
    latent_shape = 4
    latent_size = latent_shape ** 2

    key = jax.random.PRNGKey(0)
    k_data, k1, k2, k3, kd = jax.random.split(key, 5)

    # synthetic raw data (data_reorg is fused into the kernel)
    raw = 40.0 * jax.random.normal(k_data, (batch, input_size), dtype=jnp.float32)

    # parameters (PyTorch [out, in] layout), deterministic init
    w1 = init_linear_weight(k1, layers[0], input_size)     # encoder.layer1
    w2 = init_linear_weight(k2, layers[1], layers[0])      # encoder.layer2
    w3 = init_linear_weight(k3, latent_size, layers[1])    # encoder.layer3
    wd = init_linear_weight(kd, input_size, latent_size)   # decoder.layer

    # lateral matrix (unused by forward; constructed for fidelity with __init__)
    _lateral = jnp.asarray(lateral_effect(latent_shape, sigma=1.0, kind="mexican"))

    # one-time weight prep (padded [in,out] bf16), cached across forward calls
    w1_t, w2_t, w3_t, wd_t = prepare_weights(w1, w2, w3, wd)
    w1_t, w2_t, w3_t, wd_t = jax.block_until_ready((w1_t, w2_t, w3_t, wd_t))

    out, rates = vae_forward(raw, w1_t, w2_t, w3_t, wd_t,
                             latent_size=latent_size, batch_tile=512)
    out = jax.block_until_ready(out)
    rates = jax.block_until_ready(rates)

    # --- reference checks ---
    x_ref = data_reorg(raw)

    # (a) bf16-emulated reference (mirrors the kernel's MXU input precision)
    bf = lambda a: a.astype(jnp.bfloat16).astype(jnp.float32)
    h1 = jnp.tanh(bf(x_ref) @ bf(w1.T))
    h2 = jnp.tanh(bf(h1) @ bf(w2.T))
    rates_bf = jnp.maximum(bf(h2) @ bf(w3.T), 0.0) + 0.005
    out_bf = bf(rates_bf) @ bf(wd.T)
    np.testing.assert_allclose(np.asarray(rates), np.asarray(rates_bf),
                               rtol=1e-2, atol=1e-3)
    np.testing.assert_allclose(np.asarray(out), np.asarray(out_bf),
                               rtol=1e-2, atol=1e-3)

    # (b) pure-f32 module semantics (loose tolerance for bf16 MXU inputs)
    h1f = jnp.tanh(x_ref @ w1.T)
    h2f = jnp.tanh(h1f @ w2.T)
    rates_f32 = jnp.maximum(h2f @ w3.T, 0.0) + 0.005
    out_f32 = rates_f32 @ wd.T
    np.testing.assert_allclose(np.asarray(rates), np.asarray(rates_f32),
                               rtol=5e-2, atol=2e-3)
    np.testing.assert_allclose(np.asarray(out), np.asarray(out_f32),
                               rtol=5e-2, atol=2e-3)

    print("KERNEL_OK")
</pallas_src>

<mosaic_0001>
module attributes {stable_mosaic.version = 11 : i64} {
  func.func @vae_forward_kernel(%arg0: i32, %arg1: memref<512x32xf32, #tpu.memory_space<vmem>>, %arg2: memref<32x128xbf16, #tpu.memory_space<vmem>>, %arg3: memref<128x128xbf16, #tpu.memory_space<vmem>>, %arg4: memref<128x128xbf16, #tpu.memory_space<vmem>>, %arg5: memref<128x128xbf16, #tpu.memory_space<vmem>>, %arg6: memref<512x128xf32, #tpu.memory_space<vmem>>, %arg7: memref<512x128xf32, #tpu.memory_space<vmem>>) attributes {dimension_semantics = [#tpu.dimension_semantics<parallel>], iteration_bounds = array<i64: 2>, scalar_prefetch = 0 : i64, scratch_operands = 0 : i64, tpu.core_type = #tpu.core_type<tc>, window_params = [{transform_indices = @transform_0, window_bounds = array<i64: 512, 32>}, {pipeline_mode = #tpu.pipeline_mode<synchronous>, transform_indices = @transform_1, window_bounds = array<i64: 32, 128>}, {pipeline_mode = #tpu.pipeline_mode<synchronous>, transform_indices = @transform_2, window_bounds = array<i64: 128, 128>}, {pipeline_mode = #tpu.pipeline_mode<synchronous>, transform_indices = @transform_3, window_bounds = array<i64: 128, 128>}, {pipeline_mode = #tpu.pipeline_mode<synchronous>, transform_indices = @transform_4, window_bounds = array<i64: 128, 128>}, {transform_indices = @transform_5, window_bounds = array<i64: 512, 128>}, {transform_indices = @transform_6, window_bounds = array<i64: 512, 128>}]} {
    %c0 = arith.constant 0 : index
    %c0_0 = arith.constant 0 : index
    %0 = vector.load %arg2[%c0, %c0_0] : memref<32x128xbf16, #tpu.memory_space<vmem>>, vector<32x128xbf16>
    %c0_1 = arith.constant 0 : index
    %c0_2 = arith.constant 0 : index
    %1 = vector.load %arg3[%c0_1, %c0_2] : memref<128x128xbf16, #tpu.memory_space<vmem>>, vector<128x128xbf16>
    %c0_3 = arith.constant 0 : index
    %c0_4 = arith.constant 0 : index
    %2 = vector.load %arg4[%c0_3, %c0_4] : memref<128x128xbf16, #tpu.memory_space<vmem>>, vector<128x128xbf16>
    %c0_5 = arith.constant 0 : index
    %c0_6 = arith.constant 0 : index
    %3 = vector.load %arg5[%c0_5, %c0_6] : memref<128x128xbf16, #tpu.memory_space<vmem>>, vector<128x128xbf16>
    %c0_7 = arith.constant 0 : index
    %c0_8 = arith.constant 0 : index
    %4 = vector.load %arg1[%c0_7, %c0_8] : memref<512x32xf32, #tpu.memory_space<vmem>>, vector<256x32xf32>
    %cst = arith.constant 2.500000e-02 : f32
    %5 = vector.broadcast %cst : f32 to vector<256x32xf32>
    %6 = arith.mulf %4, %5 : vector<256x32xf32>
    %7 = arith.mulf %6, %6 : vector<256x32xf32>
    %cst_9 = arith.constant dense<0.000000e+00> : vector<256xf32>
    %8 = vector.multi_reduction <add>, %7, %cst_9 [1] : vector<256x32xf32> to vector<256xf32>
    %9 = vector.shape_cast %8 : vector<256xf32> to vector<256x1xf32>
    %cst_10 = arith.constant 0.000000e+00 : f32
    %10 = vector.broadcast %cst_10 : f32 to vector<256x1xf32>
    %11 = arith.cmpf ogt, %9, %10 : vector<256x1xf32>
    %cst_11 = arith.constant 1.000000e+00 : f32
    %12 = vector.broadcast %cst_11 : f32 to vector<256x1xf32>
    %13 = arith.select %11, %9, %12 : vector<256x1xi1>, vector<256x1xf32>
    %cst_12 = arith.constant 0.000000e+00 : f32
    %14 = vector.broadcast %cst_12 : f32 to vector<256x1xf32>
    %15 = arith.cmpf ogt, %9, %14 : vector<256x1xf32>
    %16 = math.tanh %9 : vector<256x1xf32>
    %17 = arith.divf %16, %13 : vector<256x1xf32>
    %cst_13 = arith.constant 1.000000e+00 : f32
    %18 = vector.broadcast %cst_13 : f32 to vector<256x1xf32>
    %19 = arith.select %15, %17, %18 : vector<256x1xi1>, vector<256x1xf32>
    %20 = vector.broadcast %19 : vector<256x1xf32> to vector<256x32xf32>
    %21 = arith.mulf %6, %20 : vector<256x32xf32>
    %22 = arith.truncf %21 : vector<256x32xf32> to vector<256x32xbf16>
    %cst_14 = arith.constant dense<0.000000e+00> : vector<256x128xf32>
    %23 = tpu.matmul %22, %0, %cst_14 {dimension_numbers = #tpu.dot_dimension_numbers<[1], [0], [0], [1], [0, 0, 1, 1], [], []>} : vector<256x32xbf16>, vector<32x128xbf16>, vector<256x128xf32> -> vector<256x128xf32>
    %24 = math.tanh %23 : vector<256x128xf32>
    %25 = arith.truncf %24 : vector<256x128xf32> to vector<256x128xbf16>
    %cst_15 = arith.constant dense<0.000000e+00> : vector<256x128xf32>
    %26 = tpu.matmul %25, %1, %cst_15 {dimension_numbers = #tpu.dot_dimension_numbers<[1], [0], [0], [1], [0, 0, 1, 1], [], []>} : vector<256x128xbf16>, vector<128x128xbf16>, vector<256x128xf32> -> vector<256x128xf32>
    %27 = math.tanh %26 : vector<256x128xf32>
    %28 = arith.truncf %27 : vector<256x128xf32> to vector<256x128xbf16>
    %cst_16 = arith.constant dense<0.000000e+00> : vector<256x128xf32>
    %29 = tpu.matmul %28, %2, %cst_16 {dimension_numbers = #tpu.dot_dimension_numbers<[1], [0], [0], [1], [0, 0, 1, 1], [], []>} : vector<256x128xbf16>, vector<128x128xbf16>, vector<256x128xf32> -> vector<256x128xf32>
    %cst_17 = arith.constant 0.000000e+00 : f32
    %30 = vector.broadcast %cst_17 : f32 to vector<256x128xf32>
    %31 = arith.maximumf %29, %30 : vector<256x128xf32>
    %cst_18 = arith.constant 5.000000e-03 : f32
    %32 = vector.broadcast %cst_18 : f32 to vector<256x128xf32>
    %33 = arith.addf %31, %32 : vector<256x128xf32>
    %c0_19 = arith.constant 0 : index
    %c0_20 = arith.constant 0 : index
    %34 = vector.load %arg7[%c0_19, %c0_20] : memref<512x128xf32, #tpu.memory_space<vmem>>, vector<256x128xf32>
    tpu.vector_store %arg7[%c0_19, %c0_20], %33 {strides = array<i32>} : memref<512x128xf32, #tpu.memory_space<vmem>>, vector<256x128xf32>,
    %35 = arith.truncf %33 : vector<256x128xf32> to vector<256x128xbf16>
    %cst_21 = arith.constant dense<0.000000e+00> : vector<256x128xf32>
    %36 = tpu.matmul %35, %3, %cst_21 {dimension_numbers = #tpu.dot_dimension_numbers<[1], [0], [0], [1], [0, 0, 1, 1], [], []>} : vector<256x128xbf16>, vector<128x128xbf16>, vector<256x128xf32> -> vector<256x128xf32>
    %c0_22 = arith.constant 0 : index
    %c0_23 = arith.constant 0 : index
    %37 = vector.load %arg6[%c0_22, %c0_23] : memref<512x128xf32, #tpu.memory_space<vmem>>, vector<256x128xf32>
    tpu.vector_store %arg6[%c0_22, %c0_23], %36 {strides = array<i32>} : memref<512x128xf32, #tpu.memory_space<vmem>>, vector<256x128xf32>,
    %c256 = arith.constant 256 : index
    %c0_24 = arith.constant 0 : index
    %38 = vector.load %arg1[%c256, %c0_24] : memref<512x32xf32, #tpu.memory_space<vmem>>, vector<256x32xf32>
    %cst_25 = arith.constant 2.500000e-02 : f32
    %39 = vector.broadcast %cst_25 : f32 to vector<256x32xf32>
    %40 = arith.mulf %38, %39 : vector<256x32xf32>
    %41 = arith.mulf %40, %40 : vector<256x32xf32>
    %cst_26 = arith.constant dense<0.000000e+00> : vector<256xf32>
    %42 = vector.multi_reduction <add>, %41, %cst_26 [1] : vector<256x32xf32> to vector<256xf32>
    %43 = vector.shape_cast %42 : vector<256xf32> to vector<256x1xf32>
    %cst_27 = arith.constant 0.000000e+00 : f32
    %44 = vector.broadcast %cst_27 : f32 to vector<256x1xf32>
    %45 = arith.cmpf ogt, %43, %44 : vector<256x1xf32>
    %cst_28 = arith.constant 1.000000e+00 : f32
    %46 = vector.broadcast %cst_28 : f32 to vector<256x1xf32>
    %47 = arith.select %45, %43, %46 : vector<256x1xi1>, vector<256x1xf32>
    %cst_29 = arith.constant 0.000000e+00 : f32
    %48 = vector.broadcast %cst_29 : f32 to vector<256x1xf32>
    %49 = arith.cmpf ogt, %43, %48 : vector<256x1xf32>
    %50 = math.tanh %43 : vector<256x1xf32>
    %51 = arith.divf %50, %47 : vector<256x1xf32>
    %cst_30 = arith.constant 1.000000e+00 : f32
    %52 = vector.broadcast %cst_30 : f32 to vector<256x1xf32>
    %53 = arith.select %49, %51, %52 : vector<256x1xi1>, vector<256x1xf32>
    %54 = vector.broadcast %53 : vector<256x1xf32> to vector<256x32xf32>
    %55 = arith.mulf %40, %54 : vector<256x32xf32>
    %56 = arith.truncf %55 : vector<256x32xf32> to vector<256x32xbf16>
    %cst_31 = arith.constant dense<0.000000e+00> : vector<256x128xf32>
    %57 = tpu.matmul %56, %0, %cst_31 {dimension_numbers = #tpu.dot_dimension_numbers<[1], [0], [0], [1], [0, 0, 1, 1], [], []>} : vector<256x32xbf16>, vector<32x128xbf16>, vector<256x128xf32> -> vector<256x128xf32>
    %58 = math.tanh %57 : vector<256x128xf32>
    %59 = arith.truncf %58 : vector<256x128xf32> to vector<256x128xbf16>
    %cst_32 = arith.constant dense<0.000000e+00> : vector<256x128xf32>
    %60 = tpu.matmul %59, %1, %cst_32 {dimension_numbers = #tpu.dot_dimension_numbers<[1], [0], [0], [1], [0, 0, 1, 1], [], []>} : vector<256x128xbf16>, vector<128x128xbf16>, vector<256x128xf32> -> vector<256x128xf32>
    %61 = math.tanh %60 : vector<256x128xf32>
    %62 = arith.truncf %61 : vector<256x128xf32> to vector<256x128xbf16>
    %cst_33 = arith.constant dense<0.000000e+00> : vector<256x128xf32>
    %63 = tpu.matmul %62, %2, %cst_33 {dimension_numbers = #tpu.dot_dimension_numbers<[1], [0], [0], [1], [0, 0, 1, 1], [], []>} : vector<256x128xbf16>, vector<128x128xbf16>, vector<256x128xf32> -> vector<256x128xf32>
    %cst_34 = arith.constant 0.000000e+00 : f32
    %64 = vector.broadcast %cst_34 : f32 to vector<256x128xf32>
    %65 = arith.maximumf %63, %64 : vector<256x128xf32>
    %cst_35 = arith.constant 5.000000e-03 : f32
    %66 = vector.broadcast %cst_35 : f32 to vector<256x128xf32>
    %67 = arith.addf %65, %66 : vector<256x128xf32>
    %c256_36 = arith.constant 256 : index
    %c0_37 = arith.constant 0 : index
    %68 = vector.load %arg7[%c256_36, %c0_37] : memref<512x128xf32, #tpu.memory_space<vmem>>, vector<256x128xf32>
    tpu.vector_store %arg7[%c256_36, %c0_37], %67 {strides = array<i32>} : memref<512x128xf32, #tpu.memory_space<vmem>>, vector<256x128xf32>,
    %69 = arith.truncf %67 : vector<256x128xf32> to vector<256x128xbf16>
    %cst_38 = arith.constant dense<0.000000e+00> : vector<256x128xf32>
    %70 = tpu.matmul %69, %3, %cst_38 {dimension_numbers = #tpu.dot_dimension_numbers<[1], [0], [0], [1], [0, 0, 1, 1], [], []>} : vector<256x128xbf16>, vector<128x128xbf16>, vector<256x128xf32> -> vector<256x128xf32>
    %c256_39 = arith.constant 256 : index
    %c0_40 = arith.constant 0 : index
    %71 = vector.load %arg6[%c256_39, %c0_40] : memref<512x128xf32, #tpu.memory_space<vmem>>, vector<256x128xf32>
    tpu.vector_store %arg6[%c256_39, %c0_40], %70 {strides = array<i32>} : memref<512x128xf32, #tpu.memory_space<vmem>>, vector<256x128xf32>,
    return
  }
  func.func @transform_0(%arg0: i32) -> (i32, i32) {
    %c0_i32 = arith.constant 0 : i32
    %c0_i32_0 = arith.constant 0 : i32
    return %arg0, %c0_i32 : i32, i32
  }
  func.func @transform_1(%arg0: i32) -> (i32, i32) {
    %c0_i32 = arith.constant 0 : i32
    %c0_i32_0 = arith.constant 0 : i32
    %c0_i32_1 = arith.constant 0 : i32
    return %c0_i32, %c0_i32_0 : i32, i32
  }
  func.func @transform_2(%arg0: i32) -> (i32, i32) {
    %c0_i32 = arith.constant 0 : i32
    %c0_i32_0 = arith.constant 0 : i32
    %c0_i32_1 = arith.constant 0 : i32
    return %c0_i32, %c0_i32_0 : i32, i32
  }
  func.func @transform_3(%arg0: i32) -> (i32, i32) {
    %c0_i32 = arith.constant 0 : i32
    %c0_i32_0 = arith.constant 0 : i32
    %c0_i32_1 = arith.constant 0 : i32
    return %c0_i32, %c0_i32_0 : i32, i32
  }
  func.func @transform_4(%arg0: i32) -> (i32, i32) {
    %c0_i32 = arith.constant 0 : i32
    %c0_i32_0 = arith.constant 0 : i32
    %c0_i32_1 = arith.constant 0 : i32
    return %c0_i32, %c0_i32_0 : i32, i32
  }
  func.func @transform_5(%arg0: i32) -> (i32, i32) {
    %c0_i32 = arith.constant 0 : i32
    %c0_i32_0 = arith.constant 0 : i32
    return %arg0, %c0_i32 : i32, i32
  }
  func.func @transform_6(%arg0: i32) -> (i32, i32) {
    %c0_i32 = arith.constant 0 : i32
    %c0_i32_0 = arith.constant 0 : i32
    return %arg0, %c0_i32 : i32, i32
  }
}

</mosaic_0001>

<llo_original>
// kernel: vae_forward.1
$region0: #{vae_forward.1}
  #allocation0 [shape = 'u32[]', space=smem, size = 0x4, offset = 0x4, fixed_abs, tag = 'smem constant byte address 0x4 - core index']
  #allocation1 [shape = 'u32[144,128]{1,0:T(1,128)}', space=vmem, size = 0x12000, scoped, tag = 'internal scratch']
  %s0 = inlined_call_operand.vmem [shape: f32[1024,32], index: 0, kind: input, shape index: {}]
  %s1 = inlined_call_operand.vmem [shape: bf16[32,128], index: 1, kind: input, shape index: {}]
  %s2 = inlined_call_operand.vmem [shape: bf16[128,128], index: 2, kind: input, shape index: {}]
  %s3 = inlined_call_operand.vmem [shape: bf16[128,128], index: 3, kind: input, shape index: {}]
  %s4 = inlined_call_operand.vmem [shape: bf16[128,128], index: 4, kind: input, shape index: {}]
  %s5 = inlined_call_operand.vmem [shape: f32[1024,128], index: 5, kind: output, shape index: {0}]
  %s6 = inlined_call_operand.vmem [shape: f32[1024,128], index: 6, kind: output, shape index: {1}]
  %7 = xla_tuple %s5, %s6
  %s8 = sld [smem:[#allocation0]]
  $region61: #{vae_forward.1} parent=0
    _
  %s10 = ssub.s32 1, %s8
  %s11 = scalar_select 0, %s10, %s8
  loop: start=0, step=1, limit=4
  $region2: #{vae_forward.1} parent=0 // loop_pre_header
    _
  $region3: #{vae_forward.1} parent=0 // loop_header
    %s13 = sphi 0, %s17
    %p14 = scmp.ge.s32.totalorder %s13, 4
    %s23 = sphi 0, %s25
    %s26 = sphi 0, %s23
    %s27 = sphi 0, %s26
    %s43 = sphi 0, %s27
    %s47 = sphi 0, %s47
    %s49 = sphi 0, %s47
    %s50 = sphi 0, %s49
    %s64 = sphi 0, %s50
    %s68 = sphi 0, %s68
    %s70 = sphi 0, %s68
    %s71 = sphi 0, %s70
    %s85 = sphi 0, %s71
    %s89 = sphi 0, %s89
    %s91 = sphi 0, %s89
    %s92 = sphi 0, %s91
    %s106 = sphi 0, %s92
    %s110 = sphi 0, %s110
    %s112 = sphi 0, %s110
    %s113 = sphi 0, %s112
    %s127 = sphi 0, %s113
    %s133 = sphi 0, %s135
    %s136 = sphi 0, %s133
    %s137 = sphi 0, %s136
    %s153 = sphi 0, %s137
    %s159 = sphi 0, %s161
    %s162 = sphi 0, %s159
    %s163 = sphi 0, %s162
    %s179 = sphi 0, %s163
  $region4: #{vae_forward.1} parent=0 // loop_header_branch
    %16 = sbr.rel (%p14) target = $region8
  $region5: #{vae_forward.1} parent=0 // loop_body
    %s18 = ssub.s32 %s13, 1
    %s19 = ssub.s32 %s13, 2
    %s20 = sadd.s32 %s13, 1
    %s21 = ssub.s32 %s13, %s20
    %p22 = scmp.eq.s32.totalorder %s21, 0
    %s24 = sadd.s32 %s23, 1
    %s25 = scalar_select %p22, %s23, %s24
    %p28 = pneg %p22
    %p29 = scmp.eq.s32.totalorder %s13, 1
    %p30 = por %p28, %p29
    %p31 = scmp.ne.s32.totalorder %s23, %s26
    %p32 = scmp.eq.s32.totalorder %s13, 0
    %p33 = por %p31, %p32
    %p34 = scmp.ne.s32.totalorder %s23, %s26
    %p35 = scmp.eq.s32.totalorder %s18, 1
    %p36 = por %p34, %p35
    %p37 = scmp.ne.s32.totalorder %s26, %s27
    %p38 = scmp.eq.s32.totalorder %s18, 0
    %p39 = por %p37, %p38
    %p40 = scmp.ne.s32.totalorder %s26, %s27
    %p41 = scmp.eq.s32.totalorder %s19, 1
    %p42 = por %p40, %p41
    %p44 = scmp.ne.s32.totalorder %s27, %s43
    %p45 = scmp.eq.s32.totalorder %s19, 0
    %p46 = por %p44, %p45
    %s48 = sadd.s32 %s47, 1
    %p51 = scmp.eq.s32.totalorder %s13, 1
    %p52 = scmp.ne.s32.totalorder %s47, %s49
    %p53 = scmp.eq.s32.totalorder %s13, 0
    %p54 = por %p52, %p53
    %p55 = scmp.ne.s32.totalorder %s47, %s49
    %p56 = scmp.eq.s32.totalorder %s18, 1
    %p57 = por %p55, %p56
    %p58 = scmp.ne.s32.totalorder %s49, %s50
    %p59 = scmp.eq.s32.totalorder %s18, 0
    %p60 = por %p58, %p59
    %p61 = scmp.ne.s32.totalorder %s49, %s50
    %p62 = scmp.eq.s32.totalorder %s19, 1
    %p63 = por %p61, %p62
    %p65 = scmp.ne.s32.totalorder %s50, %s64
    %p66 = scmp.eq.s32.totalorder %s19, 0
    %p67 = por %p65, %p66
    %s69 = sadd.s32 %s68, 1
    %p72 = scmp.eq.s32.totalorder %s13, 1
    %p73 = scmp.ne.s32.totalorder %s68, %s70
    %p74 = scmp.eq.s32.totalorder %s13, 0
    %p75 = por %p73, %p74
    %p76 = scmp.ne.s32.totalorder %s68, %s70
    %p77 = scmp.eq.s32.totalorder %s18, 1
    %p78 = por %p76, %p77
    %p79 = scmp.ne.s32.totalorder %s70, %s71
    %p80 = scmp.eq.s32.totalorder %s18, 0
    %p81 = por %p79, %p80
    %p82 = scmp.ne.s32.totalorder %s70, %s71
    %p83 = scmp.eq.s32.totalorder %s19, 1
    %p84 = por %p82, %p83
    %p86 = scmp.ne.s32.totalorder %s71, %s85
    %p87 = scmp.eq.s32.totalorder %s19, 0
    %p88 = por %p86, %p87
    %s90 = sadd.s32 %s89, 1
    %p93 = scmp.eq.s32.totalorder %s13, 1
    %p94 = scmp.ne.s32.totalorder %s89, %s91
    %p95 = scmp.eq.s32.totalorder %s13, 0
    %p96 = por %p94, %p95
    %p97 = scmp.ne.s32.totalorder %s89, %s91
    %p98 = scmp.eq.s32.totalorder %s18, 1
    %p99 = por %p97, %p98
    %p100 = scmp.ne.s32.totalorder %s91, %s92
    %p101 = scmp.eq.s32.totalorder %s18, 0
    %p102 = por %p100, %p101
    %p103 = scmp.ne.s32.totalorder %s91, %s92
    %p104 = scmp.eq.s32.totalorder %s19, 1
    %p105 = por %p103, %p104
    %p107 = scmp.ne.s32.totalorder %s92, %s106
    %p108 = scmp.eq.s32.totalorder %s19, 0
    %p109 = por %p107, %p108
    %s111 = sadd.s32 %s110, 1
    %p114 = scmp.eq.s32.totalorder %s13, 1
    %p115 = scmp.ne.s32.totalorder %s110, %s112
    %p116 = scmp.eq.s32.totalorder %s13, 0
    %p117 = por %p115, %p116
    %p118 = scmp.ne.s32.totalorder %s110, %s112
    %p119 = scmp.eq.s32.totalorder %s18, 1
    %p120 = por %p118, %p119
    %p121 = scmp.ne.s32.totalorder %s112, %s113
    %p122 = scmp.eq.s32.totalorder %s18, 0
    %p123 = por %p121, %p122
    %p124 = scmp.ne.s32.totalorder %s112, %s113
    %p125 = scmp.eq.s32.totalorder %s19, 1
    %p126 = por %p124, %p125
    %p128 = scmp.ne.s32.totalorder %s113, %s127
    %p129 = scmp.eq.s32.totalorder %s19, 0
    %p130 = por %p128, %p129
    %s131 = ssub.s32 %s13, %s20
    %p132 = scmp.eq.s32.totalorder %s131, 0
    %s134 = sadd.s32 %s133, 1
    %s135 = scalar_select %p132, %s133, %s134
    %p138 = pneg %p132
    %p139 = scmp.eq.s32.totalorder %s13, 1
    %p140 = por %p138, %p139
    %p141 = scmp.ne.s32.totalorder %s133, %s136
    %p142 = scmp.eq.s32.totalorder %s13, 0
    %p143 = por %p141, %p142
    %p144 = scmp.ne.s32.totalorder %s133, %s136
    %p145 = scmp.eq.s32.totalorder %s18, 1
    %p146 = por %p144, %p145
    %p147 = scmp.ne.s32.totalorder %s136, %s137
    %p148 = scmp.eq.s32.totalorder %s18, 0
    %p149 = por %p147, %p148
    %p150 = scmp.ne.s32.totalorder %s136, %s137
    %p151 = scmp.eq.s32.totalorder %s19, 1
    %p152 = por %p150, %p151
    %p154 = scmp.ne.s32.totalorder %s137, %s153
    %p155 = scmp.eq.s32.totalorder %s19, 0
    %p156 = por %p154, %p155
    %s157 = ssub.s32 %s13, %s20
    %p158 = scmp.eq.s32.totalorder %s157, 0
    %s160 = sadd.s32 %s159, 1
    %s161 = scalar_select %p158, %s159, %s160
    %p164 = pneg %p158
    %p165 = scmp.eq.s32.totalorder %s13, 1
    %p166 = por %p164, %p165
    %p167 = scmp.ne.s32.totalorder %s159, %s162
    %p168 = scmp.eq.s32.totalorder %s13, 0
    %p169 = por %p167, %p168
    %p170 = scmp.ne.s32.totalorder %s159, %s162
    %p171 = scmp.eq.s32.totalorder %s18, 1
    %p172 = por %p170, %p171
    %p173 = scmp.ne.s32.totalorder %s162, %s163
    %p174 = scmp.eq.s32.totalorder %s18, 0
    %p175 = por %p173, %p174
    %p176 = scmp.ne.s32.totalorder %s162, %s163
    %p177 = scmp.eq.s32.totalorder %s19, 1
    %p178 = por %p176, %p177
    %p180 = scmp.ne.s32.totalorder %s163, %s179
    %p181 = scmp.eq.s32.totalorder %s19, 0
    %p182 = por %p180, %p181
    %p183 = scmp.le.s32.totalorder 1, %s13
    %p184 = scmp.lt.s32.totalorder %s13, 3
    %p185 = pnand %p183, %p184
    %p186 = pneg %p185
    // Predicated region
    $region9: #{vae_forward.1} parent=5 // pred_check
      _
    $region10: #{vae_forward.1} parent=5 // pred_check_branch
      %188 = sbr.rel (%p185) target = $region12
    $region11: #{vae_forward.1} parent=5 // pred_region
      %s189 = ssub.s32 %s13, 1
      // Predicated region
      $region13: #{vae_forward.1} parent=11 // pred_check
        %p190 = pneg %p60
      $region14: #{vae_forward.1} parent=11 // pred_check_branch
        %192 = sbr.rel (%p190) target = $region16
      $region15: #{vae_forward.1} parent=11 // pred_region
        _
      $region16: #{vae_forward.1} parent=11 // pred_fallthru
        _
      // Predicated region
      $region17: #{vae_forward.1} parent=11 // pred_check
        %p193 = pneg %p81
      $region18: #{vae_forward.1} parent=11 // pred_check_branch
        %195 = sbr.rel (%p193) target = $region20
      $region19: #{vae_forward.1} parent=11 // pred_region
        _
      $region20: #{vae_forward.1} parent=11 // pred_fallthru
        _
      // Predicated region
      $region21: #{vae_forward.1} parent=11 // pred_check
        %p196 = pneg %p102
      $region22: #{vae_forward.1} parent=11 // pred_check_branch
        %198 = sbr.rel (%p196) target = $region24
      $region23: #{vae_forward.1} parent=11 // pred_region
        _
      $region24: #{vae_forward.1} parent=11 // pred_fallthru
        _
      // Predicated region
      $region25: #{vae_forward.1} parent=11 // pred_check
        %p199 = pneg %p123
      $region26: #{vae_forward.1} parent=11 // pred_check_branch
        %201 = sbr.rel (%p199) target = $region28
      $region27: #{vae_forward.1} parent=11 // pred_region
        _
      $region28: #{vae_forward.1} parent=11 // pred_fallthru
        _
    $region12: #{vae_forward.1} parent=5 // pred_fallthru
      _
    %p202 = scmp.lt.s32.totalorder %s13, 2
    // Predicated region
    $region29: #{vae_forward.1} parent=5 // pred_check
      %p203 = pneg %p202
    $region30: #{vae_forward.1} parent=5 // pred_check_branch
      %205 = sbr.rel (%p203) target = $region32
    $region31: #{vae_forward.1} parent=5 // pred_region
      // Predicated region
      $region33: #{vae_forward.1} parent=31 // pred_check
        %p206 = pneg %p33
      $region34: #{vae_forward.1} parent=31 // pred_check_branch
        %208 = sbr.rel (%p206) target = $region36
      $region35: #{vae_forward.1} parent=31 // pred_region
        %s209 = smul.u32 64, %s13
        %p210 = scmp.lt.s32.totalorder %s209, 127
        %s211 = scalar_select %p210, %s209, 127
        %s212 = smul.addr %s211, 8
        %s213 = scalar_lea.vmem %s0, %s212
        %s214 = smul.u32 64, %s13
      $region36: #{vae_forward.1} parent=31 // pred_fallthru
        _
    $region32: #{vae_forward.1} parent=5 // pred_fallthru
      _
    %p215 = scmp.le.s32.totalorder 1, %s13
    %p216 = scmp.lt.s32.totalorder %s13, 3
    %p217 = pnand %p215, %p216
    %p218 = pneg %p217
    // Predicated region
    $region37: #{vae_forward.1} parent=5 // pred_check
      _
    $region38: #{vae_forward.1} parent=5 // pred_check_branch
      %220 = sbr.rel (%p217) target = $region40
    $region39: #{vae_forward.1} parent=5 // pred_region
      %s221 = ssub.s32 %s13, 1
      %s222 = smul.u32 64, %s18
      %p223 = scmp.lt.s32.totalorder %s222, 127
      %s224 = scalar_select %p223, %s222, 127
      %s225 = smul.addr %s224, 8
      %s226 = scalar_lea.vmem %s0, %s225
      %p227 = pneg %p39
      %p228 = pneg %p36
      %p229 = pneg %p60
      %p230 = pneg %p57
      %p231 = pneg %p81
      %p232 = pneg %p78
      %p233 = pneg %p102
      %p234 = pneg %p99
      %p235 = pneg %p123
      %p236 = pneg %p120
      %p237 = pneg %p149
      %p238 = pneg %p146
      %s239 = smul.u32 64, %s18
      %p240 = scmp.lt.s32.totalorder %s239, 127
      %s241 = scalar_select %p240, %s239, 127
      %s242 = smul.addr %s241, 8
      %s243 = scalar_lea.vmem %s5, %s242
      %p244 = pneg %p175
      %p245 = pneg %p172
      %s246 = smul.u32 64, %s18
      %p247 = scmp.lt.s32.totalorder %s246, 127
      %s248 = scalar_select %p247, %s246, 127
      %s249 = smul.addr %s248, 8
      %s250 = scalar_lea.vmem %s6, %s249
      %s251 = smul.u32 64, %s18
      %p252 = scmp.lt.s32.totalorder %s251, 127
      %s253 = scalar_select %p252, %s251, 127
      %s254 = smul.addr %s253, 8
      %s255 = scalar_lea.vmem %s0, %s254
      %s256 = smul.u32 64, %s18
      %s257 = smul.u32 64, %s18
      %p258 = scmp.lt.s32.totalorder %s257, 127
      %s259 = scalar_select %p258, %s257, 127
      %s260 = smul.addr %s259, 8
      %s261 = scalar_lea.vmem %s5, %s260
      %s262 = smul.u32 64, %s18
      %s263 = smul.u32 64, %s18
      %p264 = scmp.lt.s32.totalorder %s263, 127
      %s265 = scalar_select %p264, %s263, 127
      %s266 = smul.addr %s265, 8
      %s267 = scalar_lea.vmem %s6, %s266
      %s268 = smul.u32 64, %s18
      %v270 = vld [vmem:[%s1] sm:$0xf]
      %v271 = vld [vmem:[%s1 + $0x4] sm:$0xf]
      %v272 = vld [vmem:[%s1 + $0x8] sm:$0xf]
      %v273 = vld [vmem:[%s1 + $0xc] sm:$0xf]
      %v274 = vld [vmem:[%s2] sm:$0xf]
      %v275 = vld [vmem:[%s2 + $0x4] sm:$0xf]
      %v276 = vld [vmem:[%s2 + $0x8] sm:$0xf]
      %v277 = vld [vmem:[%s2 + $0xc] sm:$0xf]
      %v278 = vld [vmem:[%s2 + $0x10] sm:$0xf]
      %v279 = vld [vmem:[%s2 + $0x14] sm:$0xf]
      %v280 = vld [vmem:[%s2 + $0x18] sm:$0xf]
      %v281 = vld [vmem:[%s2 + $0x1c] sm:$0xf]
      %v282 = vld [vmem:[%s2 + $0x20] sm:$0xf]
      %v283 = vld [vmem:[%s2 + $0x24] sm:$0xf]
      %v284 = vld [vmem:[%s2 + $0x28] sm:$0xf]
      %v285 = vld [vmem:[%s2 + $0x2c] sm:$0xf]
      %v286 = vld [vmem:[%s2 + $0x30] sm:$0xf]
      %v287 = vld [vmem:[%s2 + $0x34] sm:$0xf]
      %v288 = vld [vmem:[%s2 + $0x38] sm:$0xf]
      %v289 = vld [vmem:[%s2 + $0x3c] sm:$0xf]
      %v290 = vld [vmem:[%s3] sm:$0xf]
      %v291 = vld [vmem:[%s3 + $0x4] sm:$0xf]
      %v292 = vld [vmem:[%s3 + $0x8] sm:$0xf]
      %v293 = vld [vmem:[%s3 + $0xc] sm:$0xf]
      %v294 = vld [vmem:[%s3 + $0x10] sm:$0xf]
      %v295 = vld [vmem:[%s3 + $0x14] sm:$0xf]
      %v296 = vld [vmem:[%s3 + $0x18] sm:$0xf]
      %v297 = vld [vmem:[%s3 + $0x1c] sm:$0xf]
      %v298 = vld [vmem:[%s3 + $0x20] sm:$0xf]
      %v299 = vld [vmem:[%s3 + $0x24] sm:$0xf]
      %v300 = vld [vmem:[%s3 + $0x28] sm:$0xf]
      %v301 = vld [vmem:[%s3 + $0x2c] sm:$0xf]
      %v302 = vld [vmem:[%s3 + $0x30] sm:$0xf]
      %v303 = vld [vmem:[%s3 + $0x34] sm:$0xf]
      %v304 = vld [vmem:[%s3 + $0x38] sm:$0xf]
      %v305 = vld [vmem:[%s3 + $0x3c] sm:$0xf]
      %v306 = vld [vmem:[%s4] sm:$0xf]
      %v307 = vld [vmem:[%s4 + $0x4] sm:$0xf]
      %v308 = vld [vmem:[%s4 + $0x8] sm:$0xf]
      %v309 = vld [vmem:[%s4 + $0xc] sm:$0xf]
      %v310 = vld [vmem:[%s4 + $0x10] sm:$0xf]
      %v311 = vld [vmem:[%s4 + $0x14] sm:$0xf]
      %v312 = vld [vmem:[%s4 + $0x18] sm:$0xf]
      %v313 = vld [vmem:[%s4 + $0x1c] sm:$0xf]
      %v314 = vld [vmem:[%s4 + $0x20] sm:$0xf]
      %v315 = vld [vmem:[%s4 + $0x24] sm:$0xf]
      %v316 = vld [vmem:[%s4 + $0x28] sm:$0xf]
      %v317 = vld [vmem:[%s4 + $0x2c] sm:$0xf]
      %v318 = vld [vmem:[%s4 + $0x30] sm:$0xf]
      %v319 = vld [vmem:[%s4 + $0x34] sm:$0xf]
      %v320 = vld [vmem:[%s4 + $0x38] sm:$0xf]
      %v321 = vld [vmem:[%s4 + $0x3c] sm:$0xf]
      %v322 = vld [vmem:[%s255] sm:$0xff]
      %v323 = vld [vmem:[%s255 + $0x8] sm:$0xff]
      %v324 = vld [vmem:[%s255 + $0x10] sm:$0xff]
      %v325 = vld [vmem:[%s255 + $0x18] sm:$0xff]
      %v326 = vld [vmem:[%s255 + $0x20] sm:$0xff]
      %v327 = vld [vmem:[%s255 + $0x28] sm:$0xff]
      %v328 = vld [vmem:[%s255 + $0x30] sm:$0xff]
      %v329 = vld [vmem:[%s255 + $0x38] sm:$0xff]
      %v330 = vld [vmem:[%s255 + $0x40] sm:$0xff]
      %v331 = vld [vmem:[%s255 + $0x48] sm:$0xff]
      %v332 = vld [vmem:[%s255 + $0x50] sm:$0xff]
      %v333 = vld [vmem:[%s255 + $0x58] sm:$0xff]
      %v334 = vld [vmem:[%s255 + $0x60] sm:$0xff]
      %v335 = vld [vmem:[%s255 + $0x68] sm:$0xff]
      %v336 = vld [vmem:[%s255 + $0x70] sm:$0xff]
      %v337 = vld [vmem:[%s255 + $0x78] sm:$0xff]
      %v338 = vld [vmem:[%s255 + $0x80] sm:$0xff]
      %v339 = vld [vmem:[%s255 + $0x88] sm:$0xff]
      %v340 = vld [vmem:[%s255 + $0x90] sm:$0xff]
      %v341 = vld [vmem:[%s255 + $0x98] sm:$0xff]
      %v342 = vld [vmem:[%s255 + $0xa0] sm:$0xff]
      %v343 = vld [vmem:[%s255 + $0xa8] sm:$0xff]
      %v344 = vld [vmem:[%s255 + $0xb0] sm:$0xff]
      %v345 = vld [vmem:[%s255 + $0xb8] sm:$0xff]
      %v346 = vld [vmem:[%s255 + $0xc0] sm:$0xff]
      %v347 = vld [vmem:[%s255 + $0xc8] sm:$0xff]
      %v348 = vld [vmem:[%s255 + $0xd0] sm:$0xff]
      %v349 = vld [vmem:[%s255 + $0xd8] sm:$0xff]
      %v350 = vld [vmem:[%s255 + $0xe0] sm:$0xff]
      %v351 = vld [vmem:[%s255 + $0xe8] sm:$0xff]
      %v352 = vld [vmem:[%s255 + $0xf0] sm:$0xff]
      %v353 = vld [vmem:[%s255 + $0xf8] sm:$0xff]
      %v354 = vmul.f32 %v322, 0.025
      %v355 = vmul.f32 %v323, 0.025
      %v356 = vmul.f32 %v324, 0.025
      %v357 = vmul.f32 %v325, 0.025
      %v358 = vmul.f32 %v326, 0.025
      %v359 = vmul.f32 %v327, 0.025
      %v360 = vmul.f32 %v328, 0.025
      %v361 = vmul.f32 %v329, 0.025
      %v362 = vmul.f32 %v330, 0.025
      %v363 = vmul.f32 %v331, 0.025
      %v364 = vmul.f32 %v332, 0.025
      %v365 = vmul.f32 %v333, 0.025
      %v366 = vmul.f32 %v334, 0.025
      %v367 = vmul.f32 %v335, 0.025
      %v368 = vmul.f32 %v336, 0.025
      %v369 = vmul.f32 %v337, 0.025
      %v370 = vmul.f32 %v338, 0.025
      %v371 = vmul.f32 %v339, 0.025
      %v372 = vmul.f32 %v340, 0.025
      %v373 = vmul.f32 %v341, 0.025
      %v374 = vmul.f32 %v342, 0.025
      %v375 = vmul.f32 %v343, 0.025
      %v376 = vmul.f32 %v344, 0.025
      %v377 = vmul.f32 %v345, 0.025
      %v378 = vmul.f32 %v346, 0.025
      %v379 = vmul.f32 %v347, 0.025
      %v380 = vmul.f32 %v348, 0.025
      %v381 = vmul.f32 %v349, 0.025
      %v382 = vmul.f32 %v350, 0.025
      %v383 = vmul.f32 %v351, 0.025
      %v384 = vmul.f32 %v352, 0.025
      %v385 = vmul.f32 %v353, 0.025
      %v386 = vmul.f32 %v354, %v354
      %v387 = vmul.f32 %v355, %v355
      %v388 = vmul.f32 %v356, %v356
      %v389 = vmul.f32 %v357, %v357
      %v390 = vmul.f32 %v358, %v358
      %v391 = vmul.f32 %v359, %v359
      %v392 = vmul.f32 %v360, %v360
      %v393 = vmul.f32 %v361, %v361
      %v394 = vmul.f32 %v362, %v362
      %v395 = vmul.f32 %v363, %v363
      %v396 = vmul.f32 %v364, %v364
      %v397 = vmul.f32 %v365, %v365
      %v398 = vmul.f32 %v366, %v366
      %v399 = vmul.f32 %v367, %v367
      %v400 = vmul.f32 %v368, %v368
      %v401 = vmul.f32 %v369, %v369
      %v402 = vmul.f32 %v370, %v370
      %v403 = vmul.f32 %v371, %v371
      %v404 = vmul.f32 %v372, %v372
      %v405 = vmul.f32 %v373, %v373
      %v406 = vmul.f32 %v374, %v374
      %v407 = vmul.f32 %v375, %v375
      %v408 = vmul.f32 %v376, %v376
      %v409 = vmul.f32 %v377, %v377
      %v410 = vmul.f32 %v378, %v378
      %v411 = vmul.f32 %v379, %v379
      %v412 = vmul.f32 %v380, %v380
      %v413 = vmul.f32 %v381, %v381
      %v414 = vmul.f32 %v382, %v382
      %v415 = vmul.f32 %v383, %v383
      %v416 = vmul.f32 %v384, %v384
      %v417 = vmul.f32 %v385, %v385
      %vm418 = vcmask 261120
      %v419 = vsel %vm418, %v386, 0.0
      %420 = vadd.xlane.f32.xlu0 %v419
      %v421 = vpop.xlane.xlu0 %420
      %v422 = vsel %vm418, %v387, 0.0
      %423 = vadd.xlane.f32.xlu0 %v422
      %v424 = vpop.xlane.xlu0 %423
      %v425 = vsel %vm418, %v388, 0.0
      %426 = vadd.xlane.f32.xlu0 %v425
      %v427 = vpop.xlane.xlu0 %426
      %v428 = vsel %vm418, %v389, 0.0
      %429 = vadd.xlane.f32.xlu0 %v428
      %v430 = vpop.xlane.xlu0 %429
      %v431 = vsel %vm418, %v390, 0.0
      %432 = vadd.xlane.f32.xlu0 %v431
      %v433 = vpop.xlane.xlu0 %432
      %v434 = vsel %vm418, %v391, 0.0
      %435 = vadd.xlane.f32.xlu0 %v434
      %v436 = vpop.xlane.xlu0 %435
      %v437 = vsel %vm418, %v392, 0.0
      %438 = vadd.xlane.f32.xlu0 %v437
      %v439 = vpop.xlane.xlu0 %438
      %v440 = vsel %vm418, %v393, 0.0
      %441 = vadd.xlane.f32.xlu0 %v440
      %v442 = vpop.xlane.xlu0 %441
      %v443 = vsel %vm418, %v394, 0.0
      %444 = vadd.xlane.f32.xlu0 %v443
      %v445 = vpop.xlane.xlu0 %444
      %v446 = vsel %vm418, %v395, 0.0
      %447 = vadd.xlane.f32.xlu0 %v446
      %v448 = vpop.xlane.xlu0 %447
      %v449 = vsel %vm418, %v396, 0.0
      %450 = vadd.xlane.f32.xlu0 %v449
      %v451 = vpop.xlane.xlu0 %450
      %v452 = vsel %vm418, %v397, 0.0
      %453 = vadd.xlane.f32.xlu0 %v452
      %v454 = vpop.xlane.xlu0 %453
      %v455 = vsel %vm418, %v398, 0.0
      %456 = vadd.xlane.f32.xlu0 %v455
      %v457 = vpop.xlane.xlu0 %456
      %v458 = vsel %vm418, %v399, 0.0
      %459 = vadd.xlane.f32.xlu0 %v458
      %v460 = vpop.xlane.xlu0 %459
      %v461 = vsel %vm418, %v400, 0.0
      %462 = vadd.xlane.f32.xlu0 %v461
      %v463 = vpop.xlane.xlu0 %462
      %v464 = vsel %vm418, %v401, 0.0
      %465 = vadd.xlane.f32.xlu0 %v464
      %v466 = vpop.xlane.xlu0 %465
      %v467 = vsel %vm418, %v402, 0.0
      %468 = vadd.xlane.f32.xlu0 %v467
      %v469 = vpop.xlane.xlu0 %468
      %v470 = vsel %vm418, %v403, 0.0
      %471 = vadd.xlane.f32.xlu0 %v470
      %v472 = vpop.xlane.xlu0 %471
      %v473 = vsel %vm418, %v404, 0.0
      %474 = vadd.xlane.f32.xlu0 %v473
      %v475 = vpop.xlane.xlu0 %474
      %v476 = vsel %vm418, %v405, 0.0
      %477 = vadd.xlane.f32.xlu0 %v476
      %v478 = vpop.xlane.xlu0 %477
      %v479 = vsel %vm418, %v406, 0.0
      %480 = vadd.xlane.f32.xlu0 %v479
      %v481 = vpop.xlane.xlu0 %480
      %v482 = vsel %vm418, %v407, 0.0
      %483 = vadd.xlane.f32.xlu0 %v482
      %v484 = vpop.xlane.xlu0 %483
      %v485 = vsel %vm418, %v408, 0.0
      %486 = vadd.xlane.f32.xlu0 %v485
      %v487 = vpop.xlane.xlu0 %486
      %v488 = vsel %vm418, %v409, 0.0
      %489 = vadd.xlane.f32.xlu0 %v488
      %v490 = vpop.xlane.xlu0 %489
      %v491 = vsel %vm418, %v410, 0.0
      %492 = vadd.xlane.f32.xlu0 %v491
      %v493 = vpop.xlane.xlu0 %492
      %v494 = vsel %vm418, %v411, 0.0
      %495 = vadd.xlane.f32.xlu0 %v494
      %v496 = vpop.xlane.xlu0 %495
      %v497 = vsel %vm418, %v412, 0.0
      %498 = vadd.xlane.f32.xlu0 %v497
      %v499 = vpop.xlane.xlu0 %498
      %v500 = vsel %vm418, %v413, 0.0
      %501 = vadd.xlane.f32.xlu0 %v500
      %v502 = vpop.xlane.xlu0 %501
      %v503 = vsel %vm418, %v414, 0.0
      %504 = vadd.xlane.f32.xlu0 %v503
      %v505 = vpop.xlane.xlu0 %504
      %v506 = vsel %vm418, %v415, 0.0
      %507 = vadd.xlane.f32.xlu0 %v506
      %v508 = vpop.xlane.xlu0 %507
      %v509 = vsel %vm418, %v416, 0.0
      %510 = vadd.xlane.f32.xlu0 %v509
      %v511 = vpop.xlane.xlu0 %510
      %v512 = vsel %vm418, %v417, 0.0
      %513 = vadd.xlane.f32.xlu0 %v512
      %v514 = vpop.xlane.xlu0 %513
      %vm515 = vcmp.gt.f32.partialorder %v421, 0.0
      %vm516 = vcmp.gt.f32.partialorder %v424, 0.0
      %vm517 = vcmp.gt.f32.partialorder %v427, 0.0
      %vm518 = vcmp.gt.f32.partialorder %v430, 0.0
      %vm519 = vcmp.gt.f32.partialorder %v433, 0.0
      %vm520 = vcmp.gt.f32.partialorder %v436, 0.0
      %vm521 = vcmp.gt.f32.partialorder %v439, 0.0
      %vm522 = vcmp.gt.f32.partialorder %v442, 0.0
      %vm523 = vcmp.gt.f32.partialorder %v445, 0.0
      %vm524 = vcmp.gt.f32.partialorder %v448, 0.0
      %vm525 = vcmp.gt.f32.partialorder %v451, 0.0
      %vm526 = vcmp.gt.f32.partialorder %v454, 0.0
      %vm527 = vcmp.gt.f32.partialorder %v457, 0.0
      %vm528 = vcmp.gt.f32.partialorder %v460, 0.0
      %vm529 = vcmp.gt.f32.partialorder %v463, 0.0
      %vm530 = vcmp.gt.f32.partialorder %v466, 0.0
      %vm531 = vcmp.gt.f32.partialorder %v469, 0.0
      %vm532 = vcmp.gt.f32.partialorder %v472, 0.0
      %vm533 = vcmp.gt.f32.partialorder %v475, 0.0
      %vm534 = vcmp.gt.f32.partialorder %v478, 0.0
      %vm535 = vcmp.gt.f32.partialorder %v481, 0.0
      %vm536 = vcmp.gt.f32.partialorder %v484, 0.0
      %vm537 = vcmp.gt.f32.partialorder %v487, 0.0
      %vm538 = vcmp.gt.f32.partialorder %v490, 0.0
      %vm539 = vcmp.gt.f32.partialorder %v493, 0.0
      %vm540 = vcmp.gt.f32.partialorder %v496, 0.0
      %vm541 = vcmp.gt.f32.partialorder %v499, 0.0
      %vm542 = vcmp.gt.f32.partialorder %v502, 0.0
      %vm543 = vcmp.gt.f32.partialorder %v505, 0.0
      %vm544 = vcmp.gt.f32.partialorder %v508, 0.0
      %vm545 = vcmp.gt.f32.partialorder %v511, 0.0
      %vm546 = vcmp.gt.f32.partialorder %v514, 0.0
      %v547 = vsel %vm515, %v421, 1.0
      %v548 = vsel %vm516, %v424, 1.0
      %v549 = vsel %vm517, %v427, 1.0
      %v550 = vsel %vm518, %v430, 1.0
      %v551 = vsel %vm519, %v433, 1.0
      %v552 = vsel %vm520, %v436, 1.0
      %v553 = vsel %vm521, %v439, 1.0
      %v554 = vsel %vm522, %v442, 1.0
      %v555 = vsel %vm523, %v445, 1.0
      %v556 = vsel %vm524, %v448, 1.0
      %v557 = vsel %vm525, %v451, 1.0
      %v558 = vsel %vm526, %v454, 1.0
      %v559 = vsel %vm527, %v457, 1.0
      %v560 = vsel %vm528, %v460, 1.0
      %v561 = vsel %vm529, %v463, 1.0
      %v562 = vsel %vm530, %v466, 1.0
      %v563 = vsel %vm531, %v469, 1.0
      %v564 = vsel %vm532, %v472, 1.0
      %v565 = vsel %vm533, %v475, 1.0
      %v566 = vsel %vm534, %v478, 1.0
      %v567 = vsel %vm535, %v481, 1.0
      %v568 = vsel %vm536, %v484, 1.0
      %v569 = vsel %vm537, %v487, 1.0
      %v570 = vsel %vm538, %v490, 1.0
      %v571 = vsel %vm539, %v493, 1.0
      %v572 = vsel %vm540, %v496, 1.0
      %v573 = vsel %vm541, %v499, 1.0
      %v574 = vsel %vm542, %v502, 1.0
      %v575 = vsel %vm543, %v505, 1.0
      %v576 = vsel %vm544, %v508, 1.0
      %v577 = vsel %vm545, %v511, 1.0
      %v578 = vsel %vm546, %v514, 1.0
      %v579 = vtanh.pop %v421
      %v580 = vtanh.pop %v424
      %v581 = vtanh.pop %v427
      %v582 = vtanh.pop %v430
      %v583 = vtanh.pop %v433
      %v584 = vtanh.pop %v436
      %v585 = vtanh.pop %v439
      %v586 = vtanh.pop %v442
      %v587 = vtanh.pop %v445
      %v588 = vtanh.pop %v448
      %v589 = vtanh.pop %v451
      %v590 = vtanh.pop %v454
      %v591 = vtanh.pop %v457
      %v592 = vtanh.pop %v460
      %v593 = vtanh.pop %v463
      %v594 = vtanh.pop %v466
      %v595 = vtanh.pop %v469
      %v596 = vtanh.pop %v472
      %v597 = vtanh.pop %v475
      %v598 = vtanh.pop %v478
      %v599 = vtanh.pop %v481
      %v600 = vtanh.pop %v484
      %v601 = vtanh.pop %v487
      %v602 = vtanh.pop %v490
      %v603 = vtanh.pop %v493
      %v604 = vtanh.pop %v496
      %v605 = vtanh.pop %v499
      %v606 = vtanh.pop %v502
      %v607 = vtanh.pop %v505
      %v608 = vtanh.pop %v508
      %v609 = vtanh.pop %v511
      %v610 = vtanh.pop %v514
      %v611 = vrcp.pop %v547
      %v612 = vmul.f32 %v579, %v611
      %v613 = vrcp.pop %v548
      %v614 = vmul.f32 %v580, %v613
      %v615 = vrcp.pop %v549
      %v616 = vmul.f32 %v581, %v615
      %v617 = vrcp.pop %v550
      %v618 = vmul.f32 %v582, %v617
      %v619 = vrcp.pop %v551
      %v620 = vmul.f32 %v583, %v619
      %v621 = vrcp.pop %v552
      %v622 = vmul.f32 %v584, %v621
      %v623 = vrcp.pop %v553
      %v624 = vmul.f32 %v585, %v623
      %v625 = vrcp.pop %v554
      %v626 = vmul.f32 %v586, %v625
      %v627 = vrcp.pop %v555
      %v628 = vmul.f32 %v587, %v627
      %v629 = vrcp.pop %v556
      %v630 = vmul.f32 %v588, %v629
      %v631 = vrcp.pop %v557
      %v632 = vmul.f32 %v589, %v631
      %v633 = vrcp.pop %v558
      %v634 = vmul.f32 %v590, %v633
      %v635 = vrcp.pop %v559
      %v636 = vmul.f32 %v591, %v635
      %v637 = vrcp.pop %v560
      %v638 = vmul.f32 %v592, %v637
      %v639 = vrcp.pop %v561
      %v640 = vmul.f32 %v593, %v639
      %v641 = vrcp.pop %v562
      %v642 = vmul.f32 %v594, %v641
      %v643 = vrcp.pop %v563
      %v644 = vmul.f32 %v595, %v643
      %v645 = vrcp.pop %v564
      %v646 = vmul.f32 %v596, %v645
      %v647 = vrcp.pop %v565
      %v648 = vmul.f32 %v597, %v647
      %v649 = vrcp.pop %v566
      %v650 = vmul.f32 %v598, %v649
      %v651 = vrcp.pop %v567
      %v652 = vmul.f32 %v599, %v651
      %v653 = vrcp.pop %v568
      %v654 = vmul.f32 %v600, %v653
      %v655 = vrcp.pop %v569
      %v656 = vmul.f32 %v601, %v655
      %v657 = vrcp.pop %v570
      %v658 = vmul.f32 %v602, %v657
      %v659 = vrcp.pop %v571
      %v660 = vmul.f32 %v603, %v659
      %v661 = vrcp.pop %v572
      %v662 = vmul.f32 %v604, %v661
      %v663 = vrcp.pop %v573
      %v664 = vmul.f32 %v605, %v663
      %v665 = vrcp.pop %v574
      %v666 = vmul.f32 %v606, %v665
      %v667 = vrcp.pop %v575
      %v668 = vmul.f32 %v607, %v667
      %v669 = vrcp.pop %v576
      %v670 = vmul.f32 %v608, %v669
      %v671 = vrcp.pop %v577
      %v672 = vmul.f32 %v609, %v671
      %v673 = vrcp.pop %v578
      %v674 = vmul.f32 %v610, %v673
      %v675 = vsel %vm515, %v612, 1.0
      %v676 = vsel %vm516, %v614, 1.0
      %v677 = vsel %vm517, %v616, 1.0
      %v678 = vsel %vm518, %v618, 1.0
      %v679 = vsel %vm519, %v620, 1.0
      %v680 = vsel %vm520, %v622, 1.0
      %v681 = vsel %vm521, %v624, 1.0
      %v682 = vsel %vm522, %v626, 1.0
      %v683 = vsel %vm523, %v628, 1.0
      %v684 = vsel %vm524, %v630, 1.0
      %v685 = vsel %vm525, %v632, 1.0
      %v686 = vsel %vm526, %v634, 1.0
      %v687 = vsel %vm527, %v636, 1.0
      %v688 = vsel %vm528, %v638, 1.0
      %v689 = vsel %vm529, %v640, 1.0
      %v690 = vsel %vm530, %v642, 1.0
      %v691 = vsel %vm531, %v644, 1.0
      %v692 = vsel %vm532, %v646, 1.0
      %v693 = vsel %vm533, %v648, 1.0
      %v694 = vsel %vm534, %v650, 1.0
      %v695 = vsel %vm535, %v652, 1.0
      %v696 = vsel %vm536, %v654, 1.0
      %v697 = vsel %vm537, %v656, 1.0
      %v698 = vsel %vm538, %v658, 1.0
      %v699 = vsel %vm539, %v660, 1.0
      %v700 = vsel %vm540, %v662, 1.0
      %v701 = vsel %vm541, %v664, 1.0
      %v702 = vsel %vm542, %v666, 1.0
      %v703 = vsel %vm543, %v668, 1.0
      %v704 = vsel %vm544, %v670, 1.0
      %v705 = vsel %vm545, %v672, 1.0
      %v706 = vsel %vm546, %v674, 1.0
      %v707 = vmul.f32 %v354, %v675
      %v708 = vmul.f32 %v355, %v676
      %v709 = vmul.f32 %v356, %v677
      %v710 = vmul.f32 %v357, %v678
      %v711 = vmul.f32 %v358, %v679
      %v712 = vmul.f32 %v359, %v680
      %v713 = vmul.f32 %v360, %v681
      %v714 = vmul.f32 %v361, %v682
      %v715 = vmul.f32 %v362, %v683
      %v716 = vmul.f32 %v363, %v684
      %v717 = vmul.f32 %v364, %v685
      %v718 = vmul.f32 %v365, %v686
      %v719 = vmul.f32 %v366, %v687
      %v720 = vmul.f32 %v367, %v688
      %v721 = vmul.f32 %v368, %v689
      %v722 = vmul.f32 %v369, %v690
      %v723 = vmul.f32 %v370, %v691
      %v724 = vmul.f32 %v371, %v692
      %v725 = vmul.f32 %v372, %v693
      %v726 = vmul.f32 %v373, %v694
      %v727 = vmul.f32 %v374, %v695
      %v728 = vmul.f32 %v375, %v696
      %v729 = vmul.f32 %v376, %v697
      %v730 = vmul.f32 %v377, %v698
      %v731 = vmul.f32 %v378, %v699
      %v732 = vmul.f32 %v379, %v700
      %v733 = vmul.f32 %v380, %v701
      %v734 = vmul.f32 %v381, %v702
      %v735 = vmul.f32 %v382, %v703
      %v736 = vmul.f32 %v383, %v704
      %v737 = vmul.f32 %v384, %v705
      %v738 = vmul.f32 %v385, %v706
      %v739 = vpack.c.bf16 %v708, %v707
      %v740 = vpack.c.bf16 %v710, %v709
      %v741 = vpack.c.bf16 %v712, %v711
      %v742 = vpack.c.bf16 %v714, %v713
      %v743 = vpack.c.bf16 %v716, %v715
      %v744 = vpack.c.bf16 %v718, %v717
      %v745 = vpack.c.bf16 %v720, %v719
      %v746 = vpack.c.bf16 %v722, %v721
      %v747 = vpack.c.bf16 %v724, %v723
      %v748 = vpack.c.bf16 %v726, %v725
      %v749 = vpack.c.bf16 %v728, %v727
      %v750 = vpack.c.bf16 %v730, %v729
      %v751 = vpack.c.bf16 %v732, %v731
      %v752 = vpack.c.bf16 %v734, %v733
      %v753 = vpack.c.bf16 %v736, %v735
      %v754 = vpack.c.bf16 %v738, %v737
      %v759 = vunpack.c.l.b16 %v270
      %v760 = vunpack.c.l.b16 %v271
      %v761 = vunpack.c.l.b16 %v272
      %v762 = vunpack.c.l.b16 %v273
      %v763 = vpack.c.b16 %v760, %v759
      %v764 = vpack.c.b16 %v762, %v761
      %v768 = vsel %vm418, %v739, 0
      %v771 = vsel %vm418, %v740, 0
      %v774 = vsel %vm418, %v741, 0
      %v777 = vsel %vm418, %v742, 0
      %v780 = vsel %vm418, %v743, 0
      %v783 = vsel %vm418, %v744, 0
      %v786 = vsel %vm418, %v745, 0
      %v789 = vsel %vm418, %v746, 0
      %v792 = vsel %vm418, %v747, 0
      %v795 = vsel %vm418, %v748, 0
      %v798 = vsel %vm418, %v749, 0
      %v801 = vsel %vm418, %v750, 0
      %v804 = vsel %vm418, %v751, 0
      %v807 = vsel %vm418, %v752, 0
      %v810 = vsel %vm418, %v753, 0
      %v813 = vsel %vm418, %v754, 0
      %815 = vmatprep.subr.bf16.mxu0 0
      %816 = vmatpush1.bf16.msra.mxu0 0
      %817 = vmatprep.subr.bf16.mxu0 0
      %818 = vmatpush1.bf16.msra.mxu0 0
      %819 = vmatprep.subr.bf16.mxu0 0
      %820 = vmatpush1.bf16.msra.mxu0 0
      %821 = vmatprep.subr.bf16.mxu0 0
      %822 = vmatpush1.bf16.msra.mxu0 0
      %823 = vmatprep.subr.bf16.mxu0 0
      %824 = vmatpush1.bf16.msra.mxu0 0
      %825 = vmatprep.subr.bf16.mxu0 0
      %826 = vmatpush1.bf16.msra.mxu0 0
      %827 = vmatprep.subr.bf16.mxu0 0
      %828 = vmatpush1.bf16.msra.mxu0 %v764
      %829 = vmatprep.subr.bf16.mxu0 0
      %830 = vmatpush1.bf16.msra.mxu0 %v763
      %831 = vmatprep.subr.bf16.mxu0 0
      %832 = vmatpush2.bf16.msra.mxu0 0
      %833 = vmatprep.subr.bf16.mxu0 0
      %834 = vmatpush2.bf16.msra.mxu0 0
      %835 = vmatprep.subr.bf16.mxu0 0
      %836 = vmatpush2.bf16.msra.mxu0 0
      %837 = vmatprep.subr.bf16.mxu0 0
      %838 = vmatpush2.bf16.msra.mxu0 0
      %839 = vmatprep.subr.bf16.mxu0 0
      %840 = vmatpush2.bf16.msra.mxu0 0
      %841 = vmatprep.subr.bf16.mxu0 0
      %842 = vmatpush2.bf16.msra.mxu0 0
      %843 = vmatprep.subr.bf16.mxu0 0
      %844 = vmatpush2.bf16.msra.mxu0 0
      %845 = vmatprep.subr.bf16.mxu0 0
      %846 = vmatpush2.bf16.msra.mxu0 0
      %847 = vmatprep.mubr.bf16.mxu0 0
      %848 = vmatmul.mubr.bf16.gmra.mxu0 %v768
      %v849 = vpop.f32.mrf.mxu0
      %v850 = vadd.f32 0.0, %v849
      %v851 = vpop.f32.mrf.mxu0
      %v852 = vpop.f32.mrf.mxu0
      %v853 = vadd.f32 0.0, %v852
      %v854 = vpop.f32.mrf.mxu0
      %855 = vmatprep.mubr.bf16.mxu0 0
      %856 = vmatmul.mubr.bf16.gmra.mxu0 %v771
      %v857 = vpop.f32.mrf.mxu0
      %v858 = vadd.f32 0.0, %v857
      %v859 = vpop.f32.mrf.mxu0
      %v860 = vpop.f32.mrf.mxu0
      %v861 = vadd.f32 0.0, %v860
      %v862 = vpop.f32.mrf.mxu0
      %863 = vmatprep.mubr.bf16.mxu0 0
      %864 = vmatmul.mubr.bf16.gmra.mxu0 %v774
      %v865 = vpop.f32.mrf.mxu0
      %v866 = vadd.f32 0.0, %v865
      %v867 = vpop.f32.mrf.mxu0
      %v868 = vpop.f32.mrf.mxu0
      %v869 = vadd.f32 0.0, %v868
      %v870 = vpop.f32.mrf.mxu0
      %871 = vmatprep.mubr.bf16.mxu0 0
      %872 = vmatmul.mubr.bf16.gmra.mxu0 %v777
      %v873 = vpop.f32.mrf.mxu0
      %v874 = vadd.f32 0.0, %v873
      %v875 = vpop.f32.mrf.mxu0
      %v876 = vpop.f32.mrf.mxu0
      %v877 = vadd.f32 0.0, %v876
      %v878 = vpop.f32.mrf.mxu0
      %879 = vmatprep.mubr.bf16.mxu0 0
      %880 = vmatmul.mubr.bf16.gmra.mxu0 %v780
      %v881 = vpop.f32.mrf.mxu0
      %v882 = vadd.f32 0.0, %v881
      %v883 = vpop.f32.mrf.mxu0
      %v884 = vpop.f32.mrf.mxu0
      %v885 = vadd.f32 0.0, %v884
      %v886 = vpop.f32.mrf.mxu0
      %887 = vmatprep.mubr.bf16.mxu0 0
      %888 = vmatmul.mubr.bf16.gmra.mxu0 %v783
      %v889 = vpop.f32.mrf.mxu0
      %v890 = vadd.f32 0.0, %v889
      %v891 = vpop.f32.mrf.mxu0
      %v892 = vpop.f32.mrf.mxu0
      %v893 = vadd.f32 0.0, %v892
      %v894 = vpop.f32.mrf.mxu0
      %895 = vmatprep.mubr.bf16.mxu0 0
      %896 = vmatmul.mubr.bf16.gmra.mxu0 %v786
      %v897 = vpop.f32.mrf.mxu0
      %v898 = vadd.f32 0.0, %v897
      %v899 = vpop.f32.mrf.mxu0
      %v900 = vpop.f32.mrf.mxu0
      %v901 = vadd.f32 0.0, %v900
      %v902 = vpop.f32.mrf.mxu0
      %903 = vmatprep.mubr.bf16.mxu0 0
      %904 = vmatmul.mubr.bf16.gmra.mxu0 %v789
      %v905 = vpop.f32.mrf.mxu0
      %v906 = vadd.f32 0.0, %v905
      %v907 = vpop.f32.mrf.mxu0
      %v908 = vpop.f32.mrf.mxu0
      %v909 = vadd.f32 0.0, %v908
      %v910 = vpop.f32.mrf.mxu0
      %911 = vmatprep.mubr.bf16.mxu0 0
      %912 = vmatmul.mubr.bf16.gmra.mxu0 %v792
      %v913 = vpop.f32.mrf.mxu0
      %v914 = vadd.f32 0.0, %v913
      %v915 = vpop.f32.mrf.mxu0
      %v916 = vpop.f32.mrf.mxu0
      %v917 = vadd.f32 0.0, %v916
      %v918 = vpop.f32.mrf.mxu0
      %919 = vmatprep.mubr.bf16.mxu0 0
      %920 = vmatmul.mubr.bf16.gmra.mxu0 %v795
      %v921 = vpop.f32.mrf.mxu0
      %v922 = vadd.f32 0.0, %v921
      %v923 = vpop.f32.mrf.mxu0
      %v924 = vpop.f32.mrf.mxu0
      %v925 = vadd.f32 0.0, %v924
      %v926 = vpop.f32.mrf.mxu0
      %927 = vmatprep.mubr.bf16.mxu0 0
      %928 = vmatmul.mubr.bf16.gmra.mxu0 %v798
      %v929 = vpop.f32.mrf.mxu0
      %v930 = vadd.f32 0.0, %v929
      %v931 = vpop.f32.mrf.mxu0
      %v932 = vpop.f32.mrf.mxu0
      %v933 = vadd.f32 0.0, %v932
      %v934 = vpop.f32.mrf.mxu0
      %935 = vmatprep.mubr.bf16.mxu0 0
      %936 = vmatmul.mubr.bf16.gmra.mxu0 %v801
      %v937 = vpop.f32.mrf.mxu0
      %v938 = vadd.f32 0.0, %v937
      %v939 = vpop.f32.mrf.mxu0
      %v940 = vpop.f32.mrf.mxu0
      %v941 = vadd.f32 0.0, %v940
      %v942 = vpop.f32.mrf.mxu0
      %943 = vmatprep.mubr.bf16.mxu0 0
      %944 = vmatmul.mubr.bf16.gmra.mxu0 %v804
      %v945 = vpop.f32.mrf.mxu0
      %v946 = vadd.f32 0.0, %v945
      %v947 = vpop.f32.mrf.mxu0
      %v948 = vpop.f32.mrf.mxu0
      %v949 = vadd.f32 0.0, %v948
      %v950 = vpop.f32.mrf.mxu0
      %951 = vmatprep.mubr.bf16.mxu0 0
      %952 = vmatmul.mubr.bf16.gmra.mxu0 %v807
      %v953 = vpop.f32.mrf.mxu0
      %v954 = vadd.f32 0.0, %v953
      %v955 = vpop.f32.mrf.mxu0
      %v956 = vpop.f32.mrf.mxu0
      %v957 = vadd.f32 0.0, %v956
      %v958 = vpop.f32.mrf.mxu0
      %959 = vmatprep.mubr.bf16.mxu0 0
      %960 = vmatmul.mubr.bf16.gmra.mxu0 %v810
      %v961 = vpop.f32.mrf.mxu0
      %v962 = vadd.f32 0.0, %v961
      %v963 = vpop.f32.mrf.mxu0
      %v964 = vpop.f32.mrf.mxu0
      %v965 = vadd.f32 0.0, %v964
      %v966 = vpop.f32.mrf.mxu0
      %967 = vmatprep.mubr.bf16.mxu0 0
      %968 = vmatmul.mubr.bf16.gmra.mxu0 %v813
      %v969 = vpop.f32.mrf.mxu0
      %v970 = vadd.f32 0.0, %v969
      %v971 = vpop.f32.mrf.mxu0
      %v972 = vpop.f32.mrf.mxu0
      %v973 = vadd.f32 0.0, %v972
      %v974 = vpop.f32.mrf.mxu0
      %975 = vdwg.mxu0
      %v976 = vtanh.pop %v850
      %v977 = vtanh.pop %v853
      %v978 = vtanh.pop %v858
      %v979 = vtanh.pop %v861
      %v980 = vtanh.pop %v866
      %v981 = vtanh.pop %v869
      %v982 = vtanh.pop %v874
      %v983 = vtanh.pop %v877
      %v984 = vtanh.pop %v882
      %v985 = vtanh.pop %v885
      %v986 = vtanh.pop %v890
      %v987 = vtanh.pop %v893
      %v988 = vtanh.pop %v898
      %v989 = vtanh.pop %v901
      %v990 = vtanh.pop %v906
      %v991 = vtanh.pop %v909
      %v992 = vtanh.pop %v914
      %v993 = vtanh.pop %v917
      %v994 = vtanh.pop %v922
      %v995 = vtanh.pop %v925
      %v996 = vtanh.pop %v930
      %v997 = vtanh.pop %v933
      %v998 = vtanh.pop %v938
      %v999 = vtanh.pop %v941
      %v1000 = vtanh.pop %v946
      %v1001 = vtanh.pop %v949
      %v1002 = vtanh.pop %v954
      %v1003 = vtanh.pop %v957
      %v1004 = vtanh.pop %v962
      %v1005 = vtanh.pop %v965
      %v1006 = vtanh.pop %v970
      %v1007 = vtanh.pop %v973
      %v1008 = vpack.c.bf16 %v977, %v976
      %v1009 = vpack.c.bf16 %v979, %v978
      %v1010 = vpack.c.bf16 %v981, %v980
      %v1011 = vpack.c.bf16 %v983, %v982
      %v1012 = vpack.c.bf16 %v985, %v984
      %v1013 = vpack.c.bf16 %v987, %v986
      %v1014 = vpack.c.bf16 %v989, %v988
      %v1015 = vpack.c.bf16 %v991, %v990
      %v1016 = vpack.c.bf16 %v993, %v992
      %v1017 = vpack.c.bf16 %v995, %v994
      %v1018 = vpack.c.bf16 %v997, %v996
      %v1019 = vpack.c.bf16 %v999, %v998
      %v1020 = vpack.c.bf16 %v1001, %v1000
      %v1021 = vpack.c.bf16 %v1003, %v1002
      %v1022 = vpack.c.bf16 %v1005, %v1004
      %v1023 = vpack.c.bf16 %v1007, %v1006
      %v1040 = vunpack.c.l.b16 %v274
      %v1041 = vunpack.c.l.b16 %v275
      %v1042 = vunpack.c.l.b16 %v276
      %v1043 = vunpack.c.l.b16 %v277
      %v1044 = vunpack.c.l.b16 %v278
      %v1045 = vunpack.c.l.b16 %v279
      %v1046 = vunpack.c.l.b16 %v280
      %v1047 = vunpack.c.l.b16 %v281
      %v1048 = vunpack.c.l.b16 %v282
      %v1049 = vunpack.c.l.b16 %v283
      %v1050 = vunpack.c.l.b16 %v284
      %v1051 = vunpack.c.l.b16 %v285
      %v1052 = vunpack.c.l.b16 %v286
      %v1053 = vunpack.c.l.b16 %v287
      %v1054 = vunpack.c.l.b16 %v288
      %v1055 = vunpack.c.l.b16 %v289
      %v1056 = vpack.c.b16 %v1041, %v1040
      %v1057 = vpack.c.b16 %v1043, %v1042
      %v1058 = vpack.c.b16 %v1045, %v1044
      %v1059 = vpack.c.b16 %v1047, %v1046
      %v1060 = vpack.c.b16 %v1049, %v1048
      %v1061 = vpack.c.b16 %v1051, %v1050
      %v1062 = vpack.c.b16 %v1053, %v1052
      %v1063 = vpack.c.b16 %v1055, %v1054
      %1072 = vmatprep.subr.bf16.mxu0 0
      %1073 = vmatpush1.bf16.msra.mxu0 %v1063
      %1074 = vmatprep.subr.bf16.mxu0 0
      %1075 = vmatpush1.bf16.msra.mxu0 %v1062
      %1076 = vmatprep.subr.bf16.mxu0 0
      %1077 = vmatpush1.bf16.msra.mxu0 %v1061
      %1078 = vmatprep.subr.bf16.mxu0 0
      %1079 = vmatpush1.bf16.msra.mxu0 %v1060
      %1080 = vmatprep.subr.bf16.mxu0 0
      %1081 = vmatpush1.bf16.msra.mxu0 %v1059
      %1082 = vmatprep.subr.bf16.mxu0 0
      %1083 = vmatpush1.bf16.msra.mxu0 %v1058
      %1084 = vmatprep.subr.bf16.mxu0 0
      %1085 = vmatpush1.bf16.msra.mxu0 %v1057
      %1086 = vmatprep.subr.bf16.mxu0 0
      %1087 = vmatpush1.bf16.msra.mxu0 %v1056
      %1088 = vmatprep.subr.bf16.mxu0 0
      %1089 = vmatpush2.bf16.msra.mxu0 0
      %1090 = vmatprep.subr.bf16.mxu0 0
      %1091 = vmatpush2.bf16.msra.mxu0 0
      %1092 = vmatprep.subr.bf16.mxu0 0
      %1093 = vmatpush2.bf16.msra.mxu0 0
      %1094 = vmatprep.subr.bf16.mxu0 0
      %1095 = vmatpush2.bf16.msra.mxu0 0
      %1096 = vmatprep.subr.bf16.mxu0 0
      %1097 = vmatpush2.bf16.msra.mxu0 0
      %1098 = vmatprep.subr.bf16.mxu0 0
      %1099 = vmatpush2.bf16.msra.mxu0 0
      %1100 = vmatprep.subr.bf16.mxu0 0
      %1101 = vmatpush2.bf16.msra.mxu0 0
      %1102 = vmatprep.subr.bf16.mxu0 0
      %1103 = vmatpush2.bf16.msra.mxu0 0
      %1104 = vmatprep.mubr.bf16.mxu0 0
      %1105 = vmatmul.mubr.bf16.gmra.mxu0 %v1008
      %v1106 = vpop.f32.mrf.mxu0
      %v1107 = vadd.f32 0.0, %v1106
      %v1108 = vpop.f32.mrf.mxu0
      %v1109 = vpop.f32.mrf.mxu0
      %v1110 = vadd.f32 0.0, %v1109
      %v1111 = vpop.f32.mrf.mxu0
      %1112 = vmatprep.mubr.bf16.mxu0 0
      %1113 = vmatmul.mubr.bf16.gmra.mxu0 %v1009
      %v1114 = vpop.f32.mrf.mxu0
      %v1115 = vadd.f32 0.0, %v1114
      %v1116 = vpop.f32.mrf.mxu0
      %v1117 = vpop.f32.mrf.mxu0
      %v1118 = vadd.f32 0.0, %v1117
      %v1119 = vpop.f32.mrf.mxu0
      %1120 = vmatprep.mubr.bf16.mxu0 0
      %1121 = vmatmul.mubr.bf16.gmra.mxu0 %v1010
      %v1122 = vpop.f32.mrf.mxu0
      %v1123 = vadd.f32 0.0, %v1122
      %v1124 = vpop.f32.mrf.mxu0
      %v1125 = vpop.f32.mrf.mxu0
      %v1126 = vadd.f32 0.0, %v1125
      %v1127 = vpop.f32.mrf.mxu0
      %1128 = vmatprep.mubr.bf16.mxu0 0
      %1129 = vmatmul.mubr.bf16.gmra.mxu0 %v1011
      %v1130 = vpop.f32.mrf.mxu0
      %v1131 = vadd.f32 0.0, %v1130
      %v1132 = vpop.f32.mrf.mxu0
      %v1133 = vpop.f32.mrf.mxu0
      %v1134 = vadd.f32 0.0, %v1133
      %v1135 = vpop.f32.mrf.mxu0
      %1136 = vmatprep.mubr.bf16.mxu0 0
      %1137 = vmatmul.mubr.bf16.gmra.mxu0 %v1012
      %v1138 = vpop.f32.mrf.mxu0
      %v1139 = vadd.f32 0.0, %v1138
      %v1140 = vpop.f32.mrf.mxu0
      %v1141 = vpop.f32.mrf.mxu0
      %v1142 = vadd.f32 0.0, %v1141
      %v1143 = vpop.f32.mrf.mxu0
      %1144 = vmatprep.mubr.bf16.mxu0 0
      %1145 = vmatmul.mubr.bf16.gmra.mxu0 %v1013
      %v1146 = vpop.f32.mrf.mxu0
      %v1147 = vadd.f32 0.0, %v1146
      %v1148 = vpop.f32.mrf.mxu0
      %v1149 = vpop.f32.mrf.mxu0
      %v1150 = vadd.f32 0.0, %v1149
      %v1151 = vpop.f32.mrf.mxu0
      %1152 = vmatprep.mubr.bf16.mxu0 0
      %1153 = vmatmul.mubr.bf16.gmra.mxu0 %v1014
      %v1154 = vpop.f32.mrf.mxu0
      %v1155 = vadd.f32 0.0, %v1154
      %v1156 = vpop.f32.mrf.mxu0
      %v1157 = vpop.f32.mrf.mxu0
      %v1158 = vadd.f32 0.0, %v1157
      %v1159 = vpop.f32.mrf.mxu0
      %1160 = vmatprep.mubr.bf16.mxu0 0
      %1161 = vmatmul.mubr.bf16.gmra.mxu0 %v1015
      %v1162 = vpop.f32.mrf.mxu0
      %v1163 = vadd.f32 0.0, %v1162
      %v1164 = vpop.f32.mrf.mxu0
      %v1165 = vpop.f32.mrf.mxu0
      %v1166 = vadd.f32 0.0, %v1165
      %v1167 = vpop.f32.mrf.mxu0
      %1168 = vmatprep.mubr.bf16.mxu0 0
      %1169 = vmatmul.mubr.bf16.gmra.mxu0 %v1016
      %v1170 = vpop.f32.mrf.mxu0
      %v1171 = vadd.f32 0.0, %v1170
      %v1172 = vpop.f32.mrf.mxu0
      %v1173 = vpop.f32.mrf.mxu0
      %v1174 = vadd.f32 0.0, %v1173
      %v1175 = vpop.f32.mrf.mxu0
      %1176 = vmatprep.mubr.bf16.mxu0 0
      %1177 = vmatmul.mubr.bf16.gmra.mxu0 %v1017
      %v1178 = vpop.f32.mrf.mxu0
      %v1179 = vadd.f32 0.0, %v1178
      %v1180 = vpop.f32.mrf.mxu0
      %v1181 = vpop.f32.mrf.mxu0
      %v1182 = vadd.f32 0.0, %v1181
      %v1183 = vpop.f32.mrf.mxu0
      %1184 = vmatprep.mubr.bf16.mxu0 0
      %1185 = vmatmul.mubr.bf16.gmra.mxu0 %v1018
      %v1186 = vpop.f32.mrf.mxu0
      %v1187 = vadd.f32 0.0, %v1186
      %v1188 = vpop.f32.mrf.mxu0
      %v1189 = vpop.f32.mrf.mxu0
      %v1190 = vadd.f32 0.0, %v1189
      %v1191 = vpop.f32.mrf.mxu0
      %1192 = vmatprep.mubr.bf16.mxu0 0
      %1193 = vmatmul.mubr.bf16.gmra.mxu0 %v1019
      %v1194 = vpop.f32.mrf.mxu0
      %v1195 = vadd.f32 0.0, %v1194
      %v1196 = vpop.f32.mrf.mxu0
      %v1197 = vpop.f32.mrf.mxu0
      %v1198 = vadd.f32 0.0, %v1197
      %v1199 = vpop.f32.mrf.mxu0
      %1200 = vmatprep.mubr.bf16.mxu0 0
      %1201 = vmatmul.mubr.bf16.gmra.mxu0 %v1020
      %v1202 = vpop.f32.mrf.mxu0
      %v1203 = vadd.f32 0.0, %v1202
      %v1204 = vpop.f32.mrf.mxu0
      %v1205 = vpop.f32.mrf.mxu0
      %v1206 = vadd.f32 0.0, %v1205
      %v1207 = vpop.f32.mrf.mxu0
      %1208 = vmatprep.mubr.bf16.mxu0 0
      %1209 = vmatmul.mubr.bf16.gmra.mxu0 %v1021
      %v1210 = vpop.f32.mrf.mxu0
      %v1211 = vadd.f32 0.0, %v1210
      %v1212 = vpop.f32.mrf.mxu0
      %v1213 = vpop.f32.mrf.mxu0
      %v1214 = vadd.f32 0.0, %v1213
      %v1215 = vpop.f32.mrf.mxu0
      %1216 = vmatprep.mubr.bf16.mxu0 0
      %1217 = vmatmul.mubr.bf16.gmra.mxu0 %v1022
      %v1218 = vpop.f32.mrf.mxu0
      %v1219 = vadd.f32 0.0, %v1218
      %v1220 = vpop.f32.mrf.mxu0
      %v1221 = vpop.f32.mrf.mxu0
      %v1222 = vadd.f32 0.0, %v1221
      %v1223 = vpop.f32.mrf.mxu0
      %1224 = vmatprep.mubr.bf16.mxu0 0
      %1225 = vmatmul.mubr.bf16.gmra.mxu0 %v1023
      %v1226 = vpop.f32.mrf.mxu0
      %v1227 = vadd.f32 0.0, %v1226
      %v1228 = vpop.f32.mrf.mxu0
      %v1229 = vpop.f32.mrf.mxu0
      %v1230 = vadd.f32 0.0, %v1229
      %v1231 = vpop.f32.mrf.mxu0
      %1232 = vdwg.mxu0
      %v1233 = vtanh.pop %v1107
      %v1234 = vtanh.pop %v1110
      %v1235 = vtanh.pop %v1115
      %v1236 = vtanh.pop %v1118
      %v1237 = vtanh.pop %v1123
      %v1238 = vtanh.pop %v1126
      %v1239 = vtanh.pop %v1131
      %v1240 = vtanh.pop %v1134
      %v1241 = vtanh.pop %v1139
      %v1242 = vtanh.pop %v1142
      %v1243 = vtanh.pop %v1147
      %v1244 = vtanh.pop %v1150
      %v1245 = vtanh.pop %v1155
      %v1246 = vtanh.pop %v1158
      %v1247 = vtanh.pop %v1163
      %v1248 = vtanh.pop %v1166
      %v1249 = vtanh.pop %v1171
      %v1250 = vtanh.pop %v1174
      %v1251 = vtanh.pop %v1179
      %v1252 = vtanh.pop %v1182
      %v1253 = vtanh.pop %v1187
      %v1254 = vtanh.pop %v1190
      %v1255 = vtanh.pop %v1195
      %v1256 = vtanh.pop %v1198
      %v1257 = vtanh.pop %v1203
      %v1258 = vtanh.pop %v1206
      %v1259 = vtanh.pop %v1211
      %v1260 = vtanh.pop %v1214
      %v1261 = vtanh.pop %v1219
      %v1262 = vtanh.pop %v1222
      %v1263 = vtanh.pop %v1227
      %v1264 = vtanh.pop %v1230
      %v1265 = vpack.c.bf16 %v1234, %v1233
      %v1266 = vpack.c.bf16 %v1236, %v1235
      %v1267 = vpack.c.bf16 %v1238, %v1237
      %v1268 = vpack.c.bf16 %v1240, %v1239
      %v1269 = vpack.c.bf16 %v1242, %v1241
      %v1270 = vpack.c.bf16 %v1244, %v1243
      %v1271 = vpack.c.bf16 %v1246, %v1245
      %v1272 = vpack.c.bf16 %v1248, %v1247
      %v1273 = vpack.c.bf16 %v1250, %v1249
      %v1274 = vpack.c.bf16 %v1252, %v1251
      %v1275 = vpack.c.bf16 %v1254, %v1253
      %v1276 = vpack.c.bf16 %v1256, %v1255
      %v1277 = vpack.c.bf16 %v1258, %v1257
      %v1278 = vpack.c.bf16 %v1260, %v1259
      %v1279 = vpack.c.bf16 %v1262, %v1261
      %v1280 = vpack.c.bf16 %v1264, %v1263
      %v1297 = vunpack.c.l.b16 %v290
      %v1298 = vunpack.c.l.b16 %v291
      %v1299 = vunpack.c.l.b16 %v292
      %v1300 = vunpack.c.l.b16 %v293
      %v1301 = vunpack.c.l.b16 %v294
      %v1302 = vunpack.c.l.b16 %v295
      %v1303 = vunpack.c.l.b16 %v296
      %v1304 = vunpack.c.l.b16 %v297
      %v1305 = vunpack.c.l.b16 %v298
      %v1306 = vunpack.c.l.b16 %v299
      %v1307 = vunpack.c.l.b16 %v300
      %v1308 = vunpack.c.l.b16 %v301
      %v1309 = vunpack.c.l.b16 %v302
      %v1310 = vunpack.c.l.b16 %v303
      %v1311 = vunpack.c.l.b16 %v304
      %v1312 = vunpack.c.l.b16 %v305
      %v1313 = vpack.c.b16 %v1298, %v1297
      %v1314 = vpack.c.b16 %v1300, %v1299
      %v1315 = vpack.c.b16 %v1302, %v1301
      %v1316 = vpack.c.b16 %v1304, %v1303
      %v1317 = vpack.c.b16 %v1306, %v1305
      %v1318 = vpack.c.b16 %v1308, %v1307
      %v1319 = vpack.c.b16 %v1310, %v1309
      %v1320 = vpack.c.b16 %v1312, %v1311
      %1329 = vmatprep.subr.bf16.mxu0 0
      %1330 = vmatpush1.bf16.msra.mxu0 %v1320
      %1331 = vmatprep.subr.bf16.mxu0 0
      %1332 = vmatpush1.bf16.msra.mxu0 %v1319
      %1333 = vmatprep.subr.bf16.mxu0 0
      %1334 = vmatpush1.bf16.msra.mxu0 %v1318
      %1335 = vmatprep.subr.bf16.mxu0 0
      %1336 = vmatpush1.bf16.msra.mxu0 %v1317
      %1337 = vmatprep.subr.bf16.mxu0 0
      %1338 = vmatpush1.bf16.msra.mxu0 %v1316
      %1339 = vmatprep.subr.bf16.mxu0 0
      %1340 = vmatpush1.bf16.msra.mxu0 %v1315
      %1341 = vmatprep.subr.bf16.mxu0 0
      %1342 = vmatpush1.bf16.msra.mxu0 %v1314
      %1343 = vmatprep.subr.bf16.mxu0 0
      %1344 = vmatpush1.bf16.msra.mxu0 %v1313
      %1345 = vmatprep.subr.bf16.mxu0 0
      %1346 = vmatpush2.bf16.msra.mxu0 0
      %1347 = vmatprep.subr.bf16.mxu0 0
      %1348 = vmatpush2.bf16.msra.mxu0 0
      %1349 = vmatprep.subr.bf16.mxu0 0
      %1350 = vmatpush2.bf16.msra.mxu0 0
      %1351 = vmatprep.subr.bf16.mxu0 0
      %1352 = vmatpush2.bf16.msra.mxu0 0
      %1353 = vmatprep.subr.bf16.mxu0 0
      %1354 = vmatpush2.bf16.msra.mxu0 0
      %1355 = vmatprep.subr.bf16.mxu0 0
      %1356 = vmatpush2.bf16.msra.mxu0 0
      %1357 = vmatprep.subr.bf16.mxu0 0
      %1358 = vmatpush2.bf16.msra.mxu0 0
      %1359 = vmatprep.subr.bf16.mxu0 0
      %1360 = vmatpush2.bf16.msra.mxu0 0
      %1361 = vmatprep.mubr.bf16.mxu0 0
      %1362 = vmatmul.mubr.bf16.gmra.mxu0 %v1265
      %v1363 = vpop.f32.mrf.mxu0
      %v1364 = vadd.f32 0.0, %v1363
      %v1365 = vpop.f32.mrf.mxu0
      %v1366 = vpop.f32.mrf.mxu0
      %v1367 = vadd.f32 0.0, %v1366
      %v1368 = vpop.f32.mrf.mxu0
      %1369 = vmatprep.mubr.bf16.mxu0 0
      %1370 = vmatmul.mubr.bf16.gmra.mxu0 %v1266
      %v1371 = vpop.f32.mrf.mxu0
      %v1372 = vadd.f32 0.0, %v1371
      %v1373 = vpop.f32.mrf.mxu0
      %v1374 = vpop.f32.mrf.mxu0
      %v1375 = vadd.f32 0.0, %v1374
      %v1376 = vpop.f32.mrf.mxu0
      %1377 = vmatprep.mubr.bf16.mxu0 0
      %1378 = vmatmul.mubr.bf16.gmra.mxu0 %v1267
      %v1379 = vpop.f32.mrf.mxu0
      %v1380 = vadd.f32 0.0, %v1379
      %v1381 = vpop.f32.mrf.mxu0
      %v1382 = vpop.f32.mrf.mxu0
      %v1383 = vadd.f32 0.0, %v1382
      %v1384 = vpop.f32.mrf.mxu0
      %1385 = vmatprep.mubr.bf16.mxu0 0
      %1386 = vmatmul.mubr.bf16.gmra.mxu0 %v1268
      %v1387 = vpop.f32.mrf.mxu0
      %v1388 = vadd.f32 0.0, %v1387
      %v1389 = vpop.f32.mrf.mxu0
      %v1390 = vpop.f32.mrf.mxu0
      %v1391 = vadd.f32 0.0, %v1390
      %v1392 = vpop.f32.mrf.mxu0
      %1393 = vmatprep.mubr.bf16.mxu0 0
      %1394 = vmatmul.mubr.bf16.gmra.mxu0 %v1269
      %v1395 = vpop.f32.mrf.mxu0
      %v1396 = vadd.f32 0.0, %v1395
      %v1397 = vpop.f32.mrf.mxu0
      %v1398 = vpop.f32.mrf.mxu0
      %v1399 = vadd.f32 0.0, %v1398
      %v1400 = vpop.f32.mrf.mxu0
      %1401 = vmatprep.mubr.bf16.mxu0 0
      %1402 = vmatmul.mubr.bf16.gmra.mxu0 %v1270
      %v1403 = vpop.f32.mrf.mxu0
      %v1404 = vadd.f32 0.0, %v1403
      %v1405 = vpop.f32.mrf.mxu0
      %v1406 = vpop.f32.mrf.mxu0
      %v1407 = vadd.f32 0.0, %v1406
      %v1408 = vpop.f32.mrf.mxu0
      %1409 = vmatprep.mubr.bf16.mxu0 0
      %1410 = vmatmul.mubr.bf16.gmra.mxu0 %v1271
      %v1411 = vpop.f32.mrf.mxu0
      %v1412 = vadd.f32 0.0, %v1411
      %v1413 = vpop.f32.mrf.mxu0
      %v1414 = vpop.f32.mrf.mxu0
      %v1415 = vadd.f32 0.0, %v1414
      %v1416 = vpop.f32.mrf.mxu0
      %1417 = vmatprep.mubr.bf16.mxu0 0
      %1418 = vmatmul.mubr.bf16.gmra.mxu0 %v1272
      %v1419 = vpop.f32.mrf.mxu0
      %v1420 = vadd.f32 0.0, %v1419
      %v1421 = vpop.f32.mrf.mxu0
      %v1422 = vpop.f32.mrf.mxu0
      %v1423 = vadd.f32 0.0, %v1422
      %v1424 = vpop.f32.mrf.mxu0
      %1425 = vmatprep.mubr.bf16.mxu0 0
      %1426 = vmatmul.mubr.bf16.gmra.mxu0 %v1273
      %v1427 = vpop.f32.mrf.mxu0
      %v1428 = vadd.f32 0.0, %v1427
      %v1429 = vpop.f32.mrf.mxu0
      %v1430 = vpop.f32.mrf.mxu0
      %v1431 = vadd.f32 0.0, %v1430
      %v1432 = vpop.f32.mrf.mxu0
      %1433 = vmatprep.mubr.bf16.mxu0 0
      %1434 = vmatmul.mubr.bf16.gmra.mxu0 %v1274
      %v1435 = vpop.f32.mrf.mxu0
      %v1436 = vadd.f32 0.0, %v1435
      %v1437 = vpop.f32.mrf.mxu0
      %v1438 = vpop.f32.mrf.mxu0
      %v1439 = vadd.f32 0.0, %v1438
      %v1440 = vpop.f32.mrf.mxu0
      %1441 = vmatprep.mubr.bf16.mxu0 0
      %1442 = vmatmul.mubr.bf16.gmra.mxu0 %v1275
      %v1443 = vpop.f32.mrf.mxu0
      %v1444 = vadd.f32 0.0, %v1443
      %v1445 = vpop.f32.mrf.mxu0
      %v1446 = vpop.f32.mrf.mxu0
      %v1447 = vadd.f32 0.0, %v1446
      %v1448 = vpop.f32.mrf.mxu0
      %1449 = vmatprep.mubr.bf16.mxu0 0
      %1450 = vmatmul.mubr.bf16.gmra.mxu0 %v1276
      %v1451 = vpop.f32.mrf.mxu0
      %v1452 = vadd.f32 0.0, %v1451
      %v1453 = vpop.f32.mrf.mxu0
      %v1454 = vpop.f32.mrf.mxu0
      %v1455 = vadd.f32 0.0, %v1454
      %v1456 = vpop.f32.mrf.mxu0
      %1457 = vmatprep.mubr.bf16.mxu0 0
      %1458 = vmatmul.mubr.bf16.gmra.mxu0 %v1277
      %v1459 = vpop.f32.mrf.mxu0
      %v1460 = vadd.f32 0.0, %v1459
      %v1461 = vpop.f32.mrf.mxu0
      %v1462 = vpop.f32.mrf.mxu0
      %v1463 = vadd.f32 0.0, %v1462
      %v1464 = vpop.f32.mrf.mxu0
      %1465 = vmatprep.mubr.bf16.mxu0 0
      %1466 = vmatmul.mubr.bf16.gmra.mxu0 %v1278
      %v1467 = vpop.f32.mrf.mxu0
      %v1468 = vadd.f32 0.0, %v1467
      %v1469 = vpop.f32.mrf.mxu0
      %v1470 = vpop.f32.mrf.mxu0
      %v1471 = vadd.f32 0.0, %v1470
      %v1472 = vpop.f32.mrf.mxu0
      %1473 = vmatprep.mubr.bf16.mxu0 0
      %1474 = vmatmul.mubr.bf16.gmra.mxu0 %v1279
      %v1475 = vpop.f32.mrf.mxu0
      %v1476 = vadd.f32 0.0, %v1475
      %v1477 = vpop.f32.mrf.mxu0
      %v1478 = vpop.f32.mrf.mxu0
      %v1479 = vadd.f32 0.0, %v1478
      %v1480 = vpop.f32.mrf.mxu0
      %1481 = vmatprep.mubr.bf16.mxu0 0
      %1482 = vmatmul.mubr.bf16.gmra.mxu0 %v1280
      %v1483 = vpop.f32.mrf.mxu0
      %v1484 = vadd.f32 0.0, %v1483
      %v1485 = vpop.f32.mrf.mxu0
      %v1486 = vpop.f32.mrf.mxu0
      %v1487 = vadd.f32 0.0, %v1486
      %v1488 = vpop.f32.mrf.mxu0
      %1489 = vdwg.mxu0
      %v1490 = vmax.f32 %v1364, 0.0
      %v1491 = vmax.f32 %v1367, 0.0
      %v1492 = vmax.f32 %v1372, 0.0
      %v1493 = vmax.f32 %v1375, 0.0
      %v1494 = vmax.f32 %v1380, 0.0
      %v1495 = vmax.f32 %v1383, 0.0
      %v1496 = vmax.f32 %v1388, 0.0
      %v1497 = vmax.f32 %v1391, 0.0
      %v1498 = vmax.f32 %v1396, 0.0
      %v1499 = vmax.f32 %v1399, 0.0
      %v1500 = vmax.f32 %v1404, 0.0
      %v1501 = vmax.f32 %v1407, 0.0
      %v1502 = vmax.f32 %v1412, 0.0
      %v1503 = vmax.f32 %v1415, 0.0
      %v1504 = vmax.f32 %v1420, 0.0
      %v1505 = vmax.f32 %v1423, 0.0
      %v1506 = vmax.f32 %v1428, 0.0
      %v1507 = vmax.f32 %v1431, 0.0
      %v1508 = vmax.f32 %v1436, 0.0
      %v1509 = vmax.f32 %v1439, 0.0
      %v1510 = vmax.f32 %v1444, 0.0
      %v1511 = vmax.f32 %v1447, 0.0
      %v1512 = vmax.f32 %v1452, 0.0
      %v1513 = vmax.f32 %v1455, 0.0
      %v1514 = vmax.f32 %v1460, 0.0
      %v1515 = vmax.f32 %v1463, 0.0
      %v1516 = vmax.f32 %v1468, 0.0
      %v1517 = vmax.f32 %v1471, 0.0
      %v1518 = vmax.f32 %v1476, 0.0
      %v1519 = vmax.f32 %v1479, 0.0
      %v1520 = vmax.f32 %v1484, 0.0
      %v1521 = vmax.f32 %v1487, 0.0
      %v1522 = vadd.f32 %v1490, 0.005
      %v1523 = vadd.f32 %v1491, 0.005
      %v1524 = vadd.f32 %v1492, 0.005
      %v1525 = vadd.f32 %v1493, 0.005
      %v1526 = vadd.f32 %v1494, 0.005
      %v1527 = vadd.f32 %v1495, 0.005
      %v1528 = vadd.f32 %v1496, 0.005
      %v1529 = vadd.f32 %v1497, 0.005
      %v1530 = vadd.f32 %v1498, 0.005
      %v1531 = vadd.f32 %v1499, 0.005
      %v1532 = vadd.f32 %v1500, 0.005
      %v1533 = vadd.f32 %v1501, 0.005
      %v1534 = vadd.f32 %v1502, 0.005
      %v1535 = vadd.f32 %v1503, 0.005
      %v1536 = vadd.f32 %v1504, 0.005
      %v1537 = vadd.f32 %v1505, 0.005
      %v1538 = vadd.f32 %v1506, 0.005
      %v1539 = vadd.f32 %v1507, 0.005
      %v1540 = vadd.f32 %v1508, 0.005
      %v1541 = vadd.f32 %v1509, 0.005
      %v1542 = vadd.f32 %v1510, 0.005
      %v1543 = vadd.f32 %v1511, 0.005
      %v1544 = vadd.f32 %v1512, 0.005
      %v1545 = vadd.f32 %v1513, 0.005
      %v1546 = vadd.f32 %v1514, 0.005
      %v1547 = vadd.f32 %v1515, 0.005
      %v1548 = vadd.f32 %v1516, 0.005
      %v1549 = vadd.f32 %v1517, 0.005
      %v1550 = vadd.f32 %v1518, 0.005
      %v1551 = vadd.f32 %v1519, 0.005
      %v1552 = vadd.f32 %v1520, 0.005
      %v1553 = vadd.f32 %v1521, 0.005
      %1554 = vst [vmem:[%s267] sm:$0xff] %v1522
      %1555 = vst [vmem:[%s267 + $0x8] sm:$0xff] %v1523
      %1556 = vst [vmem:[%s267 + $0x10] sm:$0xff] %v1524
      %1557 = vst [vmem:[%s267 + $0x18] sm:$0xff] %v1525
      %1558 = vst [vmem:[%s267 + $0x20] sm:$0xff] %v1526
      %1559 = vst [vmem:[%s267 + $0x28] sm:$0xff] %v1527
      %1560 = vst [vmem:[%s267 + $0x30] sm:$0xff] %v1528
      %1561 = vst [vmem:[%s267 + $0x38] sm:$0xff] %v1529
      %1562 = vst [vmem:[%s267 + $0x40] sm:$0xff] %v1530
      %1563 = vst [vmem:[%s267 + $0x48] sm:$0xff] %v1531
      %1564 = vst [vmem:[%s267 + $0x50] sm:$0xff] %v1532
      %1565 = vst [vmem:[%s267 + $0x58] sm:$0xff] %v1533
      %1566 = vst [vmem:[%s267 + $0x60] sm:$0xff] %v1534
      %1567 = vst [vmem:[%s267 + $0x68] sm:$0xff] %v1535
      %1568 = vst [vmem:[%s267 + $0x70] sm:$0xff] %v1536
      %1569 = vst [vmem:[%s267 + $0x78] sm:$0xff] %v1537
      %1570 = vst [vmem:[%s267 + $0x80] sm:$0xff] %v1538
      %1571 = vst [vmem:[%s267 + $0x88] sm:$0xff] %v1539
      %1572 = vst [vmem:[%s267 + $0x90] sm:$0xff] %v1540
      %1573 = vst [vmem:[%s267 + $0x98] sm:$0xff] %v1541
      %1574 = vst [vmem:[%s267 + $0xa0] sm:$0xff] %v1542
      %1575 = vst [vmem:[%s267 + $0xa8] sm:$0xff] %v1543
      %1576 = vst [vmem:[%s267 + $0xb0] sm:$0xff] %v1544
      %1577 = vst [vmem:[%s267 + $0xb8] sm:$0xff] %v1545
      %1578 = vst [vmem:[%s267 + $0xc0] sm:$0xff] %v1546
      %1579 = vst [vmem:[%s267 + $0xc8] sm:$0xff] %v1547
      %1580 = vst [vmem:[%s267 + $0xd0] sm:$0xff] %v1548
      %1581 = vst [vmem:[%s267 + $0xd8] sm:$0xff] %v1549
      %1582 = vst [vmem:[%s267 + $0xe0] sm:$0xff] %v1550
      %1583 = vst [vmem:[%s267 + $0xe8] sm:$0xff] %v1551
      %1584 = vst [vmem:[%s267 + $0xf0] sm:$0xff] %v1552
      %1585 = vst [vmem:[%s267 + $0xf8] sm:$0xff] %v1553
      %v1586 = vpack.c.bf16 %v1523, %v1522
      %v1587 = vpack.c.bf16 %v1525, %v1524
      %v1588 = vpack.c.bf16 %v1527, %v1526
      %v1589 = vpack.c.bf16 %v1529, %v1528
      %v1590 = vpack.c.bf16 %v1531, %v1530
      %v1591 = vpack.c.bf16 %v1533, %v1532
      %v1592 = vpack.c.bf16 %v1535, %v1534
      %v1593 = vpack.c.bf16 %v1537, %v1536
      %v1594 = vpack.c.bf16 %v1539, %v1538
      %v1595 = vpack.c.bf16 %v1541, %v1540
      %v1596 = vpack.c.bf16 %v1543, %v1542
      %v1597 = vpack.c.bf16 %v1545, %v1544
      %v1598 = vpack.c.bf16 %v1547, %v1546
      %v1599 = vpack.c.bf16 %v1549, %v1548
      %v1600 = vpack.c.bf16 %v1551, %v1550
      %v1601 = vpack.c.bf16 %v1553, %v1552
      %v1618 = vunpack.c.l.b16 %v306
      %v1619 = vunpack.c.l.b16 %v307
      %v1620 = vunpack.c.l.b16 %v308
      %v1621 = vunpack.c.l.b16 %v309
      %v1622 = vunpack.c.l.b16 %v310
      %v1623 = vunpack.c.l.b16 %v311
      %v1624 = vunpack.c.l.b16 %v312
      %v1625 = vunpack.c.l.b16 %v313
      %v1626 = vunpack.c.l.b16 %v314
      %v1627 = vunpack.c.l.b16 %v315
      %v1628 = vunpack.c.l.b16 %v316
      %v1629 = vunpack.c.l.b16 %v317
      %v1630 = vunpack.c.l.b16 %v318
      %v1631 = vunpack.c.l.b16 %v319
      %v1632 = vunpack.c.l.b16 %v320
      %v1633 = vunpack.c.l.b16 %v321
      %v1634 = vpack.c.b16 %v1619, %v1618
      %v1635 = vpack.c.b16 %v1621, %v1620
      %v1636 = vpack.c.b16 %v1623, %v1622
      %v1637 = vpack.c.b16 %v1625, %v1624
      %v1638 = vpack.c.b16 %v1627, %v1626
      %v1639 = vpack.c.b16 %v1629, %v1628
      %v1640 = vpack.c.b16 %v1631, %v1630
      %v1641 = vpack.c.b16 %v1633, %v1632
      %1650 = vmatprep.subr.bf16.mxu0 0
      %1651 = vmatpush1.bf16.msra.mxu0 %v1641
      %1652 = vmatprep.subr.bf16.mxu0 0
      %1653 = vmatpush1.bf16.msra.mxu0 %v1640
      %1654 = vmatprep.subr.bf16.mxu0 0
      %1655 = vmatpush1.bf16.msra.mxu0 %v1639
      %1656 = vmatprep.subr.bf16.mxu0 0
      %1657 = vmatpush1.bf16.msra.mxu0 %v1638
      %1658 = vmatprep.subr.bf16.mxu0 0
      %1659 = vmatpush1.bf16.msra.mxu0 %v1637
      %1660 = vmatprep.subr.bf16.mxu0 0
      %1661 = vmatpush1.bf16.msra.mxu0 %v1636
      %1662 = vmatprep.subr.bf16.mxu0 0
      %1663 = vmatpush1.bf16.msra.mxu0 %v1635
      %1664 = vmatprep.subr.bf16.mxu0 0
      %1665 = vmatpush1.bf16.msra.mxu0 %v1634
      %1666 = vmatprep.subr.bf16.mxu0 0
      %1667 = vmatpush2.bf16.msra.mxu0 0
      %1668 = vmatprep.subr.bf16.mxu0 0
      %1669 = vmatpush2.bf16.msra.mxu0 0
      %1670 = vmatprep.subr.bf16.mxu0 0
      %1671 = vmatpush2.bf16.msra.mxu0 0
      %1672 = vmatprep.subr.bf16.mxu0 0
      %1673 = vmatpush2.bf16.msra.mxu0 0
      %1674 = vmatprep.subr.bf16.mxu0 0
      %1675 = vmatpush2.bf16.msra.mxu0 0
      %1676 = vmatprep.subr.bf16.mxu0 0
      %1677 = vmatpush2.bf16.msra.mxu0 0
      %1678 = vmatprep.subr.bf16.mxu0 0
      %1679 = vmatpush2.bf16.msra.mxu0 0
      %1680 = vmatprep.subr.bf16.mxu0 0
      %1681 = vmatpush2.bf16.msra.mxu0 0
      %1682 = vmatprep.mubr.bf16.mxu0 0
      %1683 = vmatmul.mubr.bf16.gmra.mxu0 %v1586
      %v1684 = vpop.f32.mrf.mxu0
      %v1685 = vadd.f32 0.0, %v1684
      %v1686 = vpop.f32.mrf.mxu0
      %v1687 = vpop.f32.mrf.mxu0
      %v1688 = vadd.f32 0.0, %v1687
      %v1689 = vpop.f32.mrf.mxu0
      %1690 = vmatprep.mubr.bf16.mxu0 0
      %1691 = vmatmul.mubr.bf16.gmra.mxu0 %v1587
      %v1692 = vpop.f32.mrf.mxu0
      %v1693 = vadd.f32 0.0, %v1692
      %v1694 = vpop.f32.mrf.mxu0
      %v1695 = vpop.f32.mrf.mxu0
      %v1696 = vadd.f32 0.0, %v1695
      %v1697 = vpop.f32.mrf.mxu0
      %1698 = vmatprep.mubr.bf16.mxu0 0
      %1699 = vmatmul.mubr.bf16.gmra.mxu0 %v1588
      %v1700 = vpop.f32.mrf.mxu0
      %v1701 = vadd.f32 0.0, %v1700
      %v1702 = vpop.f32.mrf.mxu0
      %v1703 = vpop.f32.mrf.mxu0
      %v1704 = vadd.f32 0.0, %v1703
      %v1705 = vpop.f32.mrf.mxu0
      %1706 = vmatprep.mubr.bf16.mxu0 0
      %1707 = vmatmul.mubr.bf16.gmra.mxu0 %v1589
      %v1708 = vpop.f32.mrf.mxu0
      %v1709 = vadd.f32 0.0, %v1708
      %v1710 = vpop.f32.mrf.mxu0
      %v1711 = vpop.f32.mrf.mxu0
      %v1712 = vadd.f32 0.0, %v1711
      %v1713 = vpop.f32.mrf.mxu0
      %1714 = vmatprep.mubr.bf16.mxu0 0
      %1715 = vmatmul.mubr.bf16.gmra.mxu0 %v1590
      %v1716 = vpop.f32.mrf.mxu0
      %v1717 = vadd.f32 0.0, %v1716
      %v1718 = vpop.f32.mrf.mxu0
      %v1719 = vpop.f32.mrf.mxu0
      %v1720 = vadd.f32 0.0, %v1719
      %v1721 = vpop.f32.mrf.mxu0
      %1722 = vmatprep.mubr.bf16.mxu0 0
      %1723 = vmatmul.mubr.bf16.gmra.mxu0 %v1591
      %v1724 = vpop.f32.mrf.mxu0
      %v1725 = vadd.f32 0.0, %v1724
      %v1726 = vpop.f32.mrf.mxu0
      %v1727 = vpop.f32.mrf.mxu0
      %v1728 = vadd.f32 0.0, %v1727
      %v1729 = vpop.f32.mrf.mxu0
      %1730 = vmatprep.mubr.bf16.mxu0 0
      %1731 = vmatmul.mubr.bf16.gmra.mxu0 %v1592
      %v1732 = vpop.f32.mrf.mxu0
      %v1733 = vadd.f32 0.0, %v1732
      %v1734 = vpop.f32.mrf.mxu0
      %v1735 = vpop.f32.mrf.mxu0
      %v1736 = vadd.f32 0.0, %v1735
      %v1737 = vpop.f32.mrf.mxu0
      %1738 = vmatprep.mubr.bf16.mxu0 0
      %1739 = vmatmul.mubr.bf16.gmra.mxu0 %v1593
      %v1740 = vpop.f32.mrf.mxu0
      %v1741 = vadd.f32 0.0, %v1740
      %v1742 = vpop.f32.mrf.mxu0
      %v1743 = vpop.f32.mrf.mxu0
      %v1744 = vadd.f32 0.0, %v1743
      %v1745 = vpop.f32.mrf.mxu0
      %1746 = vmatprep.mubr.bf16.mxu0 0
      %1747 = vmatmul.mubr.bf16.gmra.mxu0 %v1594
      %v1748 = vpop.f32.mrf.mxu0
      %v1749 = vadd.f32 0.0, %v1748
      %v1750 = vpop.f32.mrf.mxu0
      %v1751 = vpop.f32.mrf.mxu0
      %v1752 = vadd.f32 0.0, %v1751
      %v1753 = vpop.f32.mrf.mxu0
      %1754 = vmatprep.mubr.bf16.mxu0 0
      %1755 = vmatmul.mubr.bf16.gmra.mxu0 %v1595
      %v1756 = vpop.f32.mrf.mxu0
      %v1757 = vadd.f32 0.0, %v1756
      %v1758 = vpop.f32.mrf.mxu0
      %v1759 = vpop.f32.mrf.mxu0
      %v1760 = vadd.f32 0.0, %v1759
      %v1761 = vpop.f32.mrf.mxu0
      %1762 = vmatprep.mubr.bf16.mxu0 0
      %1763 = vmatmul.mubr.bf16.gmra.mxu0 %v1596
      %v1764 = vpop.f32.mrf.mxu0
      %v1765 = vadd.f32 0.0, %v1764
      %v1766 = vpop.f32.mrf.mxu0
      %v1767 = vpop.f32.mrf.mxu0
      %v1768 = vadd.f32 0.0, %v1767
      %v1769 = vpop.f32.mrf.mxu0
      %1770 = vmatprep.mubr.bf16.mxu0 0
      %1771 = vmatmul.mubr.bf16.gmra.mxu0 %v1597
      %v1772 = vpop.f32.mrf.mxu0
      %v1773 = vadd.f32 0.0, %v1772
      %v1774 = vpop.f32.mrf.mxu0
      %v1775 = vpop.f32.mrf.mxu0
      %v1776 = vadd.f32 0.0, %v1775
      %v1777 = vpop.f32.mrf.mxu0
      %1778 = vmatprep.mubr.bf16.mxu0 0
      %1779 = vmatmul.mubr.bf16.gmra.mxu0 %v1598
      %v1780 = vpop.f32.mrf.mxu0
      %v1781 = vadd.f32 0.0, %v1780
      %v1782 = vpop.f32.mrf.mxu0
      %v1783 = vpop.f32.mrf.mxu0
      %v1784 = vadd.f32 0.0, %v1783
      %v1785 = vpop.f32.mrf.mxu0
      %1786 = vmatprep.mubr.bf16.mxu0 0
      %1787 = vmatmul.mubr.bf16.gmra.mxu0 %v1599
      %v1788 = vpop.f32.mrf.mxu0
      %v1789 = vadd.f32 0.0, %v1788
      %v1790 = vpop.f32.mrf.mxu0
      %v1791 = vpop.f32.mrf.mxu0
      %v1792 = vadd.f32 0.0, %v1791
      %v1793 = vpop.f32.mrf.mxu0
      %1794 = vmatprep.mubr.bf16.mxu0 0
      %1795 = vmatmul.mubr.bf16.gmra.mxu0 %v1600
      %v1796 = vpop.f32.mrf.mxu0
      %v1797 = vadd.f32 0.0, %v1796
      %v1798 = vpop.f32.mrf.mxu0
      %v1799 = vpop.f32.mrf.mxu0
      %v1800 = vadd.f32 0.0, %v1799
      %v1801 = vpop.f32.mrf.mxu0
      %1802 = vmatprep.mubr.bf16.mxu0 0
      %1803 = vmatmul.mubr.bf16.gmra.mxu0 %v1601
      %v1804 = vpop.f32.mrf.mxu0
      %v1805 = vadd.f32 0.0, %v1804
      %v1806 = vpop.f32.mrf.mxu0
      %v1807 = vpop.f32.mrf.mxu0
      %v1808 = vadd.f32 0.0, %v1807
      %v1809 = vpop.f32.mrf.mxu0
      %1810 = vdwg.mxu0
      %1811 = vst [vmem:[%s261] sm:$0xff] %v1685
      %1812 = vst [vmem:[%s261 + $0x8] sm:$0xff] %v1688
      %1813 = vst [vmem:[%s261 + $0x10] sm:$0xff] %v1693
      %1814 = vst [vmem:[%s261 + $0x18] sm:$0xff] %v1696
      %1815 = vst [vmem:[%s261 + $0x20] sm:$0xff] %v1701
      %1816 = vst [vmem:[%s261 + $0x28] sm:$0xff] %v1704
      %1817 = vst [vmem:[%s261 + $0x30] sm:$0xff] %v1709
      %1818 = vst [vmem:[%s261 + $0x38] sm:$0xff] %v1712
      %1819 = vst [vmem:[%s261 + $0x40] sm:$0xff] %v1717
      %1820 = vst [vmem:[%s261 + $0x48] sm:$0xff] %v1720
      %1821 = vst [vmem:[%s261 + $0x50] sm:$0xff] %v1725
      %1822 = vst [vmem:[%s261 + $0x58] sm:$0xff] %v1728
      %1823 = vst [vmem:[%s261 + $0x60] sm:$0xff] %v1733
      %1824 = vst [vmem:[%s261 + $0x68] sm:$0xff] %v1736
      %1825 = vst [vmem:[%s261 + $0x70] sm:$0xff] %v1741
      %1826 = vst [vmem:[%s261 + $0x78] sm:$0xff] %v1744
      %1827 = vst [vmem:[%s261 + $0x80] sm:$0xff] %v1749
      %1828 = vst [vmem:[%s261 + $0x88] sm:$0xff] %v1752
      %1829 = vst [vmem:[%s261 + $0x90] sm:$0xff] %v1757
      %1830 = vst [vmem:[%s261 + $0x98] sm:$0xff] %v1760
      %1831 = vst [vmem:[%s261 + $0xa0] sm:$0xff] %v1765
      %1832 = vst [vmem:[%s261 + $0xa8] sm:$0xff] %v1768
      %1833 = vst [vmem:[%s261 + $0xb0] sm:$0xff] %v1773
      %1834 = vst [vmem:[%s261 + $0xb8] sm:$0xff] %v1776
      %1835 = vst [vmem:[%s261 + $0xc0] sm:$0xff] %v1781
      %1836 = vst [vmem:[%s261 + $0xc8] sm:$0xff] %v1784
      %1837 = vst [vmem:[%s261 + $0xd0] sm:$0xff] %v1789
      %1838 = vst [vmem:[%s261 + $0xd8] sm:$0xff] %v1792
      %1839 = vst [vmem:[%s261 + $0xe0] sm:$0xff] %v1797
      %1840 = vst [vmem:[%s261 + $0xe8] sm:$0xff] %v1800
      %1841 = vst [vmem:[%s261 + $0xf0] sm:$0xff] %v1805
      %1842 = vst [vmem:[%s261 + $0xf8] sm:$0xff] %v1808
      %v1843 = vld [vmem:[%s255 + $0x100] sm:$0xff]
      %v1844 = vld [vmem:[%s255 + $0x108] sm:$0xff]
      %v1845 = vld [vmem:[%s255 + $0x110] sm:$0xff]
      %v1846 = vld [vmem:[%s255 + $0x118] sm:$0xff]
      %v1847 = vld [vmem:[%s255 + $0x120] sm:$0xff]
      %v1848 = vld [vmem:[%s255 + $0x128] sm:$0xff]
      %v1849 = vld [vmem:[%s255 + $0x130] sm:$0xff]
      %v1850 = vld [vmem:[%s255 + $0x138] sm:$0xff]
      %v1851 = vld [vmem:[%s255 + $0x140] sm:$0xff]
      %v1852 = vld [vmem:[%s255 + $0x148] sm:$0xff]
      %v1853 = vld [vmem:[%s255 + $0x150] sm:$0xff]
      %v1854 = vld [vmem:[%s255 + $0x158] sm:$0xff]
      %v1855 = vld [vmem:[%s255 + $0x160] sm:$0xff]
      %v1856 = vld [vmem:[%s255 + $0x168] sm:$0xff]
      %v1857 = vld [vmem:[%s255 + $0x170] sm:$0xff]
      %v1858 = vld [vmem:[%s255 + $0x178] sm:$0xff]
      %v1859 = vld [vmem:[%s255 + $0x180] sm:$0xff]
      %v1860 = vld [vmem:[%s255 + $0x188] sm:$0xff]
      %v1861 = vld [vmem:[%s255 + $0x190] sm:$0xff]
      %v1862 = vld [vmem:[%s255 + $0x198] sm:$0xff]
      %v1863 = vld [vmem:[%s255 + $0x1a0] sm:$0xff]
      %v1864 = vld [vmem:[%s255 + $0x1a8] sm:$0xff]
      %v1865 = vld [vmem:[%s255 + $0x1b0] sm:$0xff]
      %v1866 = vld [vmem:[%s255 + $0x1b8] sm:$0xff]
      %v1867 = vld [vmem:[%s255 + $0x1c0] sm:$0xff]
      %v1868 = vld [vmem:[%s255 + $0x1c8] sm:$0xff]
      %v1869 = vld [vmem:[%s255 + $0x1d0] sm:$0xff]
      %v1870 = vld [vmem:[%s255 + $0x1d8] sm:$0xff]
      %v1871 = vld [vmem:[%s255 + $0x1e0] sm:$0xff]
      %v1872 = vld [vmem:[%s255 + $0x1e8] sm:$0xff]
      %v1873 = vld [vmem:[%s255 + $0x1f0] sm:$0xff]
      %v1874 = vld [vmem:[%s255 + $0x1f8] sm:$0xff]
      %v1875 = vmul.f32 %v1843, 0.025
      %v1876 = vmul.f32 %v1844, 0.025
      %v1877 = vmul.f32 %v1845, 0.025
      %v1878 = vmul.f32 %v1846, 0.025
      %v1879 = vmul.f32 %v1847, 0.025
      %v1880 = vmul.f32 %v1848, 0.025
      %v1881 = vmul.f32 %v1849, 0.025
      %v1882 = vmul.f32 %v1850, 0.025
      %v1883 = vmul.f32 %v1851, 0.025
      %v1884 = vmul.f32 %v1852, 0.025
      %v1885 = vmul.f32 %v1853, 0.025
      %v1886 = vmul.f32 %v1854, 0.025
      %v1887 = vmul.f32 %v1855, 0.025
      %v1888 = vmul.f32 %v1856, 0.025
      %v1889 = vmul.f32 %v1857, 0.025
      %v1890 = vmul.f32 %v1858, 0.025
      %v1891 = vmul.f32 %v1859, 0.025
      %v1892 = vmul.f32 %v1860, 0.025
      %v1893 = vmul.f32 %v1861, 0.025
      %v1894 = vmul.f32 %v1862, 0.025
      %v1895 = vmul.f32 %v1863, 0.025
      %v1896 = vmul.f32 %v1864, 0.025
      %v1897 = vmul.f32 %v1865, 0.025
      %v1898 = vmul.f32 %v1866, 0.025
      %v1899 = vmul.f32 %v1867, 0.025
      %v1900 = vmul.f32 %v1868, 0.025
      %v1901 = vmul.f32 %v1869, 0.025
      %v1902 = vmul.f32 %v1870, 0.025
      %v1903 = vmul.f32 %v1871, 0.025
      %v1904 = vmul.f32 %v1872, 0.025
      %v1905 = vmul.f32 %v1873, 0.025
      %v1906 = vmul.f32 %v1874, 0.025
      %v1907 = vmul.f32 %v1875, %v1875
      %v1908 = vmul.f32 %v1876, %v1876
      %v1909 = vmul.f32 %v1877, %v1877
      %v1910 = vmul.f32 %v1878, %v1878
      %v1911 = vmul.f32 %v1879, %v1879
      %v1912 = vmul.f32 %v1880, %v1880
      %v1913 = vmul.f32 %v1881, %v1881
      %v1914 = vmul.f32 %v1882, %v1882
      %v1915 = vmul.f32 %v1883, %v1883
      %v1916 = vmul.f32 %v1884, %v1884
      %v1917 = vmul.f32 %v1885, %v1885
      %v1918 = vmul.f32 %v1886, %v1886
      %v1919 = vmul.f32 %v1887, %v1887
      %v1920 = vmul.f32 %v1888, %v1888
      %v1921 = vmul.f32 %v1889, %v1889
      %v1922 = vmul.f32 %v1890, %v1890
      %v1923 = vmul.f32 %v1891, %v1891
      %v1924 = vmul.f32 %v1892, %v1892
      %v1925 = vmul.f32 %v1893, %v1893
      %v1926 = vmul.f32 %v1894, %v1894
      %v1927 = vmul.f32 %v1895, %v1895
      %v1928 = vmul.f32 %v1896, %v1896
      %v1929 = vmul.f32 %v1897, %v1897
      %v1930 = vmul.f32 %v1898, %v1898
      %v1931 = vmul.f32 %v1899, %v1899
      %v1932 = vmul.f32 %v1900, %v1900
      %v1933 = vmul.f32 %v1901, %v1901
      %v1934 = vmul.f32 %v1902, %v1902
      %v1935 = vmul.f32 %v1903, %v1903
      %v1936 = vmul.f32 %v1904, %v1904
      %v1937 = vmul.f32 %v1905, %v1905
      %v1938 = vmul.f32 %v1906, %v1906
      %v1939 = vsel %vm418, %v1907, 0.0
      %1940 = vadd.xlane.f32.xlu0 %v1939
      %v1941 = vpop.xlane.xlu0 %1940
      %v1942 = vsel %vm418, %v1908, 0.0
      %1943 = vadd.xlane.f32.xlu0 %v1942
      %v1944 = vpop.xlane.xlu0 %1943
      %v1945 = vsel %vm418, %v1909, 0.0
      %1946 = vadd.xlane.f32.xlu0 %v1945
      %v1947 = vpop.xlane.xlu0 %1946
      %v1948 = vsel %vm418, %v1910, 0.0
      %1949 = vadd.xlane.f32.xlu0 %v1948
      %v1950 = vpop.xlane.xlu0 %1949
      %v1951 = vsel %vm418, %v1911, 0.0
      %1952 = vadd.xlane.f32.xlu0 %v1951
      %v1953 = vpop.xlane.xlu0 %1952
      %v1954 = vsel %vm418, %v1912, 0.0
      %1955 = vadd.xlane.f32.xlu0 %v1954
      %v1956 = vpop.xlane.xlu0 %1955
      %v1957 = vsel %vm418, %v1913, 0.0
      %1958 = vadd.xlane.f32.xlu0 %v1957
      %v1959 = vpop.xlane.xlu0 %1958
      %v1960 = vsel %vm418, %v1914, 0.0
      %1961 = vadd.xlane.f32.xlu0 %v1960
      %v1962 = vpop.xlane.xlu0 %1961
      %v1963 = vsel %vm418, %v1915, 0.0
      %1964 = vadd.xlane.f32.xlu0 %v1963
      %v1965 = vpop.xlane.xlu0 %1964
      %v1966 = vsel %vm418, %v1916, 0.0
      %1967 = vadd.xlane.f32.xlu0 %v1966
      %v1968 = vpop.xlane.xlu0 %1967
      %v1969 = vsel %vm418, %v1917, 0.0
      %1970 = vadd.xlane.f32.xlu0 %v1969
      %v1971 = vpop.xlane.xlu0 %1970
      %v1972 = vsel %vm418, %v1918, 0.0
      %1973 = vadd.xlane.f32.xlu0 %v1972
      %v1974 = vpop.xlane.xlu0 %1973
      %v1975 = vsel %vm418, %v1919, 0.0
      %1976 = vadd.xlane.f32.xlu0 %v1975
      %v1977 = vpop.xlane.xlu0 %1976
      %v1978 = vsel %vm418, %v1920, 0.0
      %1979 = vadd.xlane.f32.xlu0 %v1978
      %v1980 = vpop.xlane.xlu0 %1979
      %v1981 = vsel %vm418, %v1921, 0.0
      %1982 = vadd.xlane.f32.xlu0 %v1981
      %v1983 = vpop.xlane.xlu0 %1982
      %v1984 = vsel %vm418, %v1922, 0.0
      %1985 = vadd.xlane.f32.xlu0 %v1984
      %v1986 = vpop.xlane.xlu0 %1985
      %v1987 = vsel %vm418, %v1923, 0.0
      %1988 = vadd.xlane.f32.xlu0 %v1987
      %v1989 = vpop.xlane.xlu0 %1988
      %v1990 = vsel %vm418, %v1924, 0.0
      %1991 = vadd.xlane.f32.xlu0 %v1990
      %v1992 = vpop.xlane.xlu0 %1991
      %v1993 = vsel %vm418, %v1925, 0.0
      %1994 = vadd.xlane.f32.xlu0 %v1993
      %v1995 = vpop.xlane.xlu0 %1994
      %v1996 = vsel %vm418, %v1926, 0.0
      %1997 = vadd.xlane.f32.xlu0 %v1996
      %v1998 = vpop.xlane.xlu0 %1997
      %v1999 = vsel %vm418, %v1927, 0.0
      %2000 = vadd.xlane.f32.xlu0 %v1999
      %v2001 = vpop.xlane.xlu0 %2000
      %v2002 = vsel %vm418, %v1928, 0.0
      %2003 = vadd.xlane.f32.xlu0 %v2002
      %v2004 = vpop.xlane.xlu0 %2003
      %v2005 = vsel %vm418, %v1929, 0.0
      %2006 = vadd.xlane.f32.xlu0 %v2005
      %v2007 = vpop.xlane.xlu0 %2006
      %v2008 = vsel %vm418, %v1930, 0.0
      %2009 = vadd.xlane.f32.xlu0 %v2008
      %v2010 = vpop.xlane.xlu0 %2009
      %v2011 = vsel %vm418, %v1931, 0.0
      %2012 = vadd.xlane.f32.xlu0 %v2011
      %v2013 = vpop.xlane.xlu0 %2012
      %v2014 = vsel %vm418, %v1932, 0.0
      %2015 = vadd.xlane.f32.xlu0 %v2014
      %v2016 = vpop.xlane.xlu0 %2015
      %v2017 = vsel %vm418, %v1933, 0.0
      %2018 = vadd.xlane.f32.xlu0 %v2017
      %v2019 = vpop.xlane.xlu0 %2018
      %v2020 = vsel %vm418, %v1934, 0.0
      %2021 = vadd.xlane.f32.xlu0 %v2020
      %v2022 = vpop.xlane.xlu0 %2021
      %v2023 = vsel %vm418, %v1935, 0.0
      %2024 = vadd.xlane.f32.xlu0 %v2023
      %v2025 = vpop.xlane.xlu0 %2024
      %v2026 = vsel %vm418, %v1936, 0.0
      %2027 = vadd.xlane.f32.xlu0 %v2026
      %v2028 = vpop.xlane.xlu0 %2027
      %v2029 = vsel %vm418, %v1937, 0.0
      %2030 = vadd.xlane.f32.xlu0 %v2029
      %v2031 = vpop.xlane.xlu0 %2030
      %v2032 = vsel %vm418, %v1938, 0.0
      %2033 = vadd.xlane.f32.xlu0 %v2032
      %v2034 = vpop.xlane.xlu0 %2033
      %vm2035 = vcmp.gt.f32.partialorder %v1941, 0.0
      %vm2036 = vcmp.gt.f32.partialorder %v1944, 0.0
      %vm2037 = vcmp.gt.f32.partialorder %v1947, 0.0
      %vm2038 = vcmp.gt.f32.partialorder %v1950, 0.0
      %vm2039 = vcmp.gt.f32.partialorder %v1953, 0.0
      %vm2040 = vcmp.gt.f32.partialorder %v1956, 0.0
      %vm2041 = vcmp.gt.f32.partialorder %v1959, 0.0
      %vm2042 = vcmp.gt.f32.partialorder %v1962, 0.0
      %vm2043 = vcmp.gt.f32.partialorder %v1965, 0.0
      %vm2044 = vcmp.gt.f32.partialorder %v1968, 0.0
      %vm2045 = vcmp.gt.f32.partialorder %v1971, 0.0
      %vm2046 = vcmp.gt.f32.partialorder %v1974, 0.0
      %vm2047 = vcmp.gt.f32.partialorder %v1977, 0.0
      %vm2048 = vcmp.gt.f32.partialorder %v1980, 0.0
      %vm2049 = vcmp.gt.f32.partialorder %v1983, 0.0
      %vm2050 = vcmp.gt.f32.partialorder %v1986, 0.0
      %vm2051 = vcmp.gt.f32.partialorder %v1989, 0.0
      %vm2052 = vcmp.gt.f32.partialorder %v1992, 0.0
      %vm2053 = vcmp.gt.f32.partialorder %v1995, 0.0
      %vm2054 = vcmp.gt.f32.partialorder %v1998, 0.0
      %vm2055 = vcmp.gt.f32.partialorder %v2001, 0.0
      %vm2056 = vcmp.gt.f32.partialorder %v2004, 0.0
      %vm2057 = vcmp.gt.f32.partialorder %v2007, 0.0
      %vm2058 = vcmp.gt.f32.partialorder %v2010, 0.0
      %vm2059 = vcmp.gt.f32.partialorder %v2013, 0.0
      %vm2060 = vcmp.gt.f32.partialorder %v2016, 0.0
      %vm2061 = vcmp.gt.f32.partialorder %v2019, 0.0
      %vm2062 = vcmp.gt.f32.partialorder %v2022, 0.0
      %vm2063 = vcmp.gt.f32.partialorder %v2025, 0.0
      %vm2064 = vcmp.gt.f32.partialorder %v2028, 0.0
      %vm2065 = vcmp.gt.f32.partialorder %v2031, 0.0
      %vm2066 = vcmp.gt.f32.partialorder %v2034, 0.0
      %v2067 = vsel %vm2035, %v1941, 1.0
      %v2068 = vsel %vm2036, %v1944, 1.0
      %v2069 = vsel %vm2037, %v1947, 1.0
      %v2070 = vsel %vm2038, %v1950, 1.0
      %v2071 = vsel %vm2039, %v1953, 1.0
      %v2072 = vsel %vm2040, %v1956, 1.0
      %v2073 = vsel %vm2041, %v1959, 1.0
      %v2074 = vsel %vm2042, %v1962, 1.0
      %v2075 = vsel %vm2043, %v1965, 1.0
      %v2076 = vsel %vm2044, %v1968, 1.0
      %v2077 = vsel %vm2045, %v1971, 1.0
      %v2078 = vsel %vm2046, %v1974, 1.0
      %v2079 = vsel %vm2047, %v1977, 1.0
      %v2080 = vsel %vm2048, %v1980, 1.0
      %v2081 = vsel %vm2049, %v1983, 1.0
      %v2082 = vsel %vm2050, %v1986, 1.0
      %v2083 = vsel %vm2051, %v1989, 1.0
      %v2084 = vsel %vm2052, %v1992, 1.0
      %v2085 = vsel %vm2053, %v1995, 1.0
      %v2086 = vsel %vm2054, %v1998, 1.0
      %v2087 = vsel %vm2055, %v2001, 1.0
      %v2088 = vsel %vm2056, %v2004, 1.0
      %v2089 = vsel %vm2057, %v2007, 1.0
      %v2090 = vsel %vm2058, %v2010, 1.0
      %v2091 = vsel %vm2059, %v2013, 1.0
      %v2092 = vsel %vm2060, %v2016, 1.0
      %v2093 = vsel %vm2061, %v2019, 1.0
      %v2094 = vsel %vm2062, %v2022, 1.0
      %v2095 = vsel %vm2063, %v2025, 1.0
      %v2096 = vsel %vm2064, %v2028, 1.0
      %v2097 = vsel %vm2065, %v2031, 1.0
      %v2098 = vsel %vm2066, %v2034, 1.0
      %v2099 = vtanh.pop %v1941
      %v2100 = vtanh.pop %v1944
      %v2101 = vtanh.pop %v1947
      %v2102 = vtanh.pop %v1950
      %v2103 = vtanh.pop %v1953
      %v2104 = vtanh.pop %v1956
      %v2105 = vtanh.pop %v1959
      %v2106 = vtanh.pop %v1962
      %v2107 = vtanh.pop %v1965
      %v2108 = vtanh.pop %v1968
      %v2109 = vtanh.pop %v1971
      %v2110 = vtanh.pop %v1974
      %v2111 = vtanh.pop %v1977
      %v2112 = vtanh.pop %v1980
      %v2113 = vtanh.pop %v1983
      %v2114 = vtanh.pop %v1986
      %v2115 = vtanh.pop %v1989
      %v2116 = vtanh.pop %v1992
      %v2117 = vtanh.pop %v1995
      %v2118 = vtanh.pop %v1998
      %v2119 = vtanh.pop %v2001
      %v2120 = vtanh.pop %v2004
      %v2121 = vtanh.pop %v2007
      %v2122 = vtanh.pop %v2010
      %v2123 = vtanh.pop %v2013
      %v2124 = vtanh.pop %v2016
      %v2125 = vtanh.pop %v2019
      %v2126 = vtanh.pop %v2022
      %v2127 = vtanh.pop %v2025
      %v2128 = vtanh.pop %v2028
      %v2129 = vtanh.pop %v2031
      %v2130 = vtanh.pop %v2034
      %v2131 = vrcp.pop %v2067
      %v2132 = vmul.f32 %v2099, %v2131
      %v2133 = vrcp.pop %v2068
      %v2134 = vmul.f32 %v2100, %v2133
      %v2135 = vrcp.pop %v2069
      %v2136 = vmul.f32 %v2101, %v2135
      %v2137 = vrcp.pop %v2070
      %v2138 = vmul.f32 %v2102, %v2137
      %v2139 = vrcp.pop %v2071
      %v2140 = vmul.f32 %v2103, %v2139
      %v2141 = vrcp.pop %v2072
      %v2142 = vmul.f32 %v2104, %v2141
      %v2143 = vrcp.pop %v2073
      %v2144 = vmul.f32 %v2105, %v2143
      %v2145 = vrcp.pop %v2074
      %v2146 = vmul.f32 %v2106, %v2145
      %v2147 = vrcp.pop %v2075
      %v2148 = vmul.f32 %v2107, %v2147
      %v2149 = vrcp.pop %v2076
      %v2150 = vmul.f32 %v2108, %v2149
      %v2151 = vrcp.pop %v2077
      %v2152 = vmul.f32 %v2109, %v2151
      %v2153 = vrcp.pop %v2078
      %v2154 = vmul.f32 %v2110, %v2153
      %v2155 = vrcp.pop %v2079
      %v2156 = vmul.f32 %v2111, %v2155
      %v2157 = vrcp.pop %v2080
      %v2158 = vmul.f32 %v2112, %v2157
      %v2159 = vrcp.pop %v2081
      %v2160 = vmul.f32 %v2113, %v2159
      %v2161 = vrcp.pop %v2082
      %v2162 = vmul.f32 %v2114, %v2161
      %v2163 = vrcp.pop %v2083
      %v2164 = vmul.f32 %v2115, %v2163
      %v2165 = vrcp.pop %v2084
      %v2166 = vmul.f32 %v2116, %v2165
      %v2167 = vrcp.pop %v2085
      %v2168 = vmul.f32 %v2117, %v2167
      %v2169 = vrcp.pop %v2086
      %v2170 = vmul.f32 %v2118, %v2169
      %v2171 = vrcp.pop %v2087
      %v2172 = vmul.f32 %v2119, %v2171
      %v2173 = vrcp.pop %v2088
      %v2174 = vmul.f32 %v2120, %v2173
      %v2175 = vrcp.pop %v2089
      %v2176 = vmul.f32 %v2121, %v2175
      %v2177 = vrcp.pop %v2090
      %v2178 = vmul.f32 %v2122, %v2177
      %v2179 = vrcp.pop %v2091
      %v2180 = vmul.f32 %v2123, %v2179
      %v2181 = vrcp.pop %v2092
      %v2182 = vmul.f32 %v2124, %v2181
      %v2183 = vrcp.pop %v2093
      %v2184 = vmul.f32 %v2125, %v2183
      %v2185 = vrcp.pop %v2094
      %v2186 = vmul.f32 %v2126, %v2185
      %v2187 = vrcp.pop %v2095
      %v2188 = vmul.f32 %v2127, %v2187
      %v2189 = vrcp.pop %v2096
      %v2190 = vmul.f32 %v2128, %v2189
      %v2191 = vrcp.pop %v2097
      %v2192 = vmul.f32 %v2129, %v2191
      %v2193 = vrcp.pop %v2098
      %v2194 = vmul.f32 %v2130, %v2193
      %v2195 = vsel %vm2035, %v2132, 1.0
      %v2196 = vsel %vm2036, %v2134, 1.0
      %v2197 = vsel %vm2037, %v2136, 1.0
      %v2198 = vsel %vm2038, %v2138, 1.0
      %v2199 = vsel %vm2039, %v2140, 1.0
      %v2200 = vsel %vm2040, %v2142, 1.0
      %v2201 = vsel %vm2041, %v2144, 1.0
      %v2202 = vsel %vm2042, %v2146, 1.0
      %v2203 = vsel %vm2043, %v2148, 1.0
      %v2204 = vsel %vm2044, %v2150, 1.0
      %v2205 = vsel %vm2045, %v2152, 1.0
      %v2206 = vsel %vm2046, %v2154, 1.0
      %v2207 = vsel %vm2047, %v2156, 1.0
      %v2208 = vsel %vm2048, %v2158, 1.0
      %v2209 = vsel %vm2049, %v2160, 1.0
      %v2210 = vsel %vm2050, %v2162, 1.0
      %v2211 = vsel %vm2051, %v2164, 1.0
      %v2212 = vsel %vm2052, %v2166, 1.0
      %v2213 = vsel %vm2053, %v2168, 1.0
      %v2214 = vsel %vm2054, %v2170, 1.0
      %v2215 = vsel %vm2055, %v2172, 1.0
      %v2216 = vsel %vm2056, %v2174, 1.0
      %v2217 = vsel %vm2057, %v2176, 1.0
      %v2218 = vsel %vm2058, %v2178, 1.0
      %v2219 = vsel %vm2059, %v2180, 1.0
      %v2220 = vsel %vm2060, %v2182, 1.0
      %v2221 = vsel %vm2061, %v2184, 1.0
      %v2222 = vsel %vm2062, %v2186, 1.0
      %v2223 = vsel %vm2063, %v2188, 1.0
      %v2224 = vsel %vm2064, %v2190, 1.0
      %v2225 = vsel %vm2065, %v2192, 1.0
      %v2226 = vsel %vm2066, %v2194, 1.0
      %v2227 = vmul.f32 %v1875, %v2195
      %v2228 = vmul.f32 %v1876, %v2196
      %v2229 = vmul.f32 %v1877, %v2197
      %v2230 = vmul.f32 %v1878, %v2198
      %v2231 = vmul.f32 %v1879, %v2199
      %v2232 = vmul.f32 %v1880, %v2200
      %v2233 = vmul.f32 %v1881, %v2201
      %v2234 = vmul.f32 %v1882, %v2202
      %v2235 = vmul.f32 %v1883, %v2203
      %v2236 = vmul.f32 %v1884, %v2204
      %v2237 = vmul.f32 %v1885, %v2205
      %v2238 = vmul.f32 %v1886, %v2206
      %v2239 = vmul.f32 %v1887, %v2207
      %v2240 = vmul.f32 %v1888, %v2208
      %v2241 = vmul.f32 %v1889, %v2209
      %v2242 = vmul.f32 %v1890, %v2210
      %v2243 = vmul.f32 %v1891, %v2211
      %v2244 = vmul.f32 %v1892, %v2212
      %v2245 = vmul.f32 %v1893, %v2213
      %v2246 = vmul.f32 %v1894, %v2214
      %v2247 = vmul.f32 %v1895, %v2215
      %v2248 = vmul.f32 %v1896, %v2216
      %v2249 = vmul.f32 %v1897, %v2217
      %v2250 = vmul.f32 %v1898, %v2218
      %v2251 = vmul.f32 %v1899, %v2219
      %v2252 = vmul.f32 %v1900, %v2220
      %v2253 = vmul.f32 %v1901, %v2221
      %v2254 = vmul.f32 %v1902, %v2222
      %v2255 = vmul.f32 %v1903, %v2223
      %v2256 = vmul.f32 %v1904, %v2224
      %v2257 = vmul.f32 %v1905, %v2225
      %v2258 = vmul.f32 %v1906, %v2226
      %v2259 = vpack.c.bf16 %v2228, %v2227
      %v2260 = vpack.c.bf16 %v2230, %v2229
      %v2261 = vpack.c.bf16 %v2232, %v2231
      %v2262 = vpack.c.bf16 %v2234, %v2233
      %v2263 = vpack.c.bf16 %v2236, %v2235
      %v2264 = vpack.c.bf16 %v2238, %v2237
      %v2265 = vpack.c.bf16 %v2240, %v2239
      %v2266 = vpack.c.bf16 %v2242, %v2241
      %v2267 = vpack.c.bf16 %v2244, %v2243
      %v2268 = vpack.c.bf16 %v2246, %v2245
      %v2269 = vpack.c.bf16 %v2248, %v2247
      %v2270 = vpack.c.bf16 %v2250, %v2249
      %v2271 = vpack.c.bf16 %v2252, %v2251
      %v2272 = vpack.c.bf16 %v2254, %v2253
      %v2273 = vpack.c.bf16 %v2256, %v2255
      %v2274 = vpack.c.bf16 %v2258, %v2257
      %v2276 = vsel %vm418, %v2259, 0
      %v2279 = vsel %vm418, %v2260, 0
      %v2282 = vsel %vm418, %v2261, 0
      %v2285 = vsel %vm418, %v2262, 0
      %v2288 = vsel %vm418, %v2263, 0
      %v2291 = vsel %vm418, %v2264, 0
      %v2294 = vsel %vm418, %v2265, 0
      %v2297 = vsel %vm418, %v2266, 0
      %v2300 = vsel %vm418, %v2267, 0
      %v2303 = vsel %vm418, %v2268, 0
      %v2306 = vsel %vm418, %v2269, 0
      %v2309 = vsel %vm418, %v2270, 0
      %v2312 = vsel %vm418, %v2271, 0
      %v2315 = vsel %vm418, %v2272, 0
      %v2318 = vsel %vm418, %v2273, 0
      %v2321 = vsel %vm418, %v2274, 0
      %2323 = vmatprep.subr.bf16.mxu0 0
      %2324 = vmatpush1.bf16.msra.mxu0 0
      %2325 = vmatprep.subr.bf16.mxu0 0
      %2326 = vmatpush1.bf16.msra.mxu0 0
      %2327 = vmatprep.subr.bf16.mxu0 0
      %2328 = vmatpush1.bf16.msra.mxu0 0
      %2329 = vmatprep.subr.bf16.mxu0 0
      %2330 = vmatpush1.bf16.msra.mxu0 0
      %2331 = vmatprep.subr.bf16.mxu0 0
      %2332 = vmatpush1.bf16.msra.mxu0 0
      %2333 = vmatprep.subr.bf16.mxu0 0
      %2334 = vmatpush1.bf16.msra.mxu0 0
      %2335 = vmatprep.subr.bf16.mxu0 0
      %2336 = vmatpush1.bf16.msra.mxu0 %v764
      %2337 = vmatprep.subr.bf16.mxu0 0
      %2338 = vmatpush1.bf16.msra.mxu0 %v763
      %2339 = vmatprep.subr.bf16.mxu0 0
      %2340 = vmatpush2.bf16.msra.mxu0 0
      %2341 = vmatprep.subr.bf16.mxu0 0
      %2342 = vmatpush2.bf16.msra.mxu0 0
      %2343 = vmatprep.subr.bf16.mxu0 0
      %2344 = vmatpush2.bf16.msra.mxu0 0
      %2345 = vmatprep.subr.bf16.mxu0 0
      %2346 = vmatpush2.bf16.msra.mxu0 0
      %2347 = vmatprep.subr.bf16.mxu0 0
      %2348 = vmatpush2.bf16.msra.mxu0 0
      %2349 = vmatprep.subr.bf16.mxu0 0
      %2350 = vmatpush2.bf16.msra.mxu0 0
      %2351 = vmatprep.subr.bf16.mxu0 0
      %2352 = vmatpush2.bf16.msra.mxu0 0
      %2353 = vmatprep.subr.bf16.mxu0 0
      %2354 = vmatpush2.bf16.msra.mxu0 0
      %2355 = vmatprep.mubr.bf16.mxu0 0
      %2356 = vmatmul.mubr.bf16.gmra.mxu0 %v2276
      %v2357 = vpop.f32.mrf.mxu0
      %v2358 = vadd.f32 0.0, %v2357
      %v2359 = vpop.f32.mrf.mxu0
      %v2360 = vpop.f32.mrf.mxu0
      %v2361 = vadd.f32 0.0, %v2360
      %v2362 = vpop.f32.mrf.mxu0
      %2363 = vmatprep.mubr.bf16.mxu0 0
      %2364 = vmatmul.mubr.bf16.gmra.mxu0 %v2279
      %v2365 = vpop.f32.mrf.mxu0
      %v2366 = vadd.f32 0.0, %v2365
      %v2367 = vpop.f32.mrf.mxu0
      %v2368 = vpop.f32.mrf.mxu0
      %v2369 = vadd.f32 0.0, %v2368
      %v2370 = vpop.f32.mrf.mxu0
      %2371 = vmatprep.mubr.bf16.mxu0 0
      %2372 = vmatmul.mubr.bf16.gmra.mxu0 %v2282
      %v2373 = vpop.f32.mrf.mxu0
      %v2374 = vadd.f32 0.0, %v2373
      %v2375 = vpop.f32.mrf.mxu0
      %v2376 = vpop.f32.mrf.mxu0
      %v2377 = vadd.f32 0.0, %v2376
      %v2378 = vpop.f32.mrf.mxu0
      %2379 = vmatprep.mubr.bf16.mxu0 0
      %2380 = vmatmul.mubr.bf16.gmra.mxu0 %v2285
      %v2381 = vpop.f32.mrf.mxu0
      %v2382 = vadd.f32 0.0, %v2381
      %v2383 = vpop.f32.mrf.mxu0
      %v2384 = vpop.f32.mrf.mxu0
      %v2385 = vadd.f32 0.0, %v2384
      %v2386 = vpop.f32.mrf.mxu0
      %2387 = vmatprep.mubr.bf16.mxu0 0
      %2388 = vmatmul.mubr.bf16.gmra.mxu0 %v2288
      %v2389 = vpop.f32.mrf.mxu0
      %v2390 = vadd.f32 0.0, %v2389
      %v2391 = vpop.f32.mrf.mxu0
      %v2392 = vpop.f32.mrf.mxu0
      %v2393 = vadd.f32 0.0, %v2392
      %v2394 = vpop.f32.mrf.mxu0
      %2395 = vmatprep.mubr.bf16.mxu0 0
      %2396 = vmatmul.mubr.bf16.gmra.mxu0 %v2291
      %v2397 = vpop.f32.mrf.mxu0
      %v2398 = vadd.f32 0.0, %v2397
      %v2399 = vpop.f32.mrf.mxu0
      %v2400 = vpop.f32.mrf.mxu0
      %v2401 = vadd.f32 0.0, %v2400
      %v2402 = vpop.f32.mrf.mxu0
      %2403 = vmatprep.mubr.bf16.mxu0 0
      %2404 = vmatmul.mubr.bf16.gmra.mxu0 %v2294
      %v2405 = vpop.f32.mrf.mxu0
      %v2406 = vadd.f32 0.0, %v2405
      %v2407 = vpop.f32.mrf.mxu0
      %v2408 = vpop.f32.mrf.mxu0
      %v2409 = vadd.f32 0.0, %v2408
      %v2410 = vpop.f32.mrf.mxu0
      %2411 = vmatprep.mubr.bf16.mxu0 0
      %2412 = vmatmul.mubr.bf16.gmra.mxu0 %v2297
      %v2413 = vpop.f32.mrf.mxu0
      %v2414 = vadd.f32 0.0, %v2413
      %v2415 = vpop.f32.mrf.mxu0
      %v2416 = vpop.f32.mrf.mxu0
      %v2417 = vadd.f32 0.0, %v2416
      %v2418 = vpop.f32.mrf.mxu0
      %2419 = vmatprep.mubr.bf16.mxu0 0
      %2420 = vmatmul.mubr.bf16.gmra.mxu0 %v2300
      %v2421 = vpop.f32.mrf.mxu0
      %v2422 = vadd.f32 0.0, %v2421
      %v2423 = vpop.f32.mrf.mxu0
      %v2424 = vpop.f32.mrf.mxu0
      %v2425 = vadd.f32 0.0, %v2424
      %v2426 = vpop.f32.mrf.mxu0
      %2427 = vmatprep.mubr.bf16.mxu0 0
      %2428 = vmatmul.mubr.bf16.gmra.mxu0 %v2303
      %v2429 = vpop.f32.mrf.mxu0
      %v2430 = vadd.f32 0.0, %v2429
      %v2431 = vpop.f32.mrf.mxu0
      %v2432 = vpop.f32.mrf.mxu0
      %v2433 = vadd.f32 0.0, %v2432
      %v2434 = vpop.f32.mrf.mxu0
      %2435 = vmatprep.mubr.bf16.mxu0 0
      %2436 = vmatmul.mubr.bf16.gmra.mxu0 %v2306
      %v2437 = vpop.f32.mrf.mxu0
      %v2438 = vadd.f32 0.0, %v2437
      %v2439 = vpop.f32.mrf.mxu0
      %v2440 = vpop.f32.mrf.mxu0
      %v2441 = vadd.f32 0.0, %v2440
      %v2442 = vpop.f32.mrf.mxu0
      %2443 = vmatprep.mubr.bf16.mxu0 0
      %2444 = vmatmul.mubr.bf16.gmra.mxu0 %v2309
      %v2445 = vpop.f32.mrf.mxu0
      %v2446 = vadd.f32 0.0, %v2445
      %v2447 = vpop.f32.mrf.mxu0
      %v2448 = vpop.f32.mrf.mxu0
      %v2449 = vadd.f32 0.0, %v2448
      %v2450 = vpop.f32.mrf.mxu0
      %2451 = vmatprep.mubr.bf16.mxu0 0
      %2452 = vmatmul.mubr.bf16.gmra.mxu0 %v2312
      %v2453 = vpop.f32.mrf.mxu0
      %v2454 = vadd.f32 0.0, %v2453
      %v2455 = vpop.f32.mrf.mxu0
      %v2456 = vpop.f32.mrf.mxu0
      %v2457 = vadd.f32 0.0, %v2456
      %v2458 = vpop.f32.mrf.mxu0
      %2459 = vmatprep.mubr.bf16.mxu0 0
      %2460 = vmatmul.mubr.bf16.gmra.mxu0 %v2315
      %v2461 = vpop.f32.mrf.mxu0
      %v2462 = vadd.f32 0.0, %v2461
      %v2463 = vpop.f32.mrf.mxu0
      %v2464 = vpop.f32.mrf.mxu0
      %v2465 = vadd.f32 0.0, %v2464
      %v2466 = vpop.f32.mrf.mxu0
      %2467 = vmatprep.mubr.bf16.mxu0 0
      %2468 = vmatmul.mubr.bf16.gmra.mxu0 %v2318
      %v2469 = vpop.f32.mrf.mxu0
      %v2470 = vadd.f32 0.0, %v2469
      %v2471 = vpop.f32.mrf.mxu0
      %v2472 = vpop.f32.mrf.mxu0
      %v2473 = vadd.f32 0.0, %v2472
      %v2474 = vpop.f32.mrf.mxu0
      %2475 = vmatprep.mubr.bf16.mxu0 0
      %2476 = vmatmul.mubr.bf16.gmra.mxu0 %v2321
      %v2477 = vpop.f32.mrf.mxu0
      %v2478 = vadd.f32 0.0, %v2477
      %v2479 = vpop.f32.mrf.mxu0
      %v2480 = vpop.f32.mrf.mxu0
      %v2481 = vadd.f32 0.0, %v2480
      %v2482 = vpop.f32.mrf.mxu0
      %2483 = vdwg.mxu0
      %v2484 = vtanh.pop %v2358
      %v2485 = vtanh.pop %v2361
      %v2486 = vtanh.pop %v2366
      %v2487 = vtanh.pop %v2369
      %v2488 = vtanh.pop %v2374
      %v2489 = vtanh.pop %v2377
      %v2490 = vtanh.pop %v2382
      %v2491 = vtanh.pop %v2385
      %v2492 = vtanh.pop %v2390
      %v2493 = vtanh.pop %v2393
      %v2494 = vtanh.pop %v2398
      %v2495 = vtanh.pop %v2401
      %v2496 = vtanh.pop %v2406
      %v2497 = vtanh.pop %v2409
      %v2498 = vtanh.pop %v2414
      %v2499 = vtanh.pop %v2417
      %v2500 = vtanh.pop %v2422
      %v2501 = vtanh.pop %v2425
      %v2502 = vtanh.pop %v2430
      %v2503 = vtanh.pop %v2433
      %v2504 = vtanh.pop %v2438
      %v2505 = vtanh.pop %v2441
      %v2506 = vtanh.pop %v2446
      %v2507 = vtanh.pop %v2449
      %v2508 = vtanh.pop %v2454
      %v2509 = vtanh.pop %v2457
      %v2510 = vtanh.pop %v2462
      %v2511 = vtanh.pop %v2465
      %v2512 = vtanh.pop %v2470
      %v2513 = vtanh.pop %v2473
      %v2514 = vtanh.pop %v2478
      %v2515 = vtanh.pop %v2481
      %v2516 = vpack.c.bf16 %v2485, %v2484
      %v2517 = vpack.c.bf16 %v2487, %v2486
      %v2518 = vpack.c.bf16 %v2489, %v2488
      %v2519 = vpack.c.bf16 %v2491, %v2490
      %v2520 = vpack.c.bf16 %v2493, %v2492
      %v2521 = vpack.c.bf16 %v2495, %v2494
      %v2522 = vpack.c.bf16 %v2497, %v2496
      %v2523 = vpack.c.bf16 %v2499, %v2498
      %v2524 = vpack.c.bf16 %v2501, %v2500
      %v2525 = vpack.c.bf16 %v2503, %v2502
      %v2526 = vpack.c.bf16 %v2505, %v2504
      %v2527 = vpack.c.bf16 %v2507, %v2506
      %v2528 = vpack.c.bf16 %v2509, %v2508
      %v2529 = vpack.c.bf16 %v2511, %v2510
      %v2530 = vpack.c.bf16 %v2513, %v2512
      %v2531 = vpack.c.bf16 %v2515, %v2514
      %2532 = vmatprep.subr.bf16.mxu0 0
      %2533 = vmatpush1.bf16.msra.mxu0 %v1063
      %2534 = vmatprep.subr.bf16.mxu0 0
      %2535 = vmatpush1.bf16.msra.mxu0 %v1062
      %2536 = vmatprep.subr.bf16.mxu0 0
      %2537 = vmatpush1.bf16.msra.mxu0 %v1061
      %2538 = vmatprep.subr.bf16.mxu0 0
      %2539 = vmatpush1.bf16.msra.mxu0 %v1060
      %2540 = vmatprep.subr.bf16.mxu0 0
      %2541 = vmatpush1.bf16.msra.mxu0 %v1059
      %2542 = vmatprep.subr.bf16.mxu0 0
      %2543 = vmatpush1.bf16.msra.mxu0 %v1058
      %2544 = vmatprep.subr.bf16.mxu0 0
      %2545 = vmatpush1.bf16.msra.mxu0 %v1057
      %2546 = vmatprep.subr.bf16.mxu0 0
      %2547 = vmatpush1.bf16.msra.mxu0 %v1056
      %2548 = vmatprep.subr.bf16.mxu0 0
      %2549 = vmatpush2.bf16.msra.mxu0 0
      %2550 = vmatprep.subr.bf16.mxu0 0
      %2551 = vmatpush2.bf16.msra.mxu0 0
      %2552 = vmatprep.subr.bf16.mxu0 0
      %2553 = vmatpush2.bf16.msra.mxu0 0
      %2554 = vmatprep.subr.bf16.mxu0 0
      %2555 = vmatpush2.bf16.msra.mxu0 0
      %2556 = vmatprep.subr.bf16.mxu0 0
      %2557 = vmatpush2.bf16.msra.mxu0 0
      %2558 = vmatprep.subr.bf16.mxu0 0
      %2559 = vmatpush2.bf16.msra.mxu0 0
      %2560 = vmatprep.subr.bf16.mxu0 0
      %2561 = vmatpush2.bf16.msra.mxu0 0
      %2562 = vmatprep.subr.bf16.mxu0 0
      %2563 = vmatpush2.bf16.msra.mxu0 0
      %2564 = vmatprep.mubr.bf16.mxu0 0
      %2565 = vmatmul.mubr.bf16.gmra.mxu0 %v2516
      %v2566 = vpop.f32.mrf.mxu0
      %v2567 = vadd.f32 0.0, %v2566
      %v2568 = vpop.f32.mrf.mxu0
      %v2569 = vpop.f32.mrf.mxu0
      %v2570 = vadd.f32 0.0, %v2569
      %v2571 = vpop.f32.mrf.mxu0
      %2572 = vmatprep.mubr.bf16.mxu0 0
      %2573 = vmatmul.mubr.bf16.gmra.mxu0 %v2517
      %v2574 = vpop.f32.mrf.mxu0
      %v2575 = vadd.f32 0.0, %v2574
      %v2576 = vpop.f32.mrf.mxu0
      %v2577 = vpop.f32.mrf.mxu0
      %v2578 = vadd.f32 0.0, %v2577
      %v2579 = vpop.f32.mrf.mxu0
      %2580 = vmatprep.mubr.bf16.mxu0 0
      %2581 = vmatmul.mubr.bf16.gmra.mxu0 %v2518
      %v2582 = vpop.f32.mrf.mxu0
      %v2583 = vadd.f32 0.0, %v2582
      %v2584 = vpop.f32.mrf.mxu0
      %v2585 = vpop.f32.mrf.mxu0
      %v2586 = vadd.f32 0.0, %v2585
      %v2587 = vpop.f32.mrf.mxu0
      %2588 = vmatprep.mubr.bf16.mxu0 0
      %2589 = vmatmul.mubr.bf16.gmra.mxu0 %v2519
      %v2590 = vpop.f32.mrf.mxu0
      %v2591 = vadd.f32 0.0, %v2590
      %v2592 = vpop.f32.mrf.mxu0
      %v2593 = vpop.f32.mrf.mxu0
      %v2594 = vadd.f32 0.0, %v2593
      %v2595 = vpop.f32.mrf.mxu0
      %2596 = vmatprep.mubr.bf16.mxu0 0
      %2597 = vmatmul.mubr.bf16.gmra.mxu0 %v2520
      %v2598 = vpop.f32.mrf.mxu0
      %v2599 = vadd.f32 0.0, %v2598
      %v2600 = vpop.f32.mrf.mxu0
      %v2601 = vpop.f32.mrf.mxu0
      %v2602 = vadd.f32 0.0, %v2601
      %v2603 = vpop.f32.mrf.mxu0
      %2604 = vmatprep.mubr.bf16.mxu0 0
      %2605 = vmatmul.mubr.bf16.gmra.mxu0 %v2521
      %v2606 = vpop.f32.mrf.mxu0
      %v2607 = vadd.f32 0.0, %v2606
      %v2608 = vpop.f32.mrf.mxu0
      %v2609 = vpop.f32.mrf.mxu0
      %v2610 = vadd.f32 0.0, %v2609
      %v2611 = vpop.f32.mrf.mxu0
      %2612 = vmatprep.mubr.bf16.mxu0 0
      %2613 = vmatmul.mubr.bf16.gmra.mxu0 %v2522
      %v2614 = vpop.f32.mrf.mxu0
      %v2615 = vadd.f32 0.0, %v2614
      %v2616 = vpop.f32.mrf.mxu0
      %v2617 = vpop.f32.mrf.mxu0
      %v2618 = vadd.f32 0.0, %v2617
      %v2619 = vpop.f32.mrf.mxu0
      %2620 = vmatprep.mubr.bf16.mxu0 0
      %2621 = vmatmul.mubr.bf16.gmra.mxu0 %v2523
      %v2622 = vpop.f32.mrf.mxu0
      %v2623 = vadd.f32 0.0, %v2622
      %v2624 = vpop.f32.mrf.mxu0
      %v2625 = vpop.f32.mrf.mxu0
      %v2626 = vadd.f32 0.0, %v2625
      %v2627 = vpop.f32.mrf.mxu0
      %2628 = vmatprep.mubr.bf16.mxu0 0
      %2629 = vmatmul.mubr.bf16.gmra.mxu0 %v2524
      %v2630 = vpop.f32.mrf.mxu0
      %v2631 = vadd.f32 0.0, %v2630
      %v2632 = vpop.f32.mrf.mxu0
      %v2633 = vpop.f32.mrf.mxu0
      %v2634 = vadd.f32 0.0, %v2633
      %v2635 = vpop.f32.mrf.mxu0
      %2636 = vmatprep.mubr.bf16.mxu0 0
      %2637 = vmatmul.mubr.bf16.gmra.mxu0 %v2525
      %v2638 = vpop.f32.mrf.mxu0
      %v2639 = vadd.f32 0.0, %v2638
      %v2640 = vpop.f32.mrf.mxu0
      %v2641 = vpop.f32.mrf.mxu0
      %v2642 = vadd.f32 0.0, %v2641
      %v2643 = vpop.f32.mrf.mxu0
      %2644 = vmatprep.mubr.bf16.mxu0 0
      %2645 = vmatmul.mubr.bf16.gmra.mxu0 %v2526
      %v2646 = vpop.f32.mrf.mxu0
      %v2647 = vadd.f32 0.0, %v2646
      %v2648 = vpop.f32.mrf.mxu0
      %v2649 = vpop.f32.mrf.mxu0
      %v2650 = vadd.f32 0.0, %v2649
      %v2651 = vpop.f32.mrf.mxu0
      %2652 = vmatprep.mubr.bf16.mxu0 0
      %2653 = vmatmul.mubr.bf16.gmra.mxu0 %v2527
      %v2654 = vpop.f32.mrf.mxu0
      %v2655 = vadd.f32 0.0, %v2654
      %v2656 = vpop.f32.mrf.mxu0
      %v2657 = vpop.f32.mrf.mxu0
      %v2658 = vadd.f32 0.0, %v2657
      %v2659 = vpop.f32.mrf.mxu0
      %2660 = vmatprep.mubr.bf16.mxu0 0
      %2661 = vmatmul.mubr.bf16.gmra.mxu0 %v2528
      %v2662 = vpop.f32.mrf.mxu0
      %v2663 = vadd.f32 0.0, %v2662
      %v2664 = vpop.f32.mrf.mxu0
      %v2665 = vpop.f32.mrf.mxu0
      %v2666 = vadd.f32 0.0, %v2665
      %v2667 = vpop.f32.mrf.mxu0
      %2668 = vmatprep.mubr.bf16.mxu0 0
      %2669 = vmatmul.mubr.bf16.gmra.mxu0 %v2529
      %v2670 = vpop.f32.mrf.mxu0
      %v2671 = vadd.f32 0.0, %v2670
      %v2672 = vpop.f32.mrf.mxu0
      %v2673 = vpop.f32.mrf.mxu0
      %v2674 = vadd.f32 0.0, %v2673
      %v2675 = vpop.f32.mrf.mxu0
      %2676 = vmatprep.mubr.bf16.mxu0 0
      %2677 = vmatmul.mubr.bf16.gmra.mxu0 %v2530
      %v2678 = vpop.f32.mrf.mxu0
      %v2679 = vadd.f32 0.0, %v2678
      %v2680 = vpop.f32.mrf.mxu0
      %v2681 = vpop.f32.mrf.mxu0
      %v2682 = vadd.f32 0.0, %v2681
      %v2683 = vpop.f32.mrf.mxu0
      %2684 = vmatprep.mubr.bf16.mxu0 0
      %2685 = vmatmul.mubr.bf16.gmra.mxu0 %v2531
      %v2686 = vpop.f32.mrf.mxu0
      %v2687 = vadd.f32 0.0, %v2686
      %v2688 = vpop.f32.mrf.mxu0
      %v2689 = vpop.f32.mrf.mxu0
      %v2690 = vadd.f32 0.0, %v2689
      %v2691 = vpop.f32.mrf.mxu0
      %2692 = vdwg.mxu0
      %v2693 = vtanh.pop %v2567
      %v2694 = vtanh.pop %v2570
      %v2695 = vtanh.pop %v2575
      %v2696 = vtanh.pop %v2578
      %v2697 = vtanh.pop %v2583
      %v2698 = vtanh.pop %v2586
      %v2699 = vtanh.pop %v2591
      %v2700 = vtanh.pop %v2594
      %v2701 = vtanh.pop %v2599
      %v2702 = vtanh.pop %v2602
      %v2703 = vtanh.pop %v2607
      %v2704 = vtanh.pop %v2610
      %v2705 = vtanh.pop %v2615
      %v2706 = vtanh.pop %v2618
      %v2707 = vtanh.pop %v2623
      %v2708 = vtanh.pop %v2626
      %v2709 = vtanh.pop %v2631
      %v2710 = vtanh.pop %v2634
      %v2711 = vtanh.pop %v2639
      %v2712 = vtanh.pop %v2642
      %v2713 = vtanh.pop %v2647
      %v2714 = vtanh.pop %v2650
      %v2715 = vtanh.pop %v2655
      %v2716 = vtanh.pop %v2658
      %v2717 = vtanh.pop %v2663
      %v2718 = vtanh.pop %v2666
      %v2719 = vtanh.pop %v2671
      %v2720 = vtanh.pop %v2674
      %v2721 = vtanh.pop %v2679
      %v2722 = vtanh.pop %v2682
      %v2723 = vtanh.pop %v2687
      %v2724 = vtanh.pop %v2690
      %v2725 = vpack.c.bf16 %v2694, %v2693
      %v2726 = vpack.c.bf16 %v2696, %v2695
      %v2727 = vpack.c.bf16 %v2698, %v2697
      %v2728 = vpack.c.bf16 %v2700, %v2699
      %v2729 = vpack.c.bf16 %v2702, %v2701
      %v2730 = vpack.c.bf16 %v2704, %v2703
      %v2731 = vpack.c.bf16 %v2706, %v2705
      %v2732 = vpack.c.bf16 %v2708, %v2707
      %v2733 = vpack.c.bf16 %v2710, %v2709
      %v2734 = vpack.c.bf16 %v2712, %v2711
      %v2735 = vpack.c.bf16 %v2714, %v2713
      %v2736 = vpack.c.bf16 %v2716, %v2715
      %v2737 = vpack.c.bf16 %v2718, %v2717
      %v2738 = vpack.c.bf16 %v2720, %v2719
      %v2739 = vpack.c.bf16 %v2722, %v2721
      %v2740 = vpack.c.bf16 %v2724, %v2723
      %2741 = vmatprep.subr.bf16.mxu0 0
      %2742 = vmatpush1.bf16.msra.mxu0 %v1320
      %2743 = vmatprep.subr.bf16.mxu0 0
      %2744 = vmatpush1.bf16.msra.mxu0 %v1319
      %2745 = vmatprep.subr.bf16.mxu0 0
      %2746 = vmatpush1.bf16.msra.mxu0 %v1318
      %2747 = vmatprep.subr.bf16.mxu0 0
      %2748 = vmatpush1.bf16.msra.mxu0 %v1317
      %2749 = vmatprep.subr.bf16.mxu0 0
      %2750 = vmatpush1.bf16.msra.mxu0 %v1316
      %2751 = vmatprep.subr.bf16.mxu0 0
      %2752 = vmatpush1.bf16.msra.mxu0 %v1315
      %2753 = vmatprep.subr.bf16.mxu0 0
      %2754 = vmatpush1.bf16.msra.mxu0 %v1314
      %2755 = vmatprep.subr.bf16.mxu0 0
      %2756 = vmatpush1.bf16.msra.mxu0 %v1313
      %2757 = vmatprep.subr.bf16.mxu0 0
      %2758 = vmatpush2.bf16.msra.mxu0 0
      %2759 = vmatprep.subr.bf16.mxu0 0
      %2760 = vmatpush2.bf16.msra.mxu0 0
      %2761 = vmatprep.subr.bf16.mxu0 0
      %2762 = vmatpush2.bf16.msra.mxu0 0
      %2763 = vmatprep.subr.bf16.mxu0 0
      %2764 = vmatpush2.bf16.msra.mxu0 0
      %2765 = vmatprep.subr.bf16.mxu0 0
      %2766 = vmatpush2.bf16.msra.mxu0 0
      %2767 = vmatprep.subr.bf16.mxu0 0
      %2768 = vmatpush2.bf16.msra.mxu0 0
      %2769 = vmatprep.subr.bf16.mxu0 0
      %2770 = vmatpush2.bf16.msra.mxu0 0
      %2771 = vmatprep.subr.bf16.mxu0 0
      %2772 = vmatpush2.bf16.msra.mxu0 0
      %2773 = vmatprep.mubr.bf16.mxu0 0
      %2774 = vmatmul.mubr.bf16.gmra.mxu0 %v2725
      %v2775 = vpop.f32.mrf.mxu0
      %v2776 = vadd.f32 0.0, %v2775
      %v2777 = vpop.f32.mrf.mxu0
      %v2778 = vpop.f32.mrf.mxu0
      %v2779 = vadd.f32 0.0, %v2778
      %v2780 = vpop.f32.mrf.mxu0
      %2781 = vmatprep.mubr.bf16.mxu0 0
      %2782 = vmatmul.mubr.bf16.gmra.mxu0 %v2726
      %v2783 = vpop.f32.mrf.mxu0
      %v2784 = vadd.f32 0.0, %v2783
      %v2785 = vpop.f32.mrf.mxu0
      %v2786 = vpop.f32.mrf.mxu0
      %v2787 = vadd.f32 0.0, %v2786
      %v2788 = vpop.f32.mrf.mxu0
      %2789 = vmatprep.mubr.bf16.mxu0 0
      %2790 = vmatmul.mubr.bf16.gmra.mxu0 %v2727
      %v2791 = vpop.f32.mrf.mxu0
      %v2792 = vadd.f32 0.0, %v2791
      %v2793 = vpop.f32.mrf.mxu0
      %v2794 = vpop.f32.mrf.mxu0
      %v2795 = vadd.f32 0.0, %v2794
      %v2796 = vpop.f32.mrf.mxu0
      %2797 = vmatprep.mubr.bf16.mxu0 0
      %2798 = vmatmul.mubr.bf16.gmra.mxu0 %v2728
      %v2799 = vpop.f32.mrf.mxu0
      %v2800 = vadd.f32 0.0, %v2799
      %v2801 = vpop.f32.mrf.mxu0
      %v2802 = vpop.f32.mrf.mxu0
      %v2803 = vadd.f32 0.0, %v2802
      %v2804 = vpop.f32.mrf.mxu0
      %2805 = vmatprep.mubr.bf16.mxu0 0
      %2806 = vmatmul.mubr.bf16.gmra.mxu0 %v2729
      %v2807 = vpop.f32.mrf.mxu0
      %v2808 = vadd.f32 0.0, %v2807
      %v2809 = vpop.f32.mrf.mxu0
      %v2810 = vpop.f32.mrf.mxu0
      %v2811 = vadd.f32 0.0, %v2810
      %v2812 = vpop.f32.mrf.mxu0
      %2813 = vmatprep.mubr.bf16.mxu0 0
      %2814 = vmatmul.mubr.bf16.gmra.mxu0 %v2730
      %v2815 = vpop.f32.mrf.mxu0
      %v2816 = vadd.f32 0.0, %v2815
      %v2817 = vpop.f32.mrf.mxu0
      %v2818 = vpop.f32.mrf.mxu0
      %v2819 = vadd.f32 0.0, %v2818
      %v2820 = vpop.f32.mrf.mxu0
      %2821 = vmatprep.mubr.bf16.mxu0 0
      %2822 = vmatmul.mubr.bf16.gmra.mxu0 %v2731
      %v2823 = vpop.f32.mrf.mxu0
      %v2824 = vadd.f32 0.0, %v2823
      %v2825 = vpop.f32.mrf.mxu0
      %v2826 = vpop.f32.mrf.mxu0
      %v2827 = vadd.f32 0.0, %v2826
      %v2828 = vpop.f32.mrf.mxu0
      %2829 = vmatprep.mubr.bf16.mxu0 0
      %2830 = vmatmul.mubr.bf16.gmra.mxu0 %v2732
      %v2831 = vpop.f32.mrf.mxu0
      %v2832 = vadd.f32 0.0, %v2831
      %v2833 = vpop.f32.mrf.mxu0
      %v2834 = vpop.f32.mrf.mxu0
      %v2835 = vadd.f32 0.0, %v2834
      %v2836 = vpop.f32.mrf.mxu0
      %2837 = vmatprep.mubr.bf16.mxu0 0
      %2838 = vmatmul.mubr.bf16.gmra.mxu0 %v2733
      %v2839 = vpop.f32.mrf.mxu0
      %v2840 = vadd.f32 0.0, %v2839
      %v2841 = vpop.f32.mrf.mxu0
      %v2842 = vpop.f32.mrf.mxu0
      %v2843 = vadd.f32 0.0, %v2842
      %v2844 = vpop.f32.mrf.mxu0
      %2845 = vmatprep.mubr.bf16.mxu0 0
      %2846 = vmatmul.mubr.bf16.gmra.mxu0 %v2734
      %v2847 = vpop.f32.mrf.mxu0
      %v2848 = vadd.f32 0.0, %v2847
      %v2849 = vpop.f32.mrf.mxu0
      %v2850 = vpop.f32.mrf.mxu0
      %v2851 = vadd.f32 0.0, %v2850
      %v2852 = vpop.f32.mrf.mxu0
      %2853 = vmatprep.mubr.bf16.mxu0 0
      %2854 = vmatmul.mubr.bf16.gmra.mxu0 %v2735
      %v2855 = vpop.f32.mrf.mxu0
      %v2856 = vadd.f32 0.0, %v2855
      %v2857 = vpop.f32.mrf.mxu0
      %v2858 = vpop.f32.mrf.mxu0
      %v2859 = vadd.f32 0.0, %v2858
      %v2860 = vpop.f32.mrf.mxu0
      %2861 = vmatprep.mubr.bf16.mxu0 0
      %2862 = vmatmul.mubr.bf16.gmra.mxu0 %v2736
      %v2863 = vpop.f32.mrf.mxu0
      %v2864 = vadd.f32 0.0, %v2863
      %v2865 = vpop.f32.mrf.mxu0
      %v2866 = vpop.f32.mrf.mxu0
      %v2867 = vadd.f32 0.0, %v2866
      %v2868 = vpop.f32.mrf.mxu0
      %2869 = vmatprep.mubr.bf16.mxu0 0
      %2870 = vmatmul.mubr.bf16.gmra.mxu0 %v2737
      %v2871 = vpop.f32.mrf.mxu0
      %v2872 = vadd.f32 0.0, %v2871
      %v2873 = vpop.f32.mrf.mxu0
      %v2874 = vpop.f32.mrf.mxu0
      %v2875 = vadd.f32 0.0, %v2874
      %v2876 = vpop.f32.mrf.mxu0
      %2877 = vmatprep.mubr.bf16.mxu0 0
      %2878 = vmatmul.mubr.bf16.gmra.mxu0 %v2738
      %v2879 = vpop.f32.mrf.mxu0
      %v2880 = vadd.f32 0.0, %v2879
      %v2881 = vpop.f32.mrf.mxu0
      %v2882 = vpop.f32.mrf.mxu0
      %v2883 = vadd.f32 0.0, %v2882
      %v2884 = vpop.f32.mrf.mxu0
      %2885 = vmatprep.mubr.bf16.mxu0 0
      %2886 = vmatmul.mubr.bf16.gmra.mxu0 %v2739
      %v2887 = vpop.f32.mrf.mxu0
      %v2888 = vadd.f32 0.0, %v2887
      %v2889 = vpop.f32.mrf.mxu0
      %v2890 = vpop.f32.mrf.mxu0
      %v2891 = vadd.f32 0.0, %v2890
      %v2892 = vpop.f32.mrf.mxu0
      %2893 = vmatprep.mubr.bf16.mxu0 0
      %2894 = vmatmul.mubr.bf16.gmra.mxu0 %v2740
      %v2895 = vpop.f32.mrf.mxu0
      %v2896 = vadd.f32 0.0, %v2895
      %v2897 = vpop.f32.mrf.mxu0
      %v2898 = vpop.f32.mrf.mxu0
      %v2899 = vadd.f32 0.0, %v2898
      %v2900 = vpop.f32.mrf.mxu0
      %2901 = vdwg.mxu0
      %v2902 = vmax.f32 %v2776, 0.0
      %v2903 = vmax.f32 %v2779, 0.0
      %v2904 = vmax.f32 %v2784, 0.0
      %v2905 = vmax.f32 %v2787, 0.0
      %v2906 = vmax.f32 %v2792, 0.0
      %v2907 = vmax.f32 %v2795, 0.0
      %v2908 = vmax.f32 %v2800, 0.0
      %v2909 = vmax.f32 %v2803, 0.0
      %v2910 = vmax.f32 %v2808, 0.0
      %v2911 = vmax.f32 %v2811, 0.0
      %v2912 = vmax.f32 %v2816, 0.0
      %v2913 = vmax.f32 %v2819, 0.0
      %v2914 = vmax.f32 %v2824, 0.0
      %v2915 = vmax.f32 %v2827, 0.0
      %v2916 = vmax.f32 %v2832, 0.0
      %v2917 = vmax.f32 %v2835, 0.0
      %v2918 = vmax.f32 %v2840, 0.0
      %v2919 = vmax.f32 %v2843, 0.0
      %v2920 = vmax.f32 %v2848, 0.0
      %v2921 = vmax.f32 %v2851, 0.0
      %v2922 = vmax.f32 %v2856, 0.0
      %v2923 = vmax.f32 %v2859, 0.0
      %v2924 = vmax.f32 %v2864, 0.0
      %v2925 = vmax.f32 %v2867, 0.0
      %v2926 = vmax.f32 %v2872, 0.0
      %v2927 = vmax.f32 %v2875, 0.0
      %v2928 = vmax.f32 %v2880, 0.0
      %v2929 = vmax.f32 %v2883, 0.0
      %v2930 = vmax.f32 %v2888, 0.0
      %v2931 = vmax.f32 %v2891, 0.0
      %v2932 = vmax.f32 %v2896, 0.0
      %v2933 = vmax.f32 %v2899, 0.0
      %v2934 = vadd.f32 %v2902, 0.005
      %v2935 = vadd.f32 %v2903, 0.005
      %v2936 = vadd.f32 %v2904, 0.005
      %v2937 = vadd.f32 %v2905, 0.005
      %v2938 = vadd.f32 %v2906, 0.005
      %v2939 = vadd.f32 %v2907, 0.005
      %v2940 = vadd.f32 %v2908, 0.005
      %v2941 = vadd.f32 %v2909, 0.005
      %v2942 = vadd.f32 %v2910, 0.005
      %v2943 = vadd.f32 %v2911, 0.005
      %v2944 = vadd.f32 %v2912, 0.005
      %v2945 = vadd.f32 %v2913, 0.005
      %v2946 = vadd.f32 %v2914, 0.005
      %v2947 = vadd.f32 %v2915, 0.005
      %v2948 = vadd.f32 %v2916, 0.005
      %v2949 = vadd.f32 %v2917, 0.005
      %v2950 = vadd.f32 %v2918, 0.005
      %v2951 = vadd.f32 %v2919, 0.005
      %v2952 = vadd.f32 %v2920, 0.005
      %v2953 = vadd.f32 %v2921, 0.005
      %v2954 = vadd.f32 %v2922, 0.005
      %v2955 = vadd.f32 %v2923, 0.005
      %v2956 = vadd.f32 %v2924, 0.005
      %v2957 = vadd.f32 %v2925, 0.005
      %v2958 = vadd.f32 %v2926, 0.005
      %v2959 = vadd.f32 %v2927, 0.005
      %v2960 = vadd.f32 %v2928, 0.005
      %v2961 = vadd.f32 %v2929, 0.005
      %v2962 = vadd.f32 %v2930, 0.005
      %v2963 = vadd.f32 %v2931, 0.005
      %v2964 = vadd.f32 %v2932, 0.005
      %v2965 = vadd.f32 %v2933, 0.005
      %2966 = vst [vmem:[%s267 + $0x100] sm:$0xff] %v2934
      %2967 = vst [vmem:[%s267 + $0x108] sm:$0xff] %v2935
      %2968 = vst [vmem:[%s267 + $0x110] sm:$0xff] %v2936
      %2969 = vst [vmem:[%s267 + $0x118] sm:$0xff] %v2937
      %2970 = vst [vmem:[%s267 + $0x120] sm:$0xff] %v2938
      %2971 = vst [vmem:[%s267 + $0x128] sm:$0xff] %v2939
      %2972 = vst [vmem:[%s267 + $0x130] sm:$0xff] %v2940
      %2973 = vst [vmem:[%s267 + $0x138] sm:$0xff] %v2941
      %2974 = vst [vmem:[%s267 + $0x140] sm:$0xff] %v2942
      %2975 = vst [vmem:[%s267 + $0x148] sm:$0xff] %v2943
      %2976 = vst [vmem:[%s267 + $0x150] sm:$0xff] %v2944
      %2977 = vst [vmem:[%s267 + $0x158] sm:$0xff] %v2945
      %2978 = vst [vmem:[%s267 + $0x160] sm:$0xff] %v2946
      %2979 = vst [vmem:[%s267 + $0x168] sm:$0xff] %v2947
      %2980 = vst [vmem:[%s267 + $0x170] sm:$0xff] %v2948
      %2981 = vst [vmem:[%s267 + $0x178] sm:$0xff] %v2949
      %2982 = vst [vmem:[%s267 + $0x180] sm:$0xff] %v2950
      %2983 = vst [vmem:[%s267 + $0x188] sm:$0xff] %v2951
      %2984 = vst [vmem:[%s267 + $0x190] sm:$0xff] %v2952
      %2985 = vst [vmem:[%s267 + $0x198] sm:$0xff] %v2953
      %2986 = vst [vmem:[%s267 + $0x1a0] sm:$0xff] %v2954
      %2987 = vst [vmem:[%s267 + $0x1a8] sm:$0xff] %v2955
      %2988 = vst [vmem:[%s267 + $0x1b0] sm:$0xff] %v2956
      %2989 = vst [vmem:[%s267 + $0x1b8] sm:$0xff] %v2957
      %2990 = vst [vmem:[%s267 + $0x1c0] sm:$0xff] %v2958
      %2991 = vst [vmem:[%s267 + $0x1c8] sm:$0xff] %v2959
      %2992 = vst [vmem:[%s267 + $0x1d0] sm:$0xff] %v2960
      %2993 = vst [vmem:[%s267 + $0x1d8] sm:$0xff] %v2961
      %2994 = vst [vmem:[%s267 + $0x1e0] sm:$0xff] %v2962
      %2995 = vst [vmem:[%s267 + $0x1e8] sm:$0xff] %v2963
      %2996 = vst [vmem:[%s267 + $0x1f0] sm:$0xff] %v2964
      %2997 = vst [vmem:[%s267 + $0x1f8] sm:$0xff] %v2965
      %v2998 = vpack.c.bf16 %v2935, %v2934
      %v2999 = vpack.c.bf16 %v2937, %v2936
      %v3000 = vpack.c.bf16 %v2939, %v2938
      %v3001 = vpack.c.bf16 %v2941, %v2940
      %v3002 = vpack.c.bf16 %v2943, %v2942
      %v3003 = vpack.c.bf16 %v2945, %v2944
      %v3004 = vpack.c.bf16 %v2947, %v2946
      %v3005 = vpack.c.bf16 %v2949, %v2948
      %v3006 = vpack.c.bf16 %v2951, %v2950
      %v3007 = vpack.c.bf16 %v2953, %v2952
      %v3008 = vpack.c.bf16 %v2955, %v2954
      %v3009 = vpack.c.bf16 %v2957, %v2956
      %v3010 = vpack.c.bf16 %v2959, %v2958
      %v3011 = vpack.c.bf16 %v2961, %v2960
      %v3012 = vpack.c.bf16 %v2963, %v2962
      %v3013 = vpack.c.bf16 %v2965, %v2964
      %3014 = vmatprep.subr.bf16.mxu0 0
      %3015 = vmatpush1.bf16.msra.mxu0 %v1641
      %3016 = vmatprep.subr.bf16.mxu0 0
      %3017 = vmatpush1.bf16.msra.mxu0 %v1640
      %3018 = vmatprep.subr.bf16.mxu0 0
      %3019 = vmatpush1.bf16.msra.mxu0 %v1639
      %3020 = vmatprep.subr.bf16.mxu0 0
      %3021 = vmatpush1.bf16.msra.mxu0 %v1638
      %3022 = vmatprep.subr.bf16.mxu0 0
      %3023 = vmatpush1.bf16.msra.mxu0 %v1637
      %3024 = vmatprep.subr.bf16.mxu0 0
      %3025 = vmatpush1.bf16.msra.mxu0 %v1636
      %3026 = vmatprep.subr.bf16.mxu0 0
      %3027 = vmatpush1.bf16.msra.mxu0 %v1635
      %3028 = vmatprep.subr.bf16.mxu0 0
      %3029 = vmatpush1.bf16.msra.mxu0 %v1634
      %3030 = vmatprep.subr.bf16.mxu0 0
      %3031 = vmatpush2.bf16.msra.mxu0 0
      %3032 = vmatprep.subr.bf16.mxu0 0
      %3033 = vmatpush2.bf16.msra.mxu0 0
      %3034 = vmatprep.subr.bf16.mxu0 0
      %3035 = vmatpush2.bf16.msra.mxu0 0
      %3036 = vmatprep.subr.bf16.mxu0 0
      %3037 = vmatpush2.bf16.msra.mxu0 0
      %3038 = vmatprep.subr.bf16.mxu0 0
      %3039 = vmatpush2.bf16.msra.mxu0 0
      %3040 = vmatprep.subr.bf16.mxu0 0
      %3041 = vmatpush2.bf16.msra.mxu0 0
      %3042 = vmatprep.subr.bf16.mxu0 0
      %3043 = vmatpush2.bf16.msra.mxu0 0
      %3044 = vmatprep.subr.bf16.mxu0 0
      %3045 = vmatpush2.bf16.msra.mxu0 0
      %3046 = vmatprep.mubr.bf16.mxu0 0
      %3047 = vmatmul.mubr.bf16.gmra.mxu0 %v2998
      %v3048 = vpop.f32.mrf.mxu0
      %v3049 = vadd.f32 0.0, %v3048
      %v3050 = vpop.f32.mrf.mxu0
      %v3051 = vpop.f32.mrf.mxu0
      %v3052 = vadd.f32 0.0, %v3051
      %v3053 = vpop.f32.mrf.mxu0
      %3054 = vmatprep.mubr.bf16.mxu0 0
      %3055 = vmatmul.mubr.bf16.gmra.mxu0 %v2999
      %v3056 = vpop.f32.mrf.mxu0
      %v3057 = vadd.f32 0.0, %v3056
      %v3058 = vpop.f32.mrf.mxu0
      %v3059 = vpop.f32.mrf.mxu0
      %v3060 = vadd.f32 0.0, %v3059
      %v3061 = vpop.f32.mrf.mxu0
      %3062 = vmatprep.mubr.bf16.mxu0 0
      %3063 = vmatmul.mubr.bf16.gmra.mxu0 %v3000
      %v3064 = vpop.f32.mrf.mxu0
      %v3065 = vadd.f32 0.0, %v3064
      %v3066 = vpop.f32.mrf.mxu0
      %v3067 = vpop.f32.mrf.mxu0
      %v3068 = vadd.f32 0.0, %v3067
      %v3069 = vpop.f32.mrf.mxu0
      %3070 = vmatprep.mubr.bf16.mxu0 0
      %3071 = vmatmul.mubr.bf16.gmra.mxu0 %v3001
      %v3072 = vpop.f32.mrf.mxu0
      %v3073 = vadd.f32 0.0, %v3072
      %v3074 = vpop.f32.mrf.mxu0
      %v3075 = vpop.f32.mrf.mxu0
      %v3076 = vadd.f32 0.0, %v3075
      %v3077 = vpop.f32.mrf.mxu0
      %3078 = vmatprep.mubr.bf16.mxu0 0
      %3079 = vmatmul.mubr.bf16.gmra.mxu0 %v3002
      %v3080 = vpop.f32.mrf.mxu0
      %v3081 = vadd.f32 0.0, %v3080
      %v3082 = vpop.f32.mrf.mxu0
      %v3083 = vpop.f32.mrf.mxu0
      %v3084 = vadd.f32 0.0, %v3083
      %v3085 = vpop.f32.mrf.mxu0
      %3086 = vmatprep.mubr.bf16.mxu0 0
      %3087 = vmatmul.mubr.bf16.gmra.mxu0 %v3003
      %v3088 = vpop.f32.mrf.mxu0
      %v3089 = vadd.f32 0.0, %v3088
      %v3090 = vpop.f32.mrf.mxu0
      %v3091 = vpop.f32.mrf.mxu0
      %v3092 = vadd.f32 0.0, %v3091
      %v3093 = vpop.f32.mrf.mxu0
      %3094 = vmatprep.mubr.bf16.mxu0 0
      %3095 = vmatmul.mubr.bf16.gmra.mxu0 %v3004
      %v3096 = vpop.f32.mrf.mxu0
      %v3097 = vadd.f32 0.0, %v3096
      %v3098 = vpop.f32.mrf.mxu0
      %v3099 = vpop.f32.mrf.mxu0
      %v3100 = vadd.f32 0.0, %v3099
      %v3101 = vpop.f32.mrf.mxu0
      %3102 = vmatprep.mubr.bf16.mxu0 0
      %3103 = vmatmul.mubr.bf16.gmra.mxu0 %v3005
      %v3104 = vpop.f32.mrf.mxu0
      %v3105 = vadd.f32 0.0, %v3104
      %v3106 = vpop.f32.mrf.mxu0
      %v3107 = vpop.f32.mrf.mxu0
      %v3108 = vadd.f32 0.0, %v3107
      %v3109 = vpop.f32.mrf.mxu0
      %3110 = vmatprep.mubr.bf16.mxu0 0
      %3111 = vmatmul.mubr.bf16.gmra.mxu0 %v3006
      %v3112 = vpop.f32.mrf.mxu0
      %v3113 = vadd.f32 0.0, %v3112
      %v3114 = vpop.f32.mrf.mxu0
      %v3115 = vpop.f32.mrf.mxu0
      %v3116 = vadd.f32 0.0, %v3115
      %v3117 = vpop.f32.mrf.mxu0
      %3118 = vmatprep.mubr.bf16.mxu0 0
      %3119 = vmatmul.mubr.bf16.gmra.mxu0 %v3007
      %v3120 = vpop.f32.mrf.mxu0
      %v3121 = vadd.f32 0.0, %v3120
      %v3122 = vpop.f32.mrf.mxu0
      %v3123 = vpop.f32.mrf.mxu0
      %v3124 = vadd.f32 0.0, %v3123
      %v3125 = vpop.f32.mrf.mxu0
      %3126 = vmatprep.mubr.bf16.mxu0 0
      %3127 = vmatmul.mubr.bf16.gmra.mxu0 %v3008
      %v3128 = vpop.f32.mrf.mxu0
      %v3129 = vadd.f32 0.0, %v3128
      %v3130 = vpop.f32.mrf.mxu0
      %v3131 = vpop.f32.mrf.mxu0
      %v3132 = vadd.f32 0.0, %v3131
      %v3133 = vpop.f32.mrf.mxu0
      %3134 = vmatprep.mubr.bf16.mxu0 0
      %3135 = vmatmul.mubr.bf16.gmra.mxu0 %v3009
      %v3136 = vpop.f32.mrf.mxu0
      %v3137 = vadd.f32 0.0, %v3136
      %v3138 = vpop.f32.mrf.mxu0
      %v3139 = vpop.f32.mrf.mxu0
      %v3140 = vadd.f32 0.0, %v3139
      %v3141 = vpop.f32.mrf.mxu0
      %3142 = vmatprep.mubr.bf16.mxu0 0
      %3143 = vmatmul.mubr.bf16.gmra.mxu0 %v3010
      %v3144 = vpop.f32.mrf.mxu0
      %v3145 = vadd.f32 0.0, %v3144
      %v3146 = vpop.f32.mrf.mxu0
      %v3147 = vpop.f32.mrf.mxu0
      %v3148 = vadd.f32 0.0, %v3147
      %v3149 = vpop.f32.mrf.mxu0
      %3150 = vmatprep.mubr.bf16.mxu0 0
      %3151 = vmatmul.mubr.bf16.gmra.mxu0 %v3011
      %v3152 = vpop.f32.mrf.mxu0
      %v3153 = vadd.f32 0.0, %v3152
      %v3154 = vpop.f32.mrf.mxu0
      %v3155 = vpop.f32.mrf.mxu0
      %v3156 = vadd.f32 0.0, %v3155
      %v3157 = vpop.f32.mrf.mxu0
      %3158 = vmatprep.mubr.bf16.mxu0 0
      %3159 = vmatmul.mubr.bf16.gmra.mxu0 %v3012
      %v3160 = vpop.f32.mrf.mxu0
      %v3161 = vadd.f32 0.0, %v3160
      %v3162 = vpop.f32.mrf.mxu0
      %v3163 = vpop.f32.mrf.mxu0
      %v3164 = vadd.f32 0.0, %v3163
      %v3165 = vpop.f32.mrf.mxu0
      %3166 = vmatprep.mubr.bf16.mxu0 0
      %3167 = vmatmul.mubr.bf16.gmra.mxu0 %v3013
      %v3168 = vpop.f32.mrf.mxu0
      %v3169 = vadd.f32 0.0, %v3168
      %v3170 = vpop.f32.mrf.mxu0
      %v3171 = vpop.f32.mrf.mxu0
      %v3172 = vadd.f32 0.0, %v3171
      %v3173 = vpop.f32.mrf.mxu0
      %3174 = vdwg.mxu0
      %3175 = vst [vmem:[%s261 + $0x100] sm:$0xff] %v3049
      %3176 = vst [vmem:[%s261 + $0x108] sm:$0xff] %v3052
      %3177 = vst [vmem:[%s261 + $0x110] sm:$0xff] %v3057
      %3178 = vst [vmem:[%s261 + $0x118] sm:$0xff] %v3060
      %3179 = vst [vmem:[%s261 + $0x120] sm:$0xff] %v3065
      %3180 = vst [vmem:[%s261 + $0x128] sm:$0xff] %v3068
      %3181 = vst [vmem:[%s261 + $0x130] sm:$0xff] %v3073
      %3182 = vst [vmem:[%s261 + $0x138] sm:$0xff] %v3076
      %3183 = vst [vmem:[%s261 + $0x140] sm:$0xff] %v3081
      %3184 = vst [vmem:[%s261 + $0x148] sm:$0xff] %v3084
      %3185 = vst [vmem:[%s261 + $0x150] sm:$0xff] %v3089
      %3186 = vst [vmem:[%s261 + $0x158] sm:$0xff] %v3092
      %3187 = vst [vmem:[%s261 + $0x160] sm:$0xff] %v3097
      %3188 = vst [vmem:[%s261 + $0x168] sm:$0xff] %v3100
      %3189 = vst [vmem:[%s261 + $0x170] sm:$0xff] %v3105
      %3190 = vst [vmem:[%s261 + $0x178] sm:$0xff] %v3108
      %3191 = vst [vmem:[%s261 + $0x180] sm:$0xff] %v3113
      %3192 = vst [vmem:[%s261 + $0x188] sm:$0xff] %v3116
      %3193 = vst [vmem:[%s261 + $0x190] sm:$0xff] %v3121
      %3194 = vst [vmem:[%s261 + $0x198] sm:$0xff] %v3124
      %3195 = vst [vmem:[%s261 + $0x1a0] sm:$0xff] %v3129
      %3196 = vst [vmem:[%s261 + $0x1a8] sm:$0xff] %v3132
      %3197 = vst [vmem:[%s261 + $0x1b0] sm:$0xff] %v3137
      %3198 = vst [vmem:[%s261 + $0x1b8] sm:$0xff] %v3140
      %3199 = vst [vmem:[%s261 + $0x1c0] sm:$0xff] %v3145
      %3200 = vst [vmem:[%s261 + $0x1c8] sm:$0xff] %v3148
      %3201 = vst [vmem:[%s261 + $0x1d0] sm:$0xff] %v3153
      %3202 = vst [vmem:[%s261 + $0x1d8] sm:$0xff] %v3156
      %3203 = vst [vmem:[%s261 + $0x1e0] sm:$0xff] %v3161
      %3204 = vst [vmem:[%s261 + $0x1e8] sm:$0xff] %v3164
      %3205 = vst [vmem:[%s261 + $0x1f0] sm:$0xff] %v3169
      %3206 = vst [vmem:[%s261 + $0x1f8] sm:$0xff] %v3172
      %s3207 = smul.u32 64, %s18
      %p3208 = scmp.lt.s32.totalorder %s3207, 127
      %s3209 = scalar_select %p3208, %s3207, 127
      %s3210 = smul.addr %s3209, 8
      %s3211 = scalar_lea.vmem %s5, %s3210
      %s3212 = smul.u32 64, %s18
      %p3213 = scmp.lt.s32.totalorder %s3212, 127
      %s3214 = scalar_select %p3213, %s3212, 127
      %s3215 = smul.addr %s3214, 8
      %s3216 = scalar_lea.vmem %s6, %s3215
      // Predicated region
      $region41: #{vae_forward.1} parent=39 // pred_check
        %p3217 = pneg %p146
      $region42: #{vae_forward.1} parent=39 // pred_check_branch
        %3219 = sbr.rel (%p3217) target = $region44
      $region43: #{vae_forward.1} parent=39 // pred_region
        %s3220 = smul.u32 64, %s18
      $region44: #{vae_forward.1} parent=39 // pred_fallthru
        _
      // Predicated region
      $region45: #{vae_forward.1} parent=39 // pred_check
        %p3221 = pneg %p172
      $region46: #{vae_forward.1} parent=39 // pred_check_branch
        %3223 = sbr.rel (%p3221) target = $region48
      $region47: #{vae_forward.1} parent=39 // pred_region
        %s3224 = smul.u32 64, %s18
      $region48: #{vae_forward.1} parent=39 // pred_fallthru
        _
    $region40: #{vae_forward.1} parent=5 // pred_fallthru
      _
    %p3225 = scmp.le.s32.totalorder 2, %s13
    // Predicated region
    $region49: #{vae_forward.1} parent=5 // pred_check
      %p3226 = pneg %p3225
    $region50: #{vae_forward.1} parent=5 // pred_check_branch
      %3228 = sbr.rel (%p3226) target = $region52
    $region51: #{vae_forward.1} parent=5 // pred_region
      %s3229 = ssub.s32 %s13, 2
      // Predicated region
      $region53: #{vae_forward.1} parent=51 // pred_check
        %p3230 = pneg %p152
      $region54: #{vae_forward.1} parent=51 // pred_check_branch
        %3232 = sbr.rel (%p3230) target = $region56
      $region55: #{vae_forward.1} parent=51 // pred_region
        %s3233 = smul.u32 64, %s19
        %p3234 = scmp.lt.s32.totalorder %s3233, 127
        %s3235 = scalar_select %p3234, %s3233, 127
        %s3236 = smul.addr %s3235, 8
        %s3237 = scalar_lea.vmem %s5, %s3236
      $region56: #{vae_forward.1} parent=51 // pred_fallthru
        _
      // Predicated region
      $region57: #{vae_forward.1} parent=51 // pred_check
        %p3238 = pneg %p178
      $region58: #{vae_forward.1} parent=51 // pred_check_branch
        %3240 = sbr.rel (%p3238) target = $region60
      $region59: #{vae_forward.1} parent=51 // pred_region
        %s3241 = smul.u32 64, %s19
        %p3242 = scmp.lt.s32.totalorder %s3241, 127
        %s3243 = scalar_select %p3242, %s3241, 127
        %s3244 = smul.addr %s3243, 8
        %s3245 = scalar_lea.vmem %s6, %s3244
      $region60: #{vae_forward.1} parent=51 // pred_fallthru
        _
    $region52: #{vae_forward.1} parent=5 // pred_fallthru
      _
  $region6: #{vae_forward.1} parent=0 // loop_footer
    %s17 = sadd.s32 1, %s13
  $region7: #{vae_forward.1} parent=0 // loop_footer_branch
    %12 = sbr.rel target = $region3
  $region8: #{vae_forward.1} parent=0 // loop_exit
    _

</llo_original>
